<compile_context>
chip_gen: v7x
topology: tpu7x:2x2x1
jax: 0.10.0
libtpu: 0.0.40
codegen_flags: <defaults>
</compile_context>

<pallas_src>
import jax
import jax.numpy as jnp
from jax.experimental import pallas as pl
from jax.experimental.pallas import tpu as pltpu

EPS = 1e-5                       # nn.BatchNorm2d default eps
_VMEM_LIMIT = 32 * 1024 * 1024   # safe on v5e/v6e (128 MiB) and v7x (64 MiB/TC)


# ------------------------------ small helpers ------------------------------

def _round_up(x, m):
    return (x + m - 1) // m * m


def _choose_bm(rows, cap=512):
    """Row-tile size: multiple of 8 sublanes, capped so blocks stay VMEM-friendly."""
    return int(min(cap, _round_up(rows, 8)))


# ----------------------------- Pallas kernels ------------------------------

def _pmm_stats_kernel(p_ref, w_ref, y_ref, s_ref):
    # (1,bm,K) bf16 @ (1,K,C) bf16 on the MXU, f32 accumulation.
    y = jnp.dot(p_ref[0], w_ref[0], preferred_element_type=jnp.float32)
    y_ref[0] = y
    # Per-tile partial per-channel sum and sum-of-squares (single pass).
    s_ref[0] = jnp.concatenate(
        [jnp.sum(y, axis=0, keepdims=True),
         jnp.sum(y * y, axis=0, keepdims=True)], axis=0)


def _pmm_tanh_kernel(p_ref, w_ref, o_ref):
    y = jnp.dot(p_ref[0], w_ref[0], preferred_element_type=jnp.float32)
    o_ref[0] = jnp.tanh(y)


def _bn_relu_kernel(y_ref, scale_ref, shift_ref, o_ref):
    # Folded-BN affine + ReLU, f32 math, bf16 lane-dense store.
    o_ref[...] = jnp.maximum(
        y_ref[...] * scale_ref[...] + shift_ref[...], 0.0).astype(o_ref.dtype)


# --------------------------- pallas_call wrappers ---------------------------

def _pmm_stats(patches, weights):
    """Phase-batched, row-tiled matmul -> f32 pre-activations + BN partial stats.

    patches: (P, M, K) bf16;  weights: (P, K, C) bf16.
    Returns y (P, Mp, C) f32 and stats (P*nb, 2, C) f32.
    """
    P, M, K = patches.shape
    C = weights.shape[2]
    bm = _choose_bm(M)
    Mp = _round_up(M, bm)
    if Mp != M:
        patches = jnp.pad(patches, ((0, 0), (0, Mp - M), (0, 0)))
    nb = Mp // bm
    y, stats = pl.pallas_call(
        _pmm_stats_kernel,
        out_shape=(jax.ShapeDtypeStruct((P, Mp, C), jnp.float32),
                   jax.ShapeDtypeStruct((P * nb, 2, C), jnp.float32)),
        grid_spec=pltpu.PrefetchScalarGridSpec(
            num_scalar_prefetch=0,
            grid=(P, nb),
            in_specs=[pl.BlockSpec((1, bm, K), lambda p, i: (p, i, 0)),
                      pl.BlockSpec((1, K, C), lambda p, i: (p, 0, 0))],
            out_specs=[pl.BlockSpec((1, bm, C), lambda p, i: (p, i, 0)),
                       pl.BlockSpec((1, 2, C), lambda p, i: (p * nb + i, 0, 0))]),
        compiler_params=pltpu.CompilerParams(
            dimension_semantics=("parallel", "parallel"),
            vmem_limit_bytes=_VMEM_LIMIT),
    )(patches, weights)
    return y, stats


def _pmm_tanh(patches, weights):
    P, M, K = patches.shape
    C = weights.shape[2]
    bm = _choose_bm(M)
    Mp = _round_up(M, bm)
    if Mp != M:
        patches = jnp.pad(patches, ((0, 0), (0, Mp - M), (0, 0)))
    nb = Mp // bm
    return pl.pallas_call(
        _pmm_tanh_kernel,
        out_shape=jax.ShapeDtypeStruct((P, Mp, C), jnp.float32),
        grid_spec=pltpu.PrefetchScalarGridSpec(
            num_scalar_prefetch=0,
            grid=(P, nb),
            in_specs=[pl.BlockSpec((1, bm, K), lambda p, i: (p, i, 0)),
                      pl.BlockSpec((1, K, C), lambda p, i: (p, 0, 0))],
            out_specs=pl.BlockSpec((1, bm, C), lambda p, i: (p, i, 0))),
        compiler_params=pltpu.CompilerParams(
            dimension_semantics=("parallel", "parallel"),
            vmem_limit_bytes=_VMEM_LIMIT),
    )(patches, weights)


def _bn_relu(y2d, scale, shift):
    """Row-tiled affine + ReLU; bf16 output (next layer's MXU operand)."""
    R, C = y2d.shape
    bm = _choose_bm(R)
    Rp = _round_up(R, bm)
    if Rp != R:
        y2d = jnp.pad(y2d, ((0, Rp - R), (0, 0)))
    out = pl.pallas_call(
        _bn_relu_kernel,
        out_shape=jax.ShapeDtypeStruct((Rp, C), jnp.bfloat16),
        grid_spec=pltpu.PrefetchScalarGridSpec(
            num_scalar_prefetch=0,
            grid=(Rp // bm,),
            in_specs=[pl.BlockSpec((bm, C), lambda i: (i, 0)),
                      pl.BlockSpec((1, C), lambda i: (0, 0)),
                      pl.BlockSpec((1, C), lambda i: (0, 0))],
            out_specs=pl.BlockSpec((bm, C), lambda i: (i, 0))),
        compiler_params=pltpu.CompilerParams(
            dimension_semantics=("parallel",),
            vmem_limit_bytes=_VMEM_LIMIT),
    )(y2d, scale, shift)
    return out[:R]


def _bn_scale_shift(sum_c, sumsq_c, count, gamma, beta):
    """Fold batch-statistics BatchNorm into per-channel scale/shift (f32)."""
    mean = sum_c / count
    var = jnp.maximum(sumsq_c / count - mean * mean, 0.0)   # biased, single pass
    scale = gamma * jax.lax.rsqrt(var + EPS)
    shift = beta - mean * scale
    return (scale.reshape(1, -1).astype(jnp.float32),
            shift.reshape(1, -1).astype(jnp.float32))


# ------------------ stride-2 ConvTranspose2d phase helpers ------------------

def _phase_patches(x_nhwc, w_pt, padding):
    """Stride-2, k=4 ConvTranspose2d as 4 dense output-phase matmuls.

    oh = 2*ih + kh - padding  =>  kh parity is fixed per output-row parity, so
    each phase (oh%2, ow%2) uses exactly 4 of the 16 taps and a 2x2 window of
    the un-dilated input.  Returns
      patches (4, N*OH2*OW2, 4*IC),  weights (4, 4*IC, OC) f32,  OH, OW.
    """
    N, H, W, IC = x_nhwc.shape
    _, OC, KH, KW = w_pt.shape           # KH = KW = 4, stride = 2
    OH, OW = 2 * H + 2 - 2 * padding, 2 * W + 2 - 2 * padding
    OH2, OW2 = OH // 2, OW // 2
    PAD = 2                              # generous halo; out-of-range taps read 0
    xp = jnp.pad(x_nhwc, ((0, 0), (PAD, PAD), (PAD, PAD), (0, 0)))
    patches, weights = [], []
    for rh in range(2):                  # output row parity
        kh0 = (rh + padding) % 2
        dh = (rh + padding - kh0) // 2
        for rw in range(2):              # output col parity
            kw0 = (rw + padding) % 2
            dw = (rw + padding - kw0) // 2
            taps, wt = [], []
            for th in range(2):          # input rows ih = q + dh - 1 + th
                hs = dh + th - 1 + PAD
                kh = kh0 + 2 * (1 - th)
                for tw in range(2):
                    ws = dw + tw - 1 + PAD
                    kw = kw0 + 2 * (1 - tw)
                    taps.append(xp[:, hs:hs + OH2, ws:ws + OW2, :])
                    wt.append(w_pt[:, :, kh, kw])            # (IC, OC)
            pat = jnp.stack(taps, axis=3)                    # (N, OH2, OW2, 4, IC)
            patches.append(pat.reshape(N * OH2 * OW2, 4 * IC))
            weights.append(jnp.stack(wt, axis=0).reshape(4 * IC, OC))
    return jnp.stack(patches, 0), jnp.stack(weights, 0), OH, OW


def _interleave_phases(y, N, OH, OW, OC):
    """(4, N*OH2*OW2, OC) phase-major -> (N, OH, OW, OC)."""
    OH2, OW2 = OH // 2, OW // 2
    y = y.reshape(2, 2, N, OH2, OW2, OC)
    return jnp.transpose(y, (2, 3, 0, 4, 1, 5)).reshape(N, OH, OW, OC)


# ------------------------------- layers ------------------------------------

def _layer1_fc_bn_relu(z_nchw, w1, gamma, beta):
    """ConvTranspose2d(z_dim,256,4,1,0) on a 1x1 input == one (N,zd)@(zd,16*256) FC."""
    N = z_nchw.shape[0]
    Zd, OC, KH, KW = w1.shape
    P = KH * KW
    z2 = z_nchw.reshape(N, Zd).astype(jnp.bfloat16)
    # Columns ordered (kh, kw, oc); output spatial position == kernel tap (no flip).
    wm = jnp.transpose(w1, (0, 2, 3, 1)).reshape(Zd, P * OC).astype(jnp.bfloat16)
    y, stats = _pmm_stats(z2[None], wm[None])                 # y (1, Np, P*OC)
    tot = jnp.sum(stats, axis=0).reshape(2, P, OC).sum(axis=1)   # (2, OC)
    scale, shift = _bn_scale_shift(tot[0], tot[1], N * P, gamma, beta)
    y2 = y[0, :N].reshape(N * P, OC)                          # rows ordered (n, kh, kw)
    act = _bn_relu(y2, scale, shift)                          # bf16
    return act.reshape(N, KH, KW, OC)                         # (N, 4, 4, 256) NHWC


def _deconv_s2_bn_relu(x_nhwc, w_pt, gamma, beta, padding):
    N = x_nhwc.shape[0]
    IC, OC, KH, KW = w_pt.shape
    patches, wph, OH, OW = _phase_patches(x_nhwc, w_pt, padding)
    M = patches.shape[1]
    OCp = _round_up(OC, 128)                                  # lane-dense output
    if OCp != OC:
        wph = jnp.pad(wph, ((0, 0), (0, 0), (0, OCp - OC)))
        gamma = jnp.pad(gamma, (0, OCp - OC))                 # padded cols -> scale=shift=0
        beta = jnp.pad(beta, (0, OCp - OC))
    y, stats = _pmm_stats(patches, wph.astype(jnp.bfloat16))
    tot = jnp.sum(stats, axis=0)                              # (2, OCp)
    scale, shift = _bn_scale_shift(tot[0], tot[1], N * OH * OW, gamma, beta)
    Pn, Mp, _ = y.shape
    act = _bn_relu(y.reshape(Pn * Mp, OCp), scale, shift)     # bf16
    act = act.reshape(Pn, Mp, OCp)[:, :M, :OC]
    return _interleave_phases(act, N, OH, OW, OC)


def _deconv_s2_tanh(x_nhwc, w_pt, padding):
    N = x_nhwc.shape[0]
    IC, OC, KH, KW = w_pt.shape
    patches, wph, OH, OW = _phase_patches(x_nhwc, w_pt, padding)
    M = patches.shape[1]
    OCp = _round_up(OC, 128)                                  # tanh(0)=0 on padded cols
    wph = jnp.pad(wph, ((0, 0), (0, 0), (0, OCp - OC))).astype(jnp.bfloat16)
    y = _pmm_tanh(patches, wph)[:, :M, :OC]                   # (4, M, OC) f32
    return _interleave_phases(y, N, OH, OW, OC)


# ------------------------------- Generator ---------------------------------

def init_generator_params(key, z_dim):
    k1, k2, k3, k4 = jax.random.split(key, 4)
    std = 0.02  # DCGAN-style init, deterministic via PRNGKey
    return {
        # PyTorch ConvTranspose2d weight layout: (in_channels, out_channels, KH, KW)
        "w1": jax.random.normal(k1, (z_dim, 256, 4, 4), jnp.float32) * std,
        "g1": jnp.ones((256,), jnp.float32), "b1": jnp.zeros((256,), jnp.float32),
        "w2": jax.random.normal(k2, (256, 128, 4, 4), jnp.float32) * std,
        "g2": jnp.ones((128,), jnp.float32), "b2": jnp.zeros((128,), jnp.float32),
        "w3": jax.random.normal(k3, (128, 64, 4, 4), jnp.float32) * std,
        "g3": jnp.ones((64,), jnp.float32), "b3": jnp.zeros((64,), jnp.float32),
        "w4": jax.random.normal(k4, (64, 1, 4, 4), jnp.float32) * std,
    }


@jax.jit
def generator_forward(z_nchw, params):
    x = _layer1_fc_bn_relu(z_nchw, params["w1"], params["g1"], params["b1"])  # (N, 4, 4,256)
    x = _deconv_s2_bn_relu(x, params["w2"], params["g2"], params["b2"], 1)    # (N, 8, 8,128)
    x = _deconv_s2_bn_relu(x, params["w3"], params["g3"], params["b3"], 1)    # (N,16,16, 64)
    x = _deconv_s2_tanh(x, params["w4"], 3)                                   # (N,28,28,  1)
    return jnp.transpose(x, (0, 3, 1, 2))                                     # NHWC -> NCHW


# -------------------------- pure-JAX f32 reference --------------------------

def _ref_conv_transpose(x, w, stride, padding):
    IC, OC, KH, KW = w.shape
    wf = jnp.transpose(w[:, :, ::-1, ::-1], (1, 0, 2, 3))   # (OC, IC, KH, KW), flipped
    return jax.lax.conv_general_dilated(
        x, wf, window_strides=(1, 1),
        padding=[(KH - 1 - padding,) * 2, (KW - 1 - padding,) * 2],
        lhs_dilation=(stride, stride),
        dimension_numbers=("NCHW", "OIHW", "NCHW"))


def _ref_bn_relu(y, gamma, beta):
    mean = jnp.mean(y, axis=(0, 2, 3), keepdims=True)
    var = jnp.mean(jnp.square(y - mean), axis=(0, 2, 3), keepdims=True)
    yn = (y - mean) * jax.lax.rsqrt(var + EPS)
    return jnp.maximum(yn * gamma.reshape(1, -1, 1, 1) + beta.reshape(1, -1, 1, 1), 0.0)


@jax.jit
def generator_reference(z, params):
    y = _ref_bn_relu(_ref_conv_transpose(z, params["w1"], 1, 0), params["g1"], params["b1"])
    y = _ref_bn_relu(_ref_conv_transpose(y, params["w2"], 2, 1), params["g2"], params["b2"])
    y = _ref_bn_relu(_ref_conv_transpose(y, params["w3"], 2, 1), params["g3"], params["b3"])
    return jnp.tanh(_ref_conv_transpose(y, params["w4"], 2, 3))


if __name__ == "__main__":
    z_dim, batch = 64, 2
    key = jax.random.PRNGKey(0)
    kz, kp = jax.random.split(key)
    z = jax.random.normal(kz, (batch, z_dim, 1, 1), jnp.float32)
    params = init_generator_params(kp, z_dim)

    out = jax.block_until_ready(generator_forward(z, params))
    assert out.shape == (batch, 1, 28, 28), out.shape
    assert bool(jnp.all(jnp.isfinite(out)))

    # Validate against a pure-JAX f32 reference (bf16 MXU => loose tolerance).
    ref = jax.block_until_ready(generator_reference(z, params))
    max_err = float(jnp.max(jnp.abs(out - ref)))
    assert max_err < 8e-2, f"max |pallas - f32 reference| = {max_err}"
    print("KERNEL_OK")
</pallas_src>

<mosaic_0001>
module attributes {stable_mosaic.version = 11 : i64} {
  func.func @_pmm_stats_kernel(%arg0: i32, %arg1: i32, %arg2: memref<1x8x64xbf16, #tpu.memory_space<vmem>>, %arg3: memref<1x64x4096xbf16, #tpu.memory_space<vmem>>, %arg4: memref<1x8x4096xf32, #tpu.memory_space<vmem>>, %arg5: memref<1x2x4096xf32, #tpu.memory_space<vmem>>) attributes {dimension_semantics = [#tpu.dimension_semantics<parallel>, #tpu.dimension_semantics<parallel>], iteration_bounds = array<i64: 1, 1>, scalar_prefetch = 0 : i64, scratch_operands = 0 : i64, tpu.core_type = #tpu.core_type<tc>, window_params = [{transform_indices = @transform_0, window_bounds = array<i64: 1, 8, 64>}, {transform_indices = @transform_1, window_bounds = array<i64: 1, 64, 4096>}, {transform_indices = @transform_2, window_bounds = array<i64: 1, 8, 4096>}, {transform_indices = @transform_3, window_bounds = array<i64: 1, 2, 4096>}]} {
    %c0 = arith.constant 0 : index
    %c0_0 = arith.constant 0 : index
    %c0_1 = arith.constant 0 : index
    %0 = vector.load %arg2[%c0, %c0_0, %c0_1] : memref<1x8x64xbf16, #tpu.memory_space<vmem>>, vector<1x8x64xbf16>
    %1 = vector.shape_cast %0 : vector<1x8x64xbf16> to vector<8x64xbf16>
    %c0_2 = arith.constant 0 : index
    %c0_3 = arith.constant 0 : index
    %c0_4 = arith.constant 0 : index
    %2 = vector.load %arg3[%c0_2, %c0_3, %c0_4] : memref<1x64x4096xbf16, #tpu.memory_space<vmem>>, vector<1x64x4096xbf16>
    %3 = vector.shape_cast %2 : vector<1x64x4096xbf16> to vector<64x4096xbf16>
    %cst = arith.constant dense<0.000000e+00> : vector<8x4096xf32>
    %4 = tpu.matmul %1, %3, %cst {dimension_numbers = #tpu.dot_dimension_numbers<[1], [0], [0], [1], [0, 0, 1, 1], [], []>} : vector<8x64xbf16>, vector<64x4096xbf16>, vector<8x4096xf32> -> vector<8x4096xf32>
    %c0_5 = arith.constant 0 : index
    %c0_6 = arith.constant 0 : index
    %c0_7 = arith.constant 0 : index
    %5 = vector.load %arg4[%c0_5, %c0_6, %c0_7] : memref<1x8x4096xf32, #tpu.memory_space<vmem>>, vector<1x8x4096xf32>
    %6 = vector.shape_cast %5 : vector<1x8x4096xf32> to vector<8x4096xf32>
    %7 = vector.shape_cast %4 : vector<8x4096xf32> to vector<1x8x4096xf32>
    tpu.vector_store %arg4[%c0_5, %c0_6, %c0_7], %7 {strides = array<i32>} : memref<1x8x4096xf32, #tpu.memory_space<vmem>>, vector<1x8x4096xf32>,
    %cst_8 = arith.constant dense<0.000000e+00> : vector<4096xf32>
    %8 = vector.multi_reduction <add>, %4, %cst_8 [0] : vector<8x4096xf32> to vector<4096xf32>
    %9 = vector.shape_cast %8 : vector<4096xf32> to vector<1x4096xf32>
    %10 = arith.mulf %4, %4 : vector<8x4096xf32>
    %cst_9 = arith.constant dense<0.000000e+00> : vector<4096xf32>
    %11 = vector.multi_reduction <add>, %10, %cst_9 [0] : vector<8x4096xf32> to vector<4096xf32>
    %12 = vector.shape_cast %11 : vector<4096xf32> to vector<1x4096xf32>
    %13 = tpu.concatenate %9, %12 in 0 : vector<1x4096xf32>, vector<1x4096xf32> -> vector<2x4096xf32>
    %c0_10 = arith.constant 0 : index
    %c0_11 = arith.constant 0 : index
    %c0_12 = arith.constant 0 : index
    %14 = vector.load %arg5[%c0_10, %c0_11, %c0_12] : memref<1x2x4096xf32, #tpu.memory_space<vmem>>, vector<1x2x4096xf32>
    %15 = vector.shape_cast %14 : vector<1x2x4096xf32> to vector<2x4096xf32>
    %16 = vector.shape_cast %13 : vector<2x4096xf32> to vector<1x2x4096xf32>
    tpu.vector_store %arg5[%c0_10, %c0_11, %c0_12], %16 {strides = array<i32>} : memref<1x2x4096xf32, #tpu.memory_space<vmem>>, vector<1x2x4096xf32>,
    return
  }
  func.func @transform_0(%arg0: i32, %arg1: i32) -> (i32, i32, i32) {
    %c0_i32 = arith.constant 0 : i32
    %c0_i32_0 = arith.constant 0 : i32
    return %arg0, %arg1, %c0_i32 : i32, i32, i32
  }
  func.func @transform_1(%arg0: i32, %arg1: i32) -> (i32, i32, i32) {
    %c0_i32 = arith.constant 0 : i32
    %c0_i32_0 = arith.constant 0 : i32
    %c0_i32_1 = arith.constant 0 : i32
    return %arg0, %c0_i32, %c0_i32_0 : i32, i32, i32
  }
  func.func @transform_2(%arg0: i32, %arg1: i32) -> (i32, i32, i32) {
    %c0_i32 = arith.constant 0 : i32
    %c0_i32_0 = arith.constant 0 : i32
    return %arg0, %arg1, %c0_i32 : i32, i32, i32
  }
  func.func @transform_3(%arg0: i32, %arg1: i32) -> (i32, i32, i32) {
    %c1_i32 = arith.constant 1 : i32
    %0 = arith.muli %arg0, %c1_i32 : i32
    %1 = arith.addi %0, %arg1 : i32
    %c0_i32 = arith.constant 0 : i32
    %c0_i32_0 = arith.constant 0 : i32
    %c0_i32_1 = arith.constant 0 : i32
    return %1, %c0_i32, %c0_i32_0 : i32, i32, i32
  }
}

module attributes {stable_mosaic.version = 11 : i64} {
  func.func @_bn_relu_kernel(%arg0: i32, %arg1: memref<32x256xf32, #tpu.memory_space<vmem>>, %arg2: memref<1x256xf32, #tpu.memory_space<vmem>>, %arg3: memref<1x256xf32, #tpu.memory_space<vmem>>, %arg4: memref<32x256xbf16, #tpu.memory_space<vmem>>) attributes {dimension_semantics = [#tpu.dimension_semantics<parallel>], iteration_bounds = array<i64: 1>, scalar_prefetch = 0 : i64, scratch_operands = 0 : i64, tpu.core_type = #tpu.core_type<tc>, window_params = [{transform_indices = @transform_0, window_bounds = array<i64: 32, 256>}, {pipeline_mode = #tpu.pipeline_mode<synchronous>, transform_indices = @transform_1, window_bounds = array<i64: 1, 256>}, {pipeline_mode = #tpu.pipeline_mode<synchronous>, transform_indices = @transform_2, window_bounds = array<i64: 1, 256>}, {transform_indices = @transform_3, window_bounds = array<i64: 32, 256>}]} {
    %c0 = arith.constant 0 : index
    %c0_0 = arith.constant 0 : index
    %0 = vector.load %arg1[%c0, %c0_0] : memref<32x256xf32, #tpu.memory_space<vmem>>, vector<32x256xf32>
    %c0_1 = arith.constant 0 : index
    %c0_2 = arith.constant 0 : index
    %1 = vector.load %arg2[%c0_1, %c0_2] : memref<1x256xf32, #tpu.memory_space<vmem>>, vector<1x256xf32>
    %2 = vector.broadcast %1 : vector<1x256xf32> to vector<32x256xf32>
    %3 = arith.mulf %0, %2 : vector<32x256xf32>
    %c0_3 = arith.constant 0 : index
    %c0_4 = arith.constant 0 : index
    %4 = vector.load %arg3[%c0_3, %c0_4] : memref<1x256xf32, #tpu.memory_space<vmem>>, vector<1x256xf32>
    %5 = vector.broadcast %4 : vector<1x256xf32> to vector<32x256xf32>
    %6 = arith.addf %3, %5 : vector<32x256xf32>
    %cst = arith.constant 0.000000e+00 : f32
    %7 = vector.broadcast %cst : f32 to vector<32x256xf32>
    %8 = arith.maximumf %6, %7 : vector<32x256xf32>
    %9 = arith.truncf %8 : vector<32x256xf32> to vector<32x256xbf16>
    %c0_5 = arith.constant 0 : index
    %c0_6 = arith.constant 0 : index
    %10 = vector.load %arg4[%c0_5, %c0_6] : memref<32x256xbf16, #tpu.memory_space<vmem>>, vector<32x256xbf16>
    tpu.vector_store %arg4[%c0_5, %c0_6], %9 {strides = array<i32>} : memref<32x256xbf16, #tpu.memory_space<vmem>>, vector<32x256xbf16>,
    return
  }
  func.func @transform_0(%arg0: i32) -> (i32, i32) {
    %c0_i32 = arith.constant 0 : i32
    %c0_i32_0 = arith.constant 0 : i32
    return %arg0, %c0_i32 : i32, i32
  }
  func.func @transform_1(%arg0: i32) -> (i32, i32) {
    %c0_i32 = arith.constant 0 : i32
    %c0_i32_0 = arith.constant 0 : i32
    %c0_i32_1 = arith.constant 0 : i32
    return %c0_i32, %c0_i32_0 : i32, i32
  }
  func.func @transform_2(%arg0: i32) -> (i32, i32) {
    %c0_i32 = arith.constant 0 : i32
    %c0_i32_0 = arith.constant 0 : i32
    %c0_i32_1 = arith.constant 0 : i32
    return %c0_i32, %c0_i32_0 : i32, i32
  }
  func.func @transform_3(%arg0: i32) -> (i32, i32) {
    %c0_i32 = arith.constant 0 : i32
    %c0_i32_0 = arith.constant 0 : i32
    return %arg0, %c0_i32 : i32, i32
  }
}

module attributes {stable_mosaic.version = 11 : i64} {
  func.func @_pmm_stats_kernel(%arg0: i32, %arg1: i32, %arg2: memref<1x32x1024xbf16, #tpu.memory_space<vmem>>, %arg3: memref<1x1024x128xbf16, #tpu.memory_space<vmem>>, %arg4: memref<1x32x128xf32, #tpu.memory_space<vmem>>, %arg5: memref<1x2x128xf32, #tpu.memory_space<vmem>>) attributes {dimension_semantics = [#tpu.dimension_semantics<parallel>, #tpu.dimension_semantics<parallel>], iteration_bounds = array<i64: 4, 1>, scalar_prefetch = 0 : i64, scratch_operands = 0 : i64, tpu.core_type = #tpu.core_type<tc>, window_params = [{transform_indices = @transform_0, window_bounds = array<i64: 1, 32, 1024>}, {transform_indices = @transform_1, window_bounds = array<i64: 1, 1024, 128>}, {transform_indices = @transform_2, window_bounds = array<i64: 1, 32, 128>}, {transform_indices = @transform_3, window_bounds = array<i64: 1, 2, 128>}]} {
    %c0 = arith.constant 0 : index
    %c0_0 = arith.constant 0 : index
    %c0_1 = arith.constant 0 : index
    %0 = vector.load %arg2[%c0, %c0_0, %c0_1] : memref<1x32x1024xbf16, #tpu.memory_space<vmem>>, vector<1x32x1024xbf16>
    %1 = vector.shape_cast %0 : vector<1x32x1024xbf16> to vector<32x1024xbf16>
    %c0_2 = arith.constant 0 : index
    %c0_3 = arith.constant 0 : index
    %c0_4 = arith.constant 0 : index
    %2 = vector.load %arg3[%c0_2, %c0_3, %c0_4] : memref<1x1024x128xbf16, #tpu.memory_space<vmem>>, vector<1x1024x128xbf16>
    %3 = vector.shape_cast %2 : vector<1x1024x128xbf16> to vector<1024x128xbf16>
    %cst = arith.constant dense<0.000000e+00> : vector<32x128xf32>
    %4 = tpu.matmul %1, %3, %cst {dimension_numbers = #tpu.dot_dimension_numbers<[1], [0], [0], [1], [0, 0, 1, 1], [], []>} : vector<32x1024xbf16>, vector<1024x128xbf16>, vector<32x128xf32> -> vector<32x128xf32>
    %c0_5 = arith.constant 0 : index
    %c0_6 = arith.constant 0 : index
    %c0_7 = arith.constant 0 : index
    %5 = vector.load %arg4[%c0_5, %c0_6, %c0_7] : memref<1x32x128xf32, #tpu.memory_space<vmem>>, vector<1x32x128xf32>
    %6 = vector.shape_cast %5 : vector<1x32x128xf32> to vector<32x128xf32>
    %7 = vector.shape_cast %4 : vector<32x128xf32> to vector<1x32x128xf32>
    tpu.vector_store %arg4[%c0_5, %c0_6, %c0_7], %7 {strides = array<i32>} : memref<1x32x128xf32, #tpu.memory_space<vmem>>, vector<1x32x128xf32>,
    %cst_8 = arith.constant dense<0.000000e+00> : vector<128xf32>
    %8 = vector.multi_reduction <add>, %4, %cst_8 [0] : vector<32x128xf32> to vector<128xf32>
    %9 = vector.shape_cast %8 : vector<128xf32> to vector<1x128xf32>
    %10 = arith.mulf %4, %4 : vector<32x128xf32>
    %cst_9 = arith.constant dense<0.000000e+00> : vector<128xf32>
    %11 = vector.multi_reduction <add>, %10, %cst_9 [0] : vector<32x128xf32> to vector<128xf32>
    %12 = vector.shape_cast %11 : vector<128xf32> to vector<1x128xf32>
    %13 = tpu.concatenate %9, %12 in 0 : vector<1x128xf32>, vector<1x128xf32> -> vector<2x128xf32>
    %c0_10 = arith.constant 0 : index
    %c0_11 = arith.constant 0 : index
    %c0_12 = arith.constant 0 : index
    %14 = vector.load %arg5[%c0_10, %c0_11, %c0_12] : memref<1x2x128xf32, #tpu.memory_space<vmem>>, vector<1x2x128xf32>
    %15 = vector.shape_cast %14 : vector<1x2x128xf32> to vector<2x128xf32>
    %16 = vector.shape_cast %13 : vector<2x128xf32> to vector<1x2x128xf32>
    tpu.vector_store %arg5[%c0_10, %c0_11, %c0_12], %16 {strides = array<i32>} : memref<1x2x128xf32, #tpu.memory_space<vmem>>, vector<1x2x128xf32>,
    return
  }
  func.func @transform_0(%arg0: i32, %arg1: i32) -> (i32, i32, i32) {
    %c0_i32 = arith.constant 0 : i32
    %c0_i32_0 = arith.constant 0 : i32
    return %arg0, %arg1, %c0_i32 : i32, i32, i32
  }
  func.func @transform_1(%arg0: i32, %arg1: i32) -> (i32, i32, i32) {
    %c0_i32 = arith.constant 0 : i32
    %c0_i32_0 = arith.constant 0 : i32
    %c0_i32_1 = arith.constant 0 : i32
    return %arg0, %c0_i32, %c0_i32_0 : i32, i32, i32
  }
  func.func @transform_2(%arg0: i32, %arg1: i32) -> (i32, i32, i32) {
    %c0_i32 = arith.constant 0 : i32
    %c0_i32_0 = arith.constant 0 : i32
    return %arg0, %arg1, %c0_i32 : i32, i32, i32
  }
  func.func @transform_3(%arg0: i32, %arg1: i32) -> (i32, i32, i32) {
    %c1_i32 = arith.constant 1 : i32
    %0 = arith.muli %arg0, %c1_i32 : i32
    %1 = arith.addi %0, %arg1 : i32
    %c0_i32 = arith.constant 0 : i32
    %c0_i32_0 = arith.constant 0 : i32
    %c0_i32_1 = arith.constant 0 : i32
    return %1, %c0_i32, %c0_i32_0 : i32, i32, i32
  }
}

module attributes {stable_mosaic.version = 11 : i64} {
  func.func @_bn_relu_kernel(%arg0: i32, %arg1: memref<128x128xf32, #tpu.memory_space<vmem>>, %arg2: memref<1x128xf32, #tpu.memory_space<vmem>>, %arg3: memref<1x128xf32, #tpu.memory_space<vmem>>, %arg4: memref<128x128xbf16, #tpu.memory_space<vmem>>) attributes {dimension_semantics = [#tpu.dimension_semantics<parallel>], iteration_bounds = array<i64: 1>, scalar_prefetch = 0 : i64, scratch_operands = 0 : i64, tpu.core_type = #tpu.core_type<tc>, window_params = [{transform_indices = @transform_0, window_bounds = array<i64: 128, 128>}, {pipeline_mode = #tpu.pipeline_mode<synchronous>, transform_indices = @transform_1, window_bounds = array<i64: 1, 128>}, {pipeline_mode = #tpu.pipeline_mode<synchronous>, transform_indices = @transform_2, window_bounds = array<i64: 1, 128>}, {transform_indices = @transform_3, window_bounds = array<i64: 128, 128>}]} {
    %c0 = arith.constant 0 : index
    %c0_0 = arith.constant 0 : index
    %0 = vector.load %arg1[%c0, %c0_0] : memref<128x128xf32, #tpu.memory_space<vmem>>, vector<128x128xf32>
    %c0_1 = arith.constant 0 : index
    %c0_2 = arith.constant 0 : index
    %1 = vector.load %arg2[%c0_1, %c0_2] : memref<1x128xf32, #tpu.memory_space<vmem>>, vector<1x128xf32>
    %2 = vector.broadcast %1 : vector<1x128xf32> to vector<128x128xf32>
    %3 = arith.mulf %0, %2 : vector<128x128xf32>
    %c0_3 = arith.constant 0 : index
    %c0_4 = arith.constant 0 : index
    %4 = vector.load %arg3[%c0_3, %c0_4] : memref<1x128xf32, #tpu.memory_space<vmem>>, vector<1x128xf32>
    %5 = vector.broadcast %4 : vector<1x128xf32> to vector<128x128xf32>
    %6 = arith.addf %3, %5 : vector<128x128xf32>
    %cst = arith.constant 0.000000e+00 : f32
    %7 = vector.broadcast %cst : f32 to vector<128x128xf32>
    %8 = arith.maximumf %6, %7 : vector<128x128xf32>
    %9 = arith.truncf %8 : vector<128x128xf32> to vector<128x128xbf16>
    %c0_5 = arith.constant 0 : index
    %c0_6 = arith.constant 0 : index
    %10 = vector.load %arg4[%c0_5, %c0_6] : memref<128x128xbf16, #tpu.memory_space<vmem>>, vector<128x128xbf16>
    tpu.vector_store %arg4[%c0_5, %c0_6], %9 {strides = array<i32>} : memref<128x128xbf16, #tpu.memory_space<vmem>>, vector<128x128xbf16>,
    return
  }
  func.func @transform_0(%arg0: i32) -> (i32, i32) {
    %c0_i32 = arith.constant 0 : i32
    %c0_i32_0 = arith.constant 0 : i32
    return %arg0, %c0_i32 : i32, i32
  }
  func.func @transform_1(%arg0: i32) -> (i32, i32) {
    %c0_i32 = arith.constant 0 : i32
    %c0_i32_0 = arith.constant 0 : i32
    %c0_i32_1 = arith.constant 0 : i32
    return %c0_i32, %c0_i32_0 : i32, i32
  }
  func.func @transform_2(%arg0: i32) -> (i32, i32) {
    %c0_i32 = arith.constant 0 : i32
    %c0_i32_0 = arith.constant 0 : i32
    %c0_i32_1 = arith.constant 0 : i32
    return %c0_i32, %c0_i32_0 : i32, i32
  }
  func.func @transform_3(%arg0: i32) -> (i32, i32) {
    %c0_i32 = arith.constant 0 : i32
    %c0_i32_0 = arith.constant 0 : i32
    return %arg0, %c0_i32 : i32, i32
  }
}

module attributes {stable_mosaic.version = 11 : i64} {
  func.func @_pmm_stats_kernel(%arg0: i32, %arg1: i32, %arg2: memref<1x128x512xbf16, #tpu.memory_space<vmem>>, %arg3: memref<1x512x128xbf16, #tpu.memory_space<vmem>>, %arg4: memref<1x128x128xf32, #tpu.memory_space<vmem>>, %arg5: memref<1x2x128xf32, #tpu.memory_space<vmem>>) attributes {dimension_semantics = [#tpu.dimension_semantics<parallel>, #tpu.dimension_semantics<parallel>], iteration_bounds = array<i64: 4, 1>, scalar_prefetch = 0 : i64, scratch_operands = 0 : i64, tpu.core_type = #tpu.core_type<tc>, window_params = [{transform_indices = @transform_0, window_bounds = array<i64: 1, 128, 512>}, {transform_indices = @transform_1, window_bounds = array<i64: 1, 512, 128>}, {transform_indices = @transform_2, window_bounds = array<i64: 1, 128, 128>}, {transform_indices = @transform_3, window_bounds = array<i64: 1, 2, 128>}]} {
    %c0 = arith.constant 0 : index
    %c0_0 = arith.constant 0 : index
    %c0_1 = arith.constant 0 : index
    %0 = vector.load %arg2[%c0, %c0_0, %c0_1] : memref<1x128x512xbf16, #tpu.memory_space<vmem>>, vector<1x128x512xbf16>
    %1 = vector.shape_cast %0 : vector<1x128x512xbf16> to vector<128x512xbf16>
    %c0_2 = arith.constant 0 : index
    %c0_3 = arith.constant 0 : index
    %c0_4 = arith.constant 0 : index
    %2 = vector.load %arg3[%c0_2, %c0_3, %c0_4] : memref<1x512x128xbf16, #tpu.memory_space<vmem>>, vector<1x512x128xbf16>
    %3 = vector.shape_cast %2 : vector<1x512x128xbf16> to vector<512x128xbf16>
    %cst = arith.constant dense<0.000000e+00> : vector<128x128xf32>
    %4 = tpu.matmul %1, %3, %cst {dimension_numbers = #tpu.dot_dimension_numbers<[1], [0], [0], [1], [0, 0, 1, 1], [], []>} : vector<128x512xbf16>, vector<512x128xbf16>, vector<128x128xf32> -> vector<128x128xf32>
    %c0_5 = arith.constant 0 : index
    %c0_6 = arith.constant 0 : index
    %c0_7 = arith.constant 0 : index
    %5 = vector.load %arg4[%c0_5, %c0_6, %c0_7] : memref<1x128x128xf32, #tpu.memory_space<vmem>>, vector<1x128x128xf32>
    %6 = vector.shape_cast %5 : vector<1x128x128xf32> to vector<128x128xf32>
    %7 = vector.shape_cast %4 : vector<128x128xf32> to vector<1x128x128xf32>
    tpu.vector_store %arg4[%c0_5, %c0_6, %c0_7], %7 {strides = array<i32>} : memref<1x128x128xf32, #tpu.memory_space<vmem>>, vector<1x128x128xf32>,
    %cst_8 = arith.constant dense<0.000000e+00> : vector<128xf32>
    %8 = vector.multi_reduction <add>, %4, %cst_8 [0] : vector<128x128xf32> to vector<128xf32>
    %9 = vector.shape_cast %8 : vector<128xf32> to vector<1x128xf32>
    %10 = arith.mulf %4, %4 : vector<128x128xf32>
    %cst_9 = arith.constant dense<0.000000e+00> : vector<128xf32>
    %11 = vector.multi_reduction <add>, %10, %cst_9 [0] : vector<128x128xf32> to vector<128xf32>
    %12 = vector.shape_cast %11 : vector<128xf32> to vector<1x128xf32>
    %13 = tpu.concatenate %9, %12 in 0 : vector<1x128xf32>, vector<1x128xf32> -> vector<2x128xf32>
    %c0_10 = arith.constant 0 : index
    %c0_11 = arith.constant 0 : index
    %c0_12 = arith.constant 0 : index
    %14 = vector.load %arg5[%c0_10, %c0_11, %c0_12] : memref<1x2x128xf32, #tpu.memory_space<vmem>>, vector<1x2x128xf32>
    %15 = vector.shape_cast %14 : vector<1x2x128xf32> to vector<2x128xf32>
    %16 = vector.shape_cast %13 : vector<2x128xf32> to vector<1x2x128xf32>
    tpu.vector_store %arg5[%c0_10, %c0_11, %c0_12], %16 {strides = array<i32>} : memref<1x2x128xf32, #tpu.memory_space<vmem>>, vector<1x2x128xf32>,
    return
  }
  func.func @transform_0(%arg0: i32, %arg1: i32) -> (i32, i32, i32) {
    %c0_i32 = arith.constant 0 : i32
    %c0_i32_0 = arith.constant 0 : i32
    return %arg0, %arg1, %c0_i32 : i32, i32, i32
  }
  func.func @transform_1(%arg0: i32, %arg1: i32) -> (i32, i32, i32) {
    %c0_i32 = arith.constant 0 : i32
    %c0_i32_0 = arith.constant 0 : i32
    %c0_i32_1 = arith.constant 0 : i32
    return %arg0, %c0_i32, %c0_i32_0 : i32, i32, i32
  }
  func.func @transform_2(%arg0: i32, %arg1: i32) -> (i32, i32, i32) {
    %c0_i32 = arith.constant 0 : i32
    %c0_i32_0 = arith.constant 0 : i32
    return %arg0, %arg1, %c0_i32 : i32, i32, i32
  }
  func.func @transform_3(%arg0: i32, %arg1: i32) -> (i32, i32, i32) {
    %c1_i32 = arith.constant 1 : i32
    %0 = arith.muli %arg0, %c1_i32 : i32
    %1 = arith.addi %0, %arg1 : i32
    %c0_i32 = arith.constant 0 : i32
    %c0_i32_0 = arith.constant 0 : i32
    %c0_i32_1 = arith.constant 0 : i32
    return %1, %c0_i32, %c0_i32_0 : i32, i32, i32
  }
}

module attributes {stable_mosaic.version = 11 : i64} {
  func.func @_bn_relu_kernel(%arg0: i32, %arg1: memref<512x128xf32, #tpu.memory_space<vmem>>, %arg2: memref<1x128xf32, #tpu.memory_space<vmem>>, %arg3: memref<1x128xf32, #tpu.memory_space<vmem>>, %arg4: memref<512x128xbf16, #tpu.memory_space<vmem>>) attributes {dimension_semantics = [#tpu.dimension_semantics<parallel>], iteration_bounds = array<i64: 1>, scalar_prefetch = 0 : i64, scratch_operands = 0 : i64, tpu.core_type = #tpu.core_type<tc>, window_params = [{transform_indices = @transform_0, window_bounds = array<i64: 512, 128>}, {pipeline_mode = #tpu.pipeline_mode<synchronous>, transform_indices = @transform_1, window_bounds = array<i64: 1, 128>}, {pipeline_mode = #tpu.pipeline_mode<synchronous>, transform_indices = @transform_2, window_bounds = array<i64: 1, 128>}, {transform_indices = @transform_3, window_bounds = array<i64: 512, 128>}]} {
    %c0 = arith.constant 0 : index
    %c0_0 = arith.constant 0 : index
    %0 = vector.load %arg1[%c0, %c0_0] : memref<512x128xf32, #tpu.memory_space<vmem>>, vector<512x128xf32>
    %c0_1 = arith.constant 0 : index
    %c0_2 = arith.constant 0 : index
    %1 = vector.load %arg2[%c0_1, %c0_2] : memref<1x128xf32, #tpu.memory_space<vmem>>, vector<1x128xf32>
    %2 = vector.broadcast %1 : vector<1x128xf32> to vector<512x128xf32>
    %3 = arith.mulf %0, %2 : vector<512x128xf32>
    %c0_3 = arith.constant 0 : index
    %c0_4 = arith.constant 0 : index
    %4 = vector.load %arg3[%c0_3, %c0_4] : memref<1x128xf32, #tpu.memory_space<vmem>>, vector<1x128xf32>
    %5 = vector.broadcast %4 : vector<1x128xf32> to vector<512x128xf32>
    %6 = arith.addf %3, %5 : vector<512x128xf32>
    %cst = arith.constant 0.000000e+00 : f32
    %7 = vector.broadcast %cst : f32 to vector<512x128xf32>
    %8 = arith.maximumf %6, %7 : vector<512x128xf32>
    %9 = arith.truncf %8 : vector<512x128xf32> to vector<512x128xbf16>
    %c0_5 = arith.constant 0 : index
    %c0_6 = arith.constant 0 : index
    %10 = vector.load %arg4[%c0_5, %c0_6] : memref<512x128xbf16, #tpu.memory_space<vmem>>, vector<512x128xbf16>
    tpu.vector_store %arg4[%c0_5, %c0_6], %9 {strides = array<i32>} : memref<512x128xbf16, #tpu.memory_space<vmem>>, vector<512x128xbf16>,
    return
  }
  func.func @transform_0(%arg0: i32) -> (i32, i32) {
    %c0_i32 = arith.constant 0 : i32
    %c0_i32_0 = arith.constant 0 : i32
    return %arg0, %c0_i32 : i32, i32
  }
  func.func @transform_1(%arg0: i32) -> (i32, i32) {
    %c0_i32 = arith.constant 0 : i32
    %c0_i32_0 = arith.constant 0 : i32
    %c0_i32_1 = arith.constant 0 : i32
    return %c0_i32, %c0_i32_0 : i32, i32
  }
  func.func @transform_2(%arg0: i32) -> (i32, i32) {
    %c0_i32 = arith.constant 0 : i32
    %c0_i32_0 = arith.constant 0 : i32
    %c0_i32_1 = arith.constant 0 : i32
    return %c0_i32, %c0_i32_0 : i32, i32
  }
  func.func @transform_3(%arg0: i32) -> (i32, i32) {
    %c0_i32 = arith.constant 0 : i32
    %c0_i32_0 = arith.constant 0 : i32
    return %arg0, %c0_i32 : i32, i32
  }
}

module attributes {stable_mosaic.version = 11 : i64} {
  func.func @_pmm_tanh_kernel(%arg0: i32, %arg1: i32, %arg2: memref<1x392x256xbf16, #tpu.memory_space<vmem>>, %arg3: memref<1x256x128xbf16, #tpu.memory_space<vmem>>, %arg4: memref<1x392x128xf32, #tpu.memory_space<vmem>>) attributes {dimension_semantics = [#tpu.dimension_semantics<parallel>, #tpu.dimension_semantics<parallel>], iteration_bounds = array<i64: 4, 1>, scalar_prefetch = 0 : i64, scratch_operands = 0 : i64, tpu.core_type = #tpu.core_type<tc>, window_params = [{transform_indices = @transform_0, window_bounds = array<i64: 1, 392, 256>}, {transform_indices = @transform_1, window_bounds = array<i64: 1, 256, 128>}, {transform_indices = @transform_2, window_bounds = array<i64: 1, 392, 128>}]} {
    %c0 = arith.constant 0 : index
    %c0_0 = arith.constant 0 : index
    %c0_1 = arith.constant 0 : index
    %0 = vector.load %arg2[%c0, %c0_0, %c0_1] : memref<1x392x256xbf16, #tpu.memory_space<vmem>>, vector<1x392x256xbf16>
    %1 = vector.shape_cast %0 : vector<1x392x256xbf16> to vector<392x256xbf16>
    %c0_2 = arith.constant 0 : index
    %c0_3 = arith.constant 0 : index
    %c0_4 = arith.constant 0 : index
    %2 = vector.load %arg3[%c0_2, %c0_3, %c0_4] : memref<1x256x128xbf16, #tpu.memory_space<vmem>>, vector<1x256x128xbf16>
    %3 = vector.shape_cast %2 : vector<1x256x128xbf16> to vector<256x128xbf16>
    %cst = arith.constant dense<0.000000e+00> : vector<392x128xf32>
    %4 = tpu.matmul %1, %3, %cst {dimension_numbers = #tpu.dot_dimension_numbers<[1], [0], [0], [1], [0, 0, 1, 1], [], []>} : vector<392x256xbf16>, vector<256x128xbf16>, vector<392x128xf32> -> vector<392x128xf32>
    %5 = math.tanh %4 : vector<392x128xf32>
    %c0_5 = arith.constant 0 : index
    %c0_6 = arith.constant 0 : index
    %c0_7 = arith.constant 0 : index
    %6 = vector.load %arg4[%c0_5, %c0_6, %c0_7] : memref<1x392x128xf32, #tpu.memory_space<vmem>>, vector<1x392x128xf32>
    %7 = vector.shape_cast %6 : vector<1x392x128xf32> to vector<392x128xf32>
    %8 = vector.shape_cast %5 : vector<392x128xf32> to vector<1x392x128xf32>
    tpu.vector_store %arg4[%c0_5, %c0_6, %c0_7], %8 {strides = array<i32>} : memref<1x392x128xf32, #tpu.memory_space<vmem>>, vector<1x392x128xf32>,
    return
  }
  func.func @transform_0(%arg0: i32, %arg1: i32) -> (i32, i32, i32) {
    %c0_i32 = arith.constant 0 : i32
    %c0_i32_0 = arith.constant 0 : i32
    return %arg0, %arg1, %c0_i32 : i32, i32, i32
  }
  func.func @transform_1(%arg0: i32, %arg1: i32) -> (i32, i32, i32) {
    %c0_i32 = arith.constant 0 : i32
    %c0_i32_0 = arith.constant 0 : i32
    %c0_i32_1 = arith.constant 0 : i32
    return %arg0, %c0_i32, %c0_i32_0 : i32, i32, i32
  }
  func.func @transform_2(%arg0: i32, %arg1: i32) -> (i32, i32, i32) {
    %c0_i32 = arith.constant 0 : i32
    %c0_i32_0 = arith.constant 0 : i32
    return %arg0, %arg1, %c0_i32 : i32, i32, i32
  }
}

</mosaic_0001>

<llo_original>
// kernel: squeeze.57
$region0: #{squeeze.57}
  %s0 = inlined_call_operand.vmem [shape: f32[1,2,4096], index: 0, kind: input, shape index: {}]
  %s1 = inlined_call_operand.vmem [shape: f32[32,256], index: 1, kind: output, shape index: {}]
  $region1: #{squeeze.57} parent=0
    #allocation0 [shape = 'u8[131072]{0}', space=vmem, size = 0x20000, scoped, tag = 'scoped mem for input reshape']
    %s3 = sshllo.u32 0, 2
    %s4 = smul.addr 2, 31
    %s5 = scalar_lea.vmem %s0, %s4
    %v6 = vld [vmem:[%s5] sm:%s3]
    %s7 = scalar_lea.vmem [#allocation0], 248
    %8 = vst [vmem:[%s7] sm:%s3] %v6
    %s9 = smul.addr 2, 30
    %s10 = scalar_lea.vmem %s0, %s9
    %v11 = vld [vmem:[%s10] sm:%s3]
    %s12 = scalar_lea.vmem [#allocation0], 240
    %13 = vst [vmem:[%s12] sm:%s3] %v11
    %s14 = smul.addr 2, 29
    %s15 = scalar_lea.vmem %s0, %s14
    %v16 = vld [vmem:[%s15] sm:%s3]
    %s17 = scalar_lea.vmem [#allocation0], 232
    %18 = vst [vmem:[%s17] sm:%s3] %v16
    %s19 = smul.addr 2, 28
    %s20 = scalar_lea.vmem %s0, %s19
    %v21 = vld [vmem:[%s20] sm:%s3]
    %s22 = scalar_lea.vmem [#allocation0], 224
    %23 = vst [vmem:[%s22] sm:%s3] %v21
    %s24 = smul.addr 2, 27
    %s25 = scalar_lea.vmem %s0, %s24
    %v26 = vld [vmem:[%s25] sm:%s3]
    %s27 = scalar_lea.vmem [#allocation0], 216
    %28 = vst [vmem:[%s27] sm:%s3] %v26
    %s29 = smul.addr 2, 26
    %s30 = scalar_lea.vmem %s0, %s29
    %v31 = vld [vmem:[%s30] sm:%s3]
    %s32 = scalar_lea.vmem [#allocation0], 208
    %33 = vst [vmem:[%s32] sm:%s3] %v31
    %s34 = smul.addr 2, 25
    %s35 = scalar_lea.vmem %s0, %s34
    %v36 = vld [vmem:[%s35] sm:%s3]
    %s37 = scalar_lea.vmem [#allocation0], 200
    %38 = vst [vmem:[%s37] sm:%s3] %v36
    %s39 = smul.addr 2, 24
    %s40 = scalar_lea.vmem %s0, %s39
    %v41 = vld [vmem:[%s40] sm:%s3]
    %s42 = scalar_lea.vmem [#allocation0], 192
    %43 = vst [vmem:[%s42] sm:%s3] %v41
    %s44 = smul.addr 2, 23
    %s45 = scalar_lea.vmem %s0, %s44
    %v46 = vld [vmem:[%s45] sm:%s3]
    %s47 = scalar_lea.vmem [#allocation0], 184
    %48 = vst [vmem:[%s47] sm:%s3] %v46
    %s49 = smul.addr 2, 22
    %s50 = scalar_lea.vmem %s0, %s49
    %v51 = vld [vmem:[%s50] sm:%s3]
    %s52 = scalar_lea.vmem [#allocation0], 176
    %53 = vst [vmem:[%s52] sm:%s3] %v51
    %s54 = smul.addr 2, 21
    %s55 = scalar_lea.vmem %s0, %s54
    %v56 = vld [vmem:[%s55] sm:%s3]
    %s57 = scalar_lea.vmem [#allocation0], 168
    %58 = vst [vmem:[%s57] sm:%s3] %v56
    %s59 = smul.addr 2, 20
    %s60 = scalar_lea.vmem %s0, %s59
    %v61 = vld [vmem:[%s60] sm:%s3]
    %s62 = scalar_lea.vmem [#allocation0], 160
    %63 = vst [vmem:[%s62] sm:%s3] %v61
    %s64 = smul.addr 2, 19
    %s65 = scalar_lea.vmem %s0, %s64
    %v66 = vld [vmem:[%s65] sm:%s3]
    %s67 = scalar_lea.vmem [#allocation0], 152
    %68 = vst [vmem:[%s67] sm:%s3] %v66
    %s69 = smul.addr 2, 18
    %s70 = scalar_lea.vmem %s0, %s69
    %v71 = vld [vmem:[%s70] sm:%s3]
    %s72 = scalar_lea.vmem [#allocation0], 144
    %73 = vst [vmem:[%s72] sm:%s3] %v71
    %s74 = smul.addr 2, 17
    %s75 = scalar_lea.vmem %s0, %s74
    %v76 = vld [vmem:[%s75] sm:%s3]
    %s77 = scalar_lea.vmem [#allocation0], 136
    %78 = vst [vmem:[%s77] sm:%s3] %v76
    %s79 = smul.addr 2, 16
    %s80 = scalar_lea.vmem %s0, %s79
    %v81 = vld [vmem:[%s80] sm:%s3]
    %s82 = scalar_lea.vmem [#allocation0], 128
    %83 = vst [vmem:[%s82] sm:%s3] %v81
    %s84 = smul.addr 2, 15
    %s85 = scalar_lea.vmem %s0, %s84
    %v86 = vld [vmem:[%s85] sm:%s3]
    %s87 = scalar_lea.vmem [#allocation0], 120
    %88 = vst [vmem:[%s87] sm:%s3] %v86
    %s89 = smul.addr 2, 14
    %s90 = scalar_lea.vmem %s0, %s89
    %v91 = vld [vmem:[%s90] sm:%s3]
    %s92 = scalar_lea.vmem [#allocation0], 112
    %93 = vst [vmem:[%s92] sm:%s3] %v91
    %s94 = smul.addr 2, 13
    %s95 = scalar_lea.vmem %s0, %s94
    %v96 = vld [vmem:[%s95] sm:%s3]
    %s97 = scalar_lea.vmem [#allocation0], 104
    %98 = vst [vmem:[%s97] sm:%s3] %v96
    %s99 = smul.addr 2, 12
    %s100 = scalar_lea.vmem %s0, %s99
    %v101 = vld [vmem:[%s100] sm:%s3]
    %s102 = scalar_lea.vmem [#allocation0], 96
    %103 = vst [vmem:[%s102] sm:%s3] %v101
    %s104 = smul.addr 2, 11
    %s105 = scalar_lea.vmem %s0, %s104
    %v106 = vld [vmem:[%s105] sm:%s3]
    %s107 = scalar_lea.vmem [#allocation0], 88
    %108 = vst [vmem:[%s107] sm:%s3] %v106
    %s109 = smul.addr 2, 10
    %s110 = scalar_lea.vmem %s0, %s109
    %v111 = vld [vmem:[%s110] sm:%s3]
    %s112 = scalar_lea.vmem [#allocation0], 80
    %113 = vst [vmem:[%s112] sm:%s3] %v111
    %s114 = smul.addr 2, 9
    %s115 = scalar_lea.vmem %s0, %s114
    %v116 = vld [vmem:[%s115] sm:%s3]
    %s117 = scalar_lea.vmem [#allocation0], 72
    %118 = vst [vmem:[%s117] sm:%s3] %v116
    %s119 = smul.addr 2, 8
    %s120 = scalar_lea.vmem %s0, %s119
    %v121 = vld [vmem:[%s120] sm:%s3]
    %s122 = scalar_lea.vmem [#allocation0], 64
    %123 = vst [vmem:[%s122] sm:%s3] %v121
    %s124 = smul.addr 2, 7
    %s125 = scalar_lea.vmem %s0, %s124
    %v126 = vld [vmem:[%s125] sm:%s3]
    %s127 = scalar_lea.vmem [#allocation0], 56
    %128 = vst [vmem:[%s127] sm:%s3] %v126
    %s129 = smul.addr 2, 6
    %s130 = scalar_lea.vmem %s0, %s129
    %v131 = vld [vmem:[%s130] sm:%s3]
    %s132 = scalar_lea.vmem [#allocation0], 48
    %133 = vst [vmem:[%s132] sm:%s3] %v131
    %s134 = smul.addr 2, 5
    %s135 = scalar_lea.vmem %s0, %s134
    %v136 = vld [vmem:[%s135] sm:%s3]
    %s137 = scalar_lea.vmem [#allocation0], 40
    %138 = vst [vmem:[%s137] sm:%s3] %v136
    %s139 = smul.addr 2, 4
    %s140 = scalar_lea.vmem %s0, %s139
    %v141 = vld [vmem:[%s140] sm:%s3]
    %s142 = scalar_lea.vmem [#allocation0], 32
    %143 = vst [vmem:[%s142] sm:%s3] %v141
    %s144 = smul.addr 2, 3
    %s145 = scalar_lea.vmem %s0, %s144
    %v146 = vld [vmem:[%s145] sm:%s3]
    %s147 = scalar_lea.vmem [#allocation0], 24
    %148 = vst [vmem:[%s147] sm:%s3] %v146
    %s149 = smul.addr 2, 2
    %s150 = scalar_lea.vmem %s0, %s149
    %v151 = vld [vmem:[%s150] sm:%s3]
    %s152 = scalar_lea.vmem [#allocation0], 16
    %153 = vst [vmem:[%s152] sm:%s3] %v151
    %s154 = scalar_lea.vmem %s0, 2
    %v155 = vld [vmem:[%s154] sm:%s3]
    %s156 = scalar_lea.vmem [#allocation0], 8
    %157 = vst [vmem:[%s156] sm:%s3] %v155
    %v158 = vld [vmem:[%s0] sm:%s3]
    %159 = vst [vmem:[#allocation0] sm:%s3] %v158
    %v160 = vld [vmem:[#allocation0] sm:$0x3]
    %161 = vst [vmem:[%s1] sm:$0x1] %v160
    %s162 = scalar_lea.vmem %s1, 31
    %163 = vst [vmem:[%s162] sm:$0x2] %v160
    %s164 = scalar_lea.vmem [#allocation0], 8
    %v165 = vld [vmem:[%s164] sm:$0x3]
    %s166 = scalar_lea.vmem %s1, 8
    %167 = vst [vmem:[%s166] sm:$0x1] %v165
    %s168 = scalar_lea.vmem %s1, 39
    %169 = vst [vmem:[%s168] sm:$0x2] %v165
    %s170 = scalar_lea.vmem [#allocation0], 16
    %v171 = vld [vmem:[%s170] sm:$0x3]
    %s172 = scalar_lea.vmem %s1, 1
    %173 = vst [vmem:[%s172] sm:$0x1] %v171
    %s174 = scalar_lea.vmem %s1, 32
    %175 = vst [vmem:[%s174] sm:$0x2] %v171
    %s176 = scalar_lea.vmem [#allocation0], 24
    %v177 = vld [vmem:[%s176] sm:$0x3]
    %s178 = scalar_lea.vmem %s1, 9
    %179 = vst [vmem:[%s178] sm:$0x1] %v177
    %s180 = scalar_lea.vmem %s1, 40
    %181 = vst [vmem:[%s180] sm:$0x2] %v177
    %s182 = scalar_lea.vmem [#allocation0], 32
    %v183 = vld [vmem:[%s182] sm:$0x3]
    %s184 = scalar_lea.vmem %s1, 2
    %185 = vst [vmem:[%s184] sm:$0x1] %v183
    %s186 = scalar_lea.vmem %s1, 33
    %187 = vst [vmem:[%s186] sm:$0x2] %v183
    %s188 = scalar_lea.vmem [#allocation0], 40
    %v189 = vld [vmem:[%s188] sm:$0x3]
    %s190 = scalar_lea.vmem %s1, 10
    %191 = vst [vmem:[%s190] sm:$0x1] %v189
    %s192 = scalar_lea.vmem %s1, 41
    %193 = vst [vmem:[%s192] sm:$0x2] %v189
    %s194 = scalar_lea.vmem [#allocation0], 48
    %v195 = vld [vmem:[%s194] sm:$0x3]
    %s196 = scalar_lea.vmem %s1, 3
    %197 = vst [vmem:[%s196] sm:$0x1] %v195
    %s198 = scalar_lea.vmem %s1, 34
    %199 = vst [vmem:[%s198] sm:$0x2] %v195
    %s200 = scalar_lea.vmem [#allocation0], 56
    %v201 = vld [vmem:[%s200] sm:$0x3]
    %s202 = scalar_lea.vmem %s1, 11
    %203 = vst [vmem:[%s202] sm:$0x1] %v201
    %s204 = scalar_lea.vmem %s1, 42
    %205 = vst [vmem:[%s204] sm:$0x2] %v201
    %s206 = scalar_lea.vmem [#allocation0], 64
    %v207 = vld [vmem:[%s206] sm:$0x3]
    %s208 = scalar_lea.vmem %s1, 4
    %209 = vst [vmem:[%s208] sm:$0x1] %v207
    %s210 = scalar_lea.vmem %s1, 35
    %211 = vst [vmem:[%s210] sm:$0x2] %v207
    %s212 = scalar_lea.vmem [#allocation0], 72
    %v213 = vld [vmem:[%s212] sm:$0x3]
    %s214 = scalar_lea.vmem %s1, 12
    %215 = vst [vmem:[%s214] sm:$0x1] %v213
    %s216 = scalar_lea.vmem %s1, 43
    %217 = vst [vmem:[%s216] sm:$0x2] %v213
    %s218 = scalar_lea.vmem [#allocation0], 80
    %v219 = vld [vmem:[%s218] sm:$0x3]
    %s220 = scalar_lea.vmem %s1, 5
    %221 = vst [vmem:[%s220] sm:$0x1] %v219
    %s222 = scalar_lea.vmem %s1, 36
    %223 = vst [vmem:[%s222] sm:$0x2] %v219
    %s224 = scalar_lea.vmem [#allocation0], 88
    %v225 = vld [vmem:[%s224] sm:$0x3]
    %s226 = scalar_lea.vmem %s1, 13
    %227 = vst [vmem:[%s226] sm:$0x1] %v225
    %s228 = scalar_lea.vmem %s1, 44
    %229 = vst [vmem:[%s228] sm:$0x2] %v225
    %s230 = scalar_lea.vmem [#allocation0], 96
    %v231 = vld [vmem:[%s230] sm:$0x3]
    %s232 = scalar_lea.vmem %s1, 6
    %233 = vst [vmem:[%s232] sm:$0x1] %v231
    %s234 = scalar_lea.vmem %s1, 37
    %235 = vst [vmem:[%s234] sm:$0x2] %v231
    %s236 = scalar_lea.vmem [#allocation0], 104
    %v237 = vld [vmem:[%s236] sm:$0x3]
    %s238 = scalar_lea.vmem %s1, 14
    %239 = vst [vmem:[%s238] sm:$0x1] %v237
    %s240 = scalar_lea.vmem %s1, 45
    %241 = vst [vmem:[%s240] sm:$0x2] %v237
    %s242 = scalar_lea.vmem [#allocation0], 112
    %v243 = vld [vmem:[%s242] sm:$0x3]
    %s244 = scalar_lea.vmem %s1, 7
    %245 = vst [vmem:[%s244] sm:$0x1] %v243
    %s246 = scalar_lea.vmem %s1, 38
    %247 = vst [vmem:[%s246] sm:$0x2] %v243
    %s248 = scalar_lea.vmem [#allocation0], 120
    %v249 = vld [vmem:[%s248] sm:$0x3]
    %s250 = scalar_lea.vmem %s1, 15
    %251 = vst [vmem:[%s250] sm:$0x1] %v249
    %s252 = scalar_lea.vmem %s1, 46
    %253 = vst [vmem:[%s252] sm:$0x2] %v249
    %s254 = scalar_lea.vmem [#allocation0], 128
    %v255 = vld [vmem:[%s254] sm:$0x3]
    %s256 = scalar_lea.vmem %s1, 16
    %257 = vst [vmem:[%s256] sm:$0x1] %v255
    %s258 = scalar_lea.vmem %s1, 47
    %259 = vst [vmem:[%s258] sm:$0x2] %v255
    %s260 = scalar_lea.vmem [#allocation0], 136
    %v261 = vld [vmem:[%s260] sm:$0x3]
    %s262 = scalar_lea.vmem %s1, 24
    %263 = vst [vmem:[%s262] sm:$0x1] %v261
    %s264 = scalar_lea.vmem %s1, 55
    %265 = vst [vmem:[%s264] sm:$0x2] %v261
    %s266 = scalar_lea.vmem [#allocation0], 144
    %v267 = vld [vmem:[%s266] sm:$0x3]
    %s268 = scalar_lea.vmem %s1, 17
    %269 = vst [vmem:[%s268] sm:$0x1] %v267
    %s270 = scalar_lea.vmem %s1, 48
    %271 = vst [vmem:[%s270] sm:$0x2] %v267
    %s272 = scalar_lea.vmem [#allocation0], 152
    %v273 = vld [vmem:[%s272] sm:$0x3]
    %s274 = scalar_lea.vmem %s1, 25
    %275 = vst [vmem:[%s274] sm:$0x1] %v273
    %s276 = scalar_lea.vmem %s1, 56
    %277 = vst [vmem:[%s276] sm:$0x2] %v273
    %s278 = scalar_lea.vmem [#allocation0], 160
    %v279 = vld [vmem:[%s278] sm:$0x3]
    %s280 = scalar_lea.vmem %s1, 18
    %281 = vst [vmem:[%s280] sm:$0x1] %v279
    %s282 = scalar_lea.vmem %s1, 49
    %283 = vst [vmem:[%s282] sm:$0x2] %v279
    %s284 = scalar_lea.vmem [#allocation0], 168
    %v285 = vld [vmem:[%s284] sm:$0x3]
    %s286 = scalar_lea.vmem %s1, 26
    %287 = vst [vmem:[%s286] sm:$0x1] %v285
    %s288 = scalar_lea.vmem %s1, 57
    %289 = vst [vmem:[%s288] sm:$0x2] %v285
    %s290 = scalar_lea.vmem [#allocation0], 176
    %v291 = vld [vmem:[%s290] sm:$0x3]
    %s292 = scalar_lea.vmem %s1, 19
    %293 = vst [vmem:[%s292] sm:$0x1] %v291
    %s294 = scalar_lea.vmem %s1, 50
    %295 = vst [vmem:[%s294] sm:$0x2] %v291
    %s296 = scalar_lea.vmem [#allocation0], 184
    %v297 = vld [vmem:[%s296] sm:$0x3]
    %s298 = scalar_lea.vmem %s1, 27
    %299 = vst [vmem:[%s298] sm:$0x1] %v297
    %s300 = scalar_lea.vmem %s1, 58
    %301 = vst [vmem:[%s300] sm:$0x2] %v297
    %s302 = scalar_lea.vmem [#allocation0], 192
    %v303 = vld [vmem:[%s302] sm:$0x3]
    %s304 = scalar_lea.vmem %s1, 20
    %305 = vst [vmem:[%s304] sm:$0x1] %v303
    %s306 = scalar_lea.vmem %s1, 51
    %307 = vst [vmem:[%s306] sm:$0x2] %v303
    %s308 = scalar_lea.vmem [#allocation0], 200
    %v309 = vld [vmem:[%s308] sm:$0x3]
    %s310 = scalar_lea.vmem %s1, 28
    %311 = vst [vmem:[%s310] sm:$0x1] %v309
    %s312 = scalar_lea.vmem %s1, 59
    %313 = vst [vmem:[%s312] sm:$0x2] %v309
    %s314 = scalar_lea.vmem [#allocation0], 208
    %v315 = vld [vmem:[%s314] sm:$0x3]
    %s316 = scalar_lea.vmem %s1, 21
    %317 = vst [vmem:[%s316] sm:$0x1] %v315
    %s318 = scalar_lea.vmem %s1, 52
    %319 = vst [vmem:[%s318] sm:$0x2] %v315
    %s320 = scalar_lea.vmem [#allocation0], 216
    %v321 = vld [vmem:[%s320] sm:$0x3]
    %s322 = scalar_lea.vmem %s1, 29
    %323 = vst [vmem:[%s322] sm:$0x1] %v321
    %s324 = scalar_lea.vmem %s1, 60
    %325 = vst [vmem:[%s324] sm:$0x2] %v321
    %s326 = scalar_lea.vmem [#allocation0], 224
    %v327 = vld [vmem:[%s326] sm:$0x3]
    %s328 = scalar_lea.vmem %s1, 22
    %329 = vst [vmem:[%s328] sm:$0x1] %v327
    %s330 = scalar_lea.vmem %s1, 53
    %331 = vst [vmem:[%s330] sm:$0x2] %v327
    %s332 = scalar_lea.vmem [#allocation0], 232
    %v333 = vld [vmem:[%s332] sm:$0x3]
    %s334 = scalar_lea.vmem %s1, 30
    %335 = vst [vmem:[%s334] sm:$0x1] %v333
    %s336 = scalar_lea.vmem %s1, 61
    %337 = vst [vmem:[%s336] sm:$0x2] %v333
    %s338 = scalar_lea.vmem [#allocation0], 240
    %v339 = vld [vmem:[%s338] sm:$0x3]
    %s340 = scalar_lea.vmem %s1, 23
    %341 = vst [vmem:[%s340] sm:$0x1] %v339
    %s342 = scalar_lea.vmem %s1, 54
    %343 = vst [vmem:[%s342] sm:$0x2] %v339
    %s344 = scalar_lea.vmem [#allocation0], 248
    %v345 = vld [vmem:[%s344] sm:$0x3]
    %s346 = scalar_lea.vmem %s1, 31
    %347 = vst [vmem:[%s346] sm:$0x1] %v345
    %s348 = scalar_lea.vmem %s1, 62
    %349 = vst [vmem:[%s348] sm:$0x2] %v345

// kernel: generator_forward.8
$region0: #{generator_forward.8}
  #allocation0 [shape = 'u32[]', space=smem, size = 0x4, offset = 0x4, fixed_abs, tag = 'smem constant byte address 0x4 - core index']
  #allocation1 [shape = 'u32[144,128]{1,0:T(1,128)}', space=vmem, size = 0x12000, scoped, tag = 'internal scratch']
  %s0 = inlined_call_operand.vmem [shape: f32[32,256], index: 0, kind: input, shape index: {}]
  %s1 = inlined_call_operand.vmem [shape: f32[1,256], index: 1, kind: input, shape index: {}]
  %s2 = inlined_call_operand.vmem [shape: f32[1,256], index: 2, kind: input, shape index: {}]
  %s3 = inlined_call_operand.vmem [shape: bf16[32,256], index: 3, kind: output, shape index: {}]
  %s4 = sld [smem:[#allocation0]]
  $region22: #{generator_forward.8} parent=0
    _
  %s6 = ssub.s32 1, %s4
  %s7 = scalar_select 0, %s6, %s4
  // Predicated region
  $region2: #{generator_forward.8} parent=0 // pred_check
    _
  $region3: #{generator_forward.8} parent=0 // pred_check_branch
    %9 = sbr.rel (0) target = $region5
  $region4: #{generator_forward.8} parent=0 // pred_region
    _
  $region5: #{generator_forward.8} parent=0 // pred_fallthru
    _
  // Predicated region
  $region6: #{generator_forward.8} parent=0 // pred_check
    _
  $region7: #{generator_forward.8} parent=0 // pred_check_branch
    %11 = sbr.rel (0) target = $region9
  $region8: #{generator_forward.8} parent=0 // pred_region
    _
  $region9: #{generator_forward.8} parent=0 // pred_fallthru
    _
  // Predicated region
  $region10: #{generator_forward.8} parent=0 // pred_check
    _
  $region11: #{generator_forward.8} parent=0 // pred_check_branch
    %13 = sbr.rel (0) target = $region13
  $region12: #{generator_forward.8} parent=0 // pred_region
    _
  $region13: #{generator_forward.8} parent=0 // pred_fallthru
    _
  %v14 = vld [vmem:[%s0] sm:$0xff]
  %v15 = vld [vmem:[%s0 + $0x8] sm:$0xff]
  %v16 = vld [vmem:[%s0 + $0x10] sm:$0xff]
  %v17 = vld [vmem:[%s0 + $0x18] sm:$0xff]
  %v18 = vld [vmem:[%s0 + $0x20] sm:$0xff]
  %v19 = vld [vmem:[%s0 + $0x28] sm:$0xff]
  %v20 = vld [vmem:[%s0 + $0x30] sm:$0xff]
  %v21 = vld [vmem:[%s0 + $0x38] sm:$0xff]
  %v22 = vld [vmem:[%s1] sm:$0x3]
  %v24 = vlaneseq
  %v25 = vshrl.u32 %v24, 7
  %v26 = vsub.s32 0, %v25
  %v27 = vrot.slane %v22, %v26
  %v28 = vlaneseq
  %v29 = vshrl.u32 %v28, 7
  %v30 = vsub.s32 1, %v29
  %v31 = vrot.slane %v22, %v30
  %v34 = vmul.f32 %v14, %v27
  %v35 = vmul.f32 %v15, %v31
  %v36 = vmul.f32 %v16, %v27
  %v37 = vmul.f32 %v17, %v31
  %v38 = vmul.f32 %v18, %v27
  %v39 = vmul.f32 %v19, %v31
  %v40 = vmul.f32 %v20, %v27
  %v41 = vmul.f32 %v21, %v31
  %v42 = vld [vmem:[%s2] sm:$0x3]
  %v44 = vlaneseq
  %v45 = vshrl.u32 %v44, 7
  %v46 = vsub.s32 0, %v45
  %v47 = vrot.slane %v42, %v46
  %v48 = vlaneseq
  %v49 = vshrl.u32 %v48, 7
  %v50 = vsub.s32 1, %v49
  %v51 = vrot.slane %v42, %v50
  %v54 = vadd.f32 %v34, %v47
  %v55 = vadd.f32 %v35, %v51
  %v56 = vadd.f32 %v36, %v47
  %v57 = vadd.f32 %v37, %v51
  %v58 = vadd.f32 %v38, %v47
  %v59 = vadd.f32 %v39, %v51
  %v60 = vadd.f32 %v40, %v47
  %v61 = vadd.f32 %v41, %v51
  %v62 = vmax.f32 %v54, 0.0
  %v63 = vmax.f32 %v55, 0.0
  %v64 = vmax.f32 %v56, 0.0
  %v65 = vmax.f32 %v57, 0.0
  %v66 = vmax.f32 %v58, 0.0
  %v67 = vmax.f32 %v59, 0.0
  %v68 = vmax.f32 %v60, 0.0
  %v69 = vmax.f32 %v61, 0.0
  %v70 = vpack.c.bf16 %v64, %v62
  %v71 = vpack.c.bf16 %v65, %v63
  %v72 = vpack.c.bf16 %v68, %v66
  %v73 = vpack.c.bf16 %v69, %v67
  %v78 = vunpack.c.l.b16 %v70
  %v79 = vunpack.c.l.b16 %v71
  %v80 = vunpack.c.h.b16 %v70
  %v81 = vunpack.c.h.b16 %v71
  %v82 = vunpack.c.l.b16 %v72
  %v83 = vunpack.c.l.b16 %v73
  %v84 = vunpack.c.h.b16 %v72
  %v85 = vunpack.c.h.b16 %v73
  %v86 = vpack.c.b16 %v79, %v78
  %v87 = vpack.c.b16 %v81, %v80
  %v88 = vpack.c.b16 %v83, %v82
  %v89 = vpack.c.b16 %v85, %v84
  %94 = vst [vmem:[%s3] sm:$0xff] %v86
  %95 = vst [vmem:[%s3 + $0x8] sm:$0xff] %v87
  %96 = vst [vmem:[%s3 + $0x10] sm:$0xff] %v88
  %97 = vst [vmem:[%s3 + $0x18] sm:$0xff] %v89
  // Predicated region
  $region14: #{generator_forward.8} parent=0 // pred_check
    _
  $region15: #{generator_forward.8} parent=0 // pred_check_branch
    %99 = sbr.rel (0) target = $region17
  $region16: #{generator_forward.8} parent=0 // pred_region
    _
  $region17: #{generator_forward.8} parent=0 // pred_fallthru
    _
  // Predicated region
  $region18: #{generator_forward.8} parent=0 // pred_check
    _
  $region19: #{generator_forward.8} parent=0 // pred_check_branch
    %101 = sbr.rel (0) target = $region21
  $region20: #{generator_forward.8} parent=0 // pred_region
    _
  $region21: #{generator_forward.8} parent=0 // pred_fallthru
    _

// kernel: generator_forward.7
$region0: #{generator_forward.7}
  #allocation0 [shape = 'u32[]', space=smem, size = 0x4, offset = 0x4, fixed_abs, tag = 'smem constant byte address 0x4 - core index']
  #allocation1 [shape = 'u32[144,128]{1,0:T(1,128)}', space=vmem, size = 0x12000, scoped, tag = 'internal scratch']
  %s0 = inlined_call_operand.vmem [shape: bf16[1,8,64], index: 0, kind: input, shape index: {}]
  %s1 = inlined_call_operand.vmem [shape: bf16[1,64,4096], index: 1, kind: input, shape index: {}]
  %s2 = inlined_call_operand.vmem [shape: f32[1,8,4096], index: 2, kind: output, shape index: {0}]
  %s3 = inlined_call_operand.vmem [shape: f32[1,2,4096], index: 3, kind: output, shape index: {1}]
  %4 = xla_tuple %s2, %s3
  %s5 = sld [smem:[#allocation0]]
  $region26: #{generator_forward.7} parent=0
    _
  %s7 = ssub.s32 1, %s5
  %s8 = scalar_select 0, %s7, %s5
  // Predicated region
  $region2: #{generator_forward.7} parent=0 // pred_check
    _
  $region3: #{generator_forward.7} parent=0 // pred_check_branch
    %10 = sbr.rel (0) target = $region5
  $region4: #{generator_forward.7} parent=0 // pred_region
    _
  $region5: #{generator_forward.7} parent=0 // pred_fallthru
    _
  // Predicated region
  $region6: #{generator_forward.7} parent=0 // pred_check
    _
  $region7: #{generator_forward.7} parent=0 // pred_check_branch
    %12 = sbr.rel (0) target = $region9
  $region8: #{generator_forward.7} parent=0 // pred_region
    _
  $region9: #{generator_forward.7} parent=0 // pred_fallthru
    _
  %s13 = sadd.s32 0, 0
  %p14 = scmp.lt.s32.totalorder %s13, 0
  %s15 = scalar_select %p14, %s13, 0
  %s16 = smul.addr %s15, 32
  %s17 = smul.addr %s16, 2
  %s18 = scalar_lea.vmem %s3, %s17
  %s19 = sadd.s32 0, 0
  %p20 = scmp.lt.s32.totalorder %s19, 0
  %s21 = scalar_select %p20, %s19, 0
  %s22 = smul.addr %s21, 32
  %s23 = smul.addr %s22, 2
  %s24 = scalar_lea.vmem %s3, %s23
  %s25 = sadd.s32 0, 0
  %v27 = vld [vmem:[%s0] sm:$0xf]
  %v28 = vld [vmem:[%s1] sm:$0xff]
  %v29 = vld [vmem:[%s1 + $0x8] sm:$0xff]
  %v30 = vld [vmem:[%s1 + $0x10] sm:$0xff]
  %v31 = vld [vmem:[%s1 + $0x18] sm:$0xff]
  %v32 = vld [vmem:[%s1 + $0x20] sm:$0xff]
  %v33 = vld [vmem:[%s1 + $0x28] sm:$0xff]
  %v34 = vld [vmem:[%s1 + $0x30] sm:$0xff]
  %v35 = vld [vmem:[%s1 + $0x38] sm:$0xff]
  %v36 = vld [vmem:[%s1 + $0x40] sm:$0xff]
  %v37 = vld [vmem:[%s1 + $0x48] sm:$0xff]
  %v38 = vld [vmem:[%s1 + $0x50] sm:$0xff]
  %v39 = vld [vmem:[%s1 + $0x58] sm:$0xff]
  %v40 = vld [vmem:[%s1 + $0x60] sm:$0xff]
  %v41 = vld [vmem:[%s1 + $0x68] sm:$0xff]
  %v42 = vld [vmem:[%s1 + $0x70] sm:$0xff]
  %v43 = vld [vmem:[%s1 + $0x78] sm:$0xff]
  %v44 = vld [vmem:[%s1 + $0x80] sm:$0xff]
  %v45 = vld [vmem:[%s1 + $0x88] sm:$0xff]
  %v46 = vld [vmem:[%s1 + $0x90] sm:$0xff]
  %v47 = vld [vmem:[%s1 + $0x98] sm:$0xff]
  %v48 = vld [vmem:[%s1 + $0xa0] sm:$0xff]
  %v49 = vld [vmem:[%s1 + $0xa8] sm:$0xff]
  %v50 = vld [vmem:[%s1 + $0xb0] sm:$0xff]
  %v51 = vld [vmem:[%s1 + $0xb8] sm:$0xff]
  %v52 = vld [vmem:[%s1 + $0xc0] sm:$0xff]
  %v53 = vld [vmem:[%s1 + $0xc8] sm:$0xff]
  %v54 = vld [vmem:[%s1 + $0xd0] sm:$0xff]
  %v55 = vld [vmem:[%s1 + $0xd8] sm:$0xff]
  %v56 = vld [vmem:[%s1 + $0xe0] sm:$0xff]
  %v57 = vld [vmem:[%s1 + $0xe8] sm:$0xff]
  %v58 = vld [vmem:[%s1 + $0xf0] sm:$0xff]
  %v59 = vld [vmem:[%s1 + $0xf8] sm:$0xff]
  %v60 = vld [vmem:[%s1 + $0x100] sm:$0xff]
  %v61 = vld [vmem:[%s1 + $0x108] sm:$0xff]
  %v62 = vld [vmem:[%s1 + $0x110] sm:$0xff]
  %v63 = vld [vmem:[%s1 + $0x118] sm:$0xff]
  %v64 = vld [vmem:[%s1 + $0x120] sm:$0xff]
  %v65 = vld [vmem:[%s1 + $0x128] sm:$0xff]
  %v66 = vld [vmem:[%s1 + $0x130] sm:$0xff]
  %v67 = vld [vmem:[%s1 + $0x138] sm:$0xff]
  %v68 = vld [vmem:[%s1 + $0x140] sm:$0xff]
  %v69 = vld [vmem:[%s1 + $0x148] sm:$0xff]
  %v70 = vld [vmem:[%s1 + $0x150] sm:$0xff]
  %v71 = vld [vmem:[%s1 + $0x158] sm:$0xff]
  %v72 = vld [vmem:[%s1 + $0x160] sm:$0xff]
  %v73 = vld [vmem:[%s1 + $0x168] sm:$0xff]
  %v74 = vld [vmem:[%s1 + $0x170] sm:$0xff]
  %v75 = vld [vmem:[%s1 + $0x178] sm:$0xff]
  %v76 = vld [vmem:[%s1 + $0x180] sm:$0xff]
  %v77 = vld [vmem:[%s1 + $0x188] sm:$0xff]
  %v78 = vld [vmem:[%s1 + $0x190] sm:$0xff]
  %v79 = vld [vmem:[%s1 + $0x198] sm:$0xff]
  %v80 = vld [vmem:[%s1 + $0x1a0] sm:$0xff]
  %v81 = vld [vmem:[%s1 + $0x1a8] sm:$0xff]
  %v82 = vld [vmem:[%s1 + $0x1b0] sm:$0xff]
  %v83 = vld [vmem:[%s1 + $0x1b8] sm:$0xff]
  %v84 = vld [vmem:[%s1 + $0x1c0] sm:$0xff]
  %v85 = vld [vmem:[%s1 + $0x1c8] sm:$0xff]
  %v86 = vld [vmem:[%s1 + $0x1d0] sm:$0xff]
  %v87 = vld [vmem:[%s1 + $0x1d8] sm:$0xff]
  %v88 = vld [vmem:[%s1 + $0x1e0] sm:$0xff]
  %v89 = vld [vmem:[%s1 + $0x1e8] sm:$0xff]
  %v90 = vld [vmem:[%s1 + $0x1f0] sm:$0xff]
  %v91 = vld [vmem:[%s1 + $0x1f8] sm:$0xff]
  %v92 = vld [vmem:[%s1 + $0x200] sm:$0xff]
  %v93 = vld [vmem:[%s1 + $0x208] sm:$0xff]
  %v94 = vld [vmem:[%s1 + $0x210] sm:$0xff]
  %v95 = vld [vmem:[%s1 + $0x218] sm:$0xff]
  %v96 = vld [vmem:[%s1 + $0x220] sm:$0xff]
  %v97 = vld [vmem:[%s1 + $0x228] sm:$0xff]
  %v98 = vld [vmem:[%s1 + $0x230] sm:$0xff]
  %v99 = vld [vmem:[%s1 + $0x238] sm:$0xff]
  %v100 = vld [vmem:[%s1 + $0x240] sm:$0xff]
  %v101 = vld [vmem:[%s1 + $0x248] sm:$0xff]
  %v102 = vld [vmem:[%s1 + $0x250] sm:$0xff]
  %v103 = vld [vmem:[%s1 + $0x258] sm:$0xff]
  %v104 = vld [vmem:[%s1 + $0x260] sm:$0xff]
  %v105 = vld [vmem:[%s1 + $0x268] sm:$0xff]
  %v106 = vld [vmem:[%s1 + $0x270] sm:$0xff]
  %v107 = vld [vmem:[%s1 + $0x278] sm:$0xff]
  %v108 = vld [vmem:[%s1 + $0x280] sm:$0xff]
  %v109 = vld [vmem:[%s1 + $0x288] sm:$0xff]
  %v110 = vld [vmem:[%s1 + $0x290] sm:$0xff]
  %v111 = vld [vmem:[%s1 + $0x298] sm:$0xff]
  %v112 = vld [vmem:[%s1 + $0x2a0] sm:$0xff]
  %v113 = vld [vmem:[%s1 + $0x2a8] sm:$0xff]
  %v114 = vld [vmem:[%s1 + $0x2b0] sm:$0xff]
  %v115 = vld [vmem:[%s1 + $0x2b8] sm:$0xff]
  %v116 = vld [vmem:[%s1 + $0x2c0] sm:$0xff]
  %v117 = vld [vmem:[%s1 + $0x2c8] sm:$0xff]
  %v118 = vld [vmem:[%s1 + $0x2d0] sm:$0xff]
  %v119 = vld [vmem:[%s1 + $0x2d8] sm:$0xff]
  %v120 = vld [vmem:[%s1 + $0x2e0] sm:$0xff]
  %v121 = vld [vmem:[%s1 + $0x2e8] sm:$0xff]
  %v122 = vld [vmem:[%s1 + $0x2f0] sm:$0xff]
  %v123 = vld [vmem:[%s1 + $0x2f8] sm:$0xff]
  %v124 = vld [vmem:[%s1 + $0x300] sm:$0xff]
  %v125 = vld [vmem:[%s1 + $0x308] sm:$0xff]
  %v126 = vld [vmem:[%s1 + $0x310] sm:$0xff]
  %v127 = vld [vmem:[%s1 + $0x318] sm:$0xff]
  %v128 = vld [vmem:[%s1 + $0x320] sm:$0xff]
  %v129 = vld [vmem:[%s1 + $0x328] sm:$0xff]
  %v130 = vld [vmem:[%s1 + $0x330] sm:$0xff]
  %v131 = vld [vmem:[%s1 + $0x338] sm:$0xff]
  %v132 = vld [vmem:[%s1 + $0x340] sm:$0xff]
  %v133 = vld [vmem:[%s1 + $0x348] sm:$0xff]
  %v134 = vld [vmem:[%s1 + $0x350] sm:$0xff]
  %v135 = vld [vmem:[%s1 + $0x358] sm:$0xff]
  %v136 = vld [vmem:[%s1 + $0x360] sm:$0xff]
  %v137 = vld [vmem:[%s1 + $0x368] sm:$0xff]
  %v138 = vld [vmem:[%s1 + $0x370] sm:$0xff]
  %v139 = vld [vmem:[%s1 + $0x378] sm:$0xff]
  %v140 = vld [vmem:[%s1 + $0x380] sm:$0xff]
  %v141 = vld [vmem:[%s1 + $0x388] sm:$0xff]
  %v142 = vld [vmem:[%s1 + $0x390] sm:$0xff]
  %v143 = vld [vmem:[%s1 + $0x398] sm:$0xff]
  %v144 = vld [vmem:[%s1 + $0x3a0] sm:$0xff]
  %v145 = vld [vmem:[%s1 + $0x3a8] sm:$0xff]
  %v146 = vld [vmem:[%s1 + $0x3b0] sm:$0xff]
  %v147 = vld [vmem:[%s1 + $0x3b8] sm:$0xff]
  %v148 = vld [vmem:[%s1 + $0x3c0] sm:$0xff]
  %v149 = vld [vmem:[%s1 + $0x3c8] sm:$0xff]
  %v150 = vld [vmem:[%s1 + $0x3d0] sm:$0xff]
  %v151 = vld [vmem:[%s1 + $0x3d8] sm:$0xff]
  %v152 = vld [vmem:[%s1 + $0x3e0] sm:$0xff]
  %v153 = vld [vmem:[%s1 + $0x3e8] sm:$0xff]
  %v154 = vld [vmem:[%s1 + $0x3f0] sm:$0xff]
  %v155 = vld [vmem:[%s1 + $0x3f8] sm:$0xff]
  %v284 = vunpack.c.l.b16 %v28
  %v285 = vunpack.c.h.b16 %v28
  %v286 = vunpack.c.l.b16 %v29
  %v287 = vunpack.c.h.b16 %v29
  %v288 = vunpack.c.l.b16 %v30
  %v289 = vunpack.c.h.b16 %v30
  %v290 = vunpack.c.l.b16 %v31
  %v291 = vunpack.c.h.b16 %v31
  %v292 = vunpack.c.l.b16 %v32
  %v293 = vunpack.c.h.b16 %v32
  %v294 = vunpack.c.l.b16 %v33
  %v295 = vunpack.c.h.b16 %v33
  %v296 = vunpack.c.l.b16 %v34
  %v297 = vunpack.c.h.b16 %v34
  %v298 = vunpack.c.l.b16 %v35
  %v299 = vunpack.c.h.b16 %v35
  %v300 = vunpack.c.l.b16 %v36
  %v301 = vunpack.c.h.b16 %v36
  %v302 = vunpack.c.l.b16 %v37
  %v303 = vunpack.c.h.b16 %v37
  %v304 = vunpack.c.l.b16 %v38
  %v305 = vunpack.c.h.b16 %v38
  %v306 = vunpack.c.l.b16 %v39
  %v307 = vunpack.c.h.b16 %v39
  %v308 = vunpack.c.l.b16 %v40
  %v309 = vunpack.c.h.b16 %v40
  %v310 = vunpack.c.l.b16 %v41
  %v311 = vunpack.c.h.b16 %v41
  %v312 = vunpack.c.l.b16 %v42
  %v313 = vunpack.c.h.b16 %v42
  %v314 = vunpack.c.l.b16 %v43
  %v315 = vunpack.c.h.b16 %v43
  %v316 = vunpack.c.l.b16 %v44
  %v317 = vunpack.c.h.b16 %v44
  %v318 = vunpack.c.l.b16 %v45
  %v319 = vunpack.c.h.b16 %v45
  %v320 = vunpack.c.l.b16 %v46
  %v321 = vunpack.c.h.b16 %v46
  %v322 = vunpack.c.l.b16 %v47
  %v323 = vunpack.c.h.b16 %v47
  %v324 = vunpack.c.l.b16 %v48
  %v325 = vunpack.c.h.b16 %v48
  %v326 = vunpack.c.l.b16 %v49
  %v327 = vunpack.c.h.b16 %v49
  %v328 = vunpack.c.l.b16 %v50
  %v329 = vunpack.c.h.b16 %v50
  %v330 = vunpack.c.l.b16 %v51
  %v331 = vunpack.c.h.b16 %v51
  %v332 = vunpack.c.l.b16 %v52
  %v333 = vunpack.c.h.b16 %v52
  %v334 = vunpack.c.l.b16 %v53
  %v335 = vunpack.c.h.b16 %v53
  %v336 = vunpack.c.l.b16 %v54
  %v337 = vunpack.c.h.b16 %v54
  %v338 = vunpack.c.l.b16 %v55
  %v339 = vunpack.c.h.b16 %v55
  %v340 = vunpack.c.l.b16 %v56
  %v341 = vunpack.c.h.b16 %v56
  %v342 = vunpack.c.l.b16 %v57
  %v343 = vunpack.c.h.b16 %v57
  %v344 = vunpack.c.l.b16 %v58
  %v345 = vunpack.c.h.b16 %v58
  %v346 = vunpack.c.l.b16 %v59
  %v347 = vunpack.c.h.b16 %v59
  %v348 = vunpack.c.l.b16 %v60
  %v349 = vunpack.c.h.b16 %v60
  %v350 = vunpack.c.l.b16 %v61
  %v351 = vunpack.c.h.b16 %v61
  %v352 = vunpack.c.l.b16 %v62
  %v353 = vunpack.c.h.b16 %v62
  %v354 = vunpack.c.l.b16 %v63
  %v355 = vunpack.c.h.b16 %v63
  %v356 = vunpack.c.l.b16 %v64
  %v357 = vunpack.c.h.b16 %v64
  %v358 = vunpack.c.l.b16 %v65
  %v359 = vunpack.c.h.b16 %v65
  %v360 = vunpack.c.l.b16 %v66
  %v361 = vunpack.c.h.b16 %v66
  %v362 = vunpack.c.l.b16 %v67
  %v363 = vunpack.c.h.b16 %v67
  %v364 = vunpack.c.l.b16 %v68
  %v365 = vunpack.c.h.b16 %v68
  %v366 = vunpack.c.l.b16 %v69
  %v367 = vunpack.c.h.b16 %v69
  %v368 = vunpack.c.l.b16 %v70
  %v369 = vunpack.c.h.b16 %v70
  %v370 = vunpack.c.l.b16 %v71
  %v371 = vunpack.c.h.b16 %v71
  %v372 = vunpack.c.l.b16 %v72
  %v373 = vunpack.c.h.b16 %v72
  %v374 = vunpack.c.l.b16 %v73
  %v375 = vunpack.c.h.b16 %v73
  %v376 = vunpack.c.l.b16 %v74
  %v377 = vunpack.c.h.b16 %v74
  %v378 = vunpack.c.l.b16 %v75
  %v379 = vunpack.c.h.b16 %v75
  %v380 = vunpack.c.l.b16 %v76
  %v381 = vunpack.c.h.b16 %v76
  %v382 = vunpack.c.l.b16 %v77
  %v383 = vunpack.c.h.b16 %v77
  %v384 = vunpack.c.l.b16 %v78
  %v385 = vunpack.c.h.b16 %v78
  %v386 = vunpack.c.l.b16 %v79
  %v387 = vunpack.c.h.b16 %v79
  %v388 = vunpack.c.l.b16 %v80
  %v389 = vunpack.c.h.b16 %v80
  %v390 = vunpack.c.l.b16 %v81
  %v391 = vunpack.c.h.b16 %v81
  %v392 = vunpack.c.l.b16 %v82
  %v393 = vunpack.c.h.b16 %v82
  %v394 = vunpack.c.l.b16 %v83
  %v395 = vunpack.c.h.b16 %v83
  %v396 = vunpack.c.l.b16 %v84
  %v397 = vunpack.c.h.b16 %v84
  %v398 = vunpack.c.l.b16 %v85
  %v399 = vunpack.c.h.b16 %v85
  %v400 = vunpack.c.l.b16 %v86
  %v401 = vunpack.c.h.b16 %v86
  %v402 = vunpack.c.l.b16 %v87
  %v403 = vunpack.c.h.b16 %v87
  %v404 = vunpack.c.l.b16 %v88
  %v405 = vunpack.c.h.b16 %v88
  %v406 = vunpack.c.l.b16 %v89
  %v407 = vunpack.c.h.b16 %v89
  %v408 = vunpack.c.l.b16 %v90
  %v409 = vunpack.c.h.b16 %v90
  %v410 = vunpack.c.l.b16 %v91
  %v411 = vunpack.c.h.b16 %v91
  %v412 = vunpack.c.l.b16 %v92
  %v413 = vunpack.c.h.b16 %v92
  %v414 = vunpack.c.l.b16 %v93
  %v415 = vunpack.c.h.b16 %v93
  %v416 = vunpack.c.l.b16 %v94
  %v417 = vunpack.c.h.b16 %v94
  %v418 = vunpack.c.l.b16 %v95
  %v419 = vunpack.c.h.b16 %v95
  %v420 = vunpack.c.l.b16 %v96
  %v421 = vunpack.c.h.b16 %v96
  %v422 = vunpack.c.l.b16 %v97
  %v423 = vunpack.c.h.b16 %v97
  %v424 = vunpack.c.l.b16 %v98
  %v425 = vunpack.c.h.b16 %v98
  %v426 = vunpack.c.l.b16 %v99
  %v427 = vunpack.c.h.b16 %v99
  %v428 = vunpack.c.l.b16 %v100
  %v429 = vunpack.c.h.b16 %v100
  %v430 = vunpack.c.l.b16 %v101
  %v431 = vunpack.c.h.b16 %v101
  %v432 = vunpack.c.l.b16 %v102
  %v433 = vunpack.c.h.b16 %v102
  %v434 = vunpack.c.l.b16 %v103
  %v435 = vunpack.c.h.b16 %v103
  %v436 = vunpack.c.l.b16 %v104
  %v437 = vunpack.c.h.b16 %v104
  %v438 = vunpack.c.l.b16 %v105
  %v439 = vunpack.c.h.b16 %v105
  %v440 = vunpack.c.l.b16 %v106
  %v441 = vunpack.c.h.b16 %v106
  %v442 = vunpack.c.l.b16 %v107
  %v443 = vunpack.c.h.b16 %v107
  %v444 = vunpack.c.l.b16 %v108
  %v445 = vunpack.c.h.b16 %v108
  %v446 = vunpack.c.l.b16 %v109
  %v447 = vunpack.c.h.b16 %v109
  %v448 = vunpack.c.l.b16 %v110
  %v449 = vunpack.c.h.b16 %v110
  %v450 = vunpack.c.l.b16 %v111
  %v451 = vunpack.c.h.b16 %v111
  %v452 = vunpack.c.l.b16 %v112
  %v453 = vunpack.c.h.b16 %v112
  %v454 = vunpack.c.l.b16 %v113
  %v455 = vunpack.c.h.b16 %v113
  %v456 = vunpack.c.l.b16 %v114
  %v457 = vunpack.c.h.b16 %v114
  %v458 = vunpack.c.l.b16 %v115
  %v459 = vunpack.c.h.b16 %v115
  %v460 = vunpack.c.l.b16 %v116
  %v461 = vunpack.c.h.b16 %v116
  %v462 = vunpack.c.l.b16 %v117
  %v463 = vunpack.c.h.b16 %v117
  %v464 = vunpack.c.l.b16 %v118
  %v465 = vunpack.c.h.b16 %v118
  %v466 = vunpack.c.l.b16 %v119
  %v467 = vunpack.c.h.b16 %v119
  %v468 = vunpack.c.l.b16 %v120
  %v469 = vunpack.c.h.b16 %v120
  %v470 = vunpack.c.l.b16 %v121
  %v471 = vunpack.c.h.b16 %v121
  %v472 = vunpack.c.l.b16 %v122
  %v473 = vunpack.c.h.b16 %v122
  %v474 = vunpack.c.l.b16 %v123
  %v475 = vunpack.c.h.b16 %v123
  %v476 = vunpack.c.l.b16 %v124
  %v477 = vunpack.c.h.b16 %v124
  %v478 = vunpack.c.l.b16 %v125
  %v479 = vunpack.c.h.b16 %v125
  %v480 = vunpack.c.l.b16 %v126
  %v481 = vunpack.c.h.b16 %v126
  %v482 = vunpack.c.l.b16 %v127
  %v483 = vunpack.c.h.b16 %v127
  %v484 = vunpack.c.l.b16 %v128
  %v485 = vunpack.c.h.b16 %v128
  %v486 = vunpack.c.l.b16 %v129
  %v487 = vunpack.c.h.b16 %v129
  %v488 = vunpack.c.l.b16 %v130
  %v489 = vunpack.c.h.b16 %v130
  %v490 = vunpack.c.l.b16 %v131
  %v491 = vunpack.c.h.b16 %v131
  %v492 = vunpack.c.l.b16 %v132
  %v493 = vunpack.c.h.b16 %v132
  %v494 = vunpack.c.l.b16 %v133
  %v495 = vunpack.c.h.b16 %v133
  %v496 = vunpack.c.l.b16 %v134
  %v497 = vunpack.c.h.b16 %v134
  %v498 = vunpack.c.l.b16 %v135
  %v499 = vunpack.c.h.b16 %v135
  %v500 = vunpack.c.l.b16 %v136
  %v501 = vunpack.c.h.b16 %v136
  %v502 = vunpack.c.l.b16 %v137
  %v503 = vunpack.c.h.b16 %v137
  %v504 = vunpack.c.l.b16 %v138
  %v505 = vunpack.c.h.b16 %v138
  %v506 = vunpack.c.l.b16 %v139
  %v507 = vunpack.c.h.b16 %v139
  %v508 = vunpack.c.l.b16 %v140
  %v509 = vunpack.c.h.b16 %v140
  %v510 = vunpack.c.l.b16 %v141
  %v511 = vunpack.c.h.b16 %v141
  %v512 = vunpack.c.l.b16 %v142
  %v513 = vunpack.c.h.b16 %v142
  %v514 = vunpack.c.l.b16 %v143
  %v515 = vunpack.c.h.b16 %v143
  %v516 = vunpack.c.l.b16 %v144
  %v517 = vunpack.c.h.b16 %v144
  %v518 = vunpack.c.l.b16 %v145
  %v519 = vunpack.c.h.b16 %v145
  %v520 = vunpack.c.l.b16 %v146
  %v521 = vunpack.c.h.b16 %v146
  %v522 = vunpack.c.l.b16 %v147
  %v523 = vunpack.c.h.b16 %v147
  %v524 = vunpack.c.l.b16 %v148
  %v525 = vunpack.c.h.b16 %v148
  %v526 = vunpack.c.l.b16 %v149
  %v527 = vunpack.c.h.b16 %v149
  %v528 = vunpack.c.l.b16 %v150
  %v529 = vunpack.c.h.b16 %v150
  %v530 = vunpack.c.l.b16 %v151
  %v531 = vunpack.c.h.b16 %v151
  %v532 = vunpack.c.l.b16 %v152
  %v533 = vunpack.c.h.b16 %v152
  %v534 = vunpack.c.l.b16 %v153
  %v535 = vunpack.c.h.b16 %v153
  %v536 = vunpack.c.l.b16 %v154
  %v537 = vunpack.c.h.b16 %v154
  %v538 = vunpack.c.l.b16 %v155
  %v539 = vunpack.c.h.b16 %v155
  %v540 = vpack.c.b16 %v316, %v284
  %v541 = vpack.c.b16 %v317, %v285
  %v542 = vpack.c.b16 %v318, %v286
  %v543 = vpack.c.b16 %v319, %v287
  %v544 = vpack.c.b16 %v320, %v288
  %v545 = vpack.c.b16 %v321, %v289
  %v546 = vpack.c.b16 %v322, %v290
  %v547 = vpack.c.b16 %v323, %v291
  %v548 = vpack.c.b16 %v324, %v292
  %v549 = vpack.c.b16 %v325, %v293
  %v550 = vpack.c.b16 %v326, %v294
  %v551 = vpack.c.b16 %v327, %v295
  %v552 = vpack.c.b16 %v328, %v296
  %v553 = vpack.c.b16 %v329, %v297
  %v554 = vpack.c.b16 %v330, %v298
  %v555 = vpack.c.b16 %v331, %v299
  %v556 = vpack.c.b16 %v332, %v300
  %v557 = vpack.c.b16 %v333, %v301
  %v558 = vpack.c.b16 %v334, %v302
  %v559 = vpack.c.b16 %v335, %v303
  %v560 = vpack.c.b16 %v336, %v304
  %v561 = vpack.c.b16 %v337, %v305
  %v562 = vpack.c.b16 %v338, %v306
  %v563 = vpack.c.b16 %v339, %v307
  %v564 = vpack.c.b16 %v340, %v308
  %v565 = vpack.c.b16 %v341, %v309
  %v566 = vpack.c.b16 %v342, %v310
  %v567 = vpack.c.b16 %v343, %v311
  %v568 = vpack.c.b16 %v344, %v312
  %v569 = vpack.c.b16 %v345, %v313
  %v570 = vpack.c.b16 %v346, %v314
  %v571 = vpack.c.b16 %v347, %v315
  %v572 = vpack.c.b16 %v380, %v348
  %v573 = vpack.c.b16 %v381, %v349
  %v574 = vpack.c.b16 %v382, %v350
  %v575 = vpack.c.b16 %v383, %v351
  %v576 = vpack.c.b16 %v384, %v352
  %v577 = vpack.c.b16 %v385, %v353
  %v578 = vpack.c.b16 %v386, %v354
  %v579 = vpack.c.b16 %v387, %v355
  %v580 = vpack.c.b16 %v388, %v356
  %v581 = vpack.c.b16 %v389, %v357
  %v582 = vpack.c.b16 %v390, %v358
  %v583 = vpack.c.b16 %v391, %v359
  %v584 = vpack.c.b16 %v392, %v360
  %v585 = vpack.c.b16 %v393, %v361
  %v586 = vpack.c.b16 %v394, %v362
  %v587 = vpack.c.b16 %v395, %v363
  %v588 = vpack.c.b16 %v396, %v364
  %v589 = vpack.c.b16 %v397, %v365
  %v590 = vpack.c.b16 %v398, %v366
  %v591 = vpack.c.b16 %v399, %v367
  %v592 = vpack.c.b16 %v400, %v368
  %v593 = vpack.c.b16 %v401, %v369
  %v594 = vpack.c.b16 %v402, %v370
  %v595 = vpack.c.b16 %v403, %v371
  %v596 = vpack.c.b16 %v404, %v372
  %v597 = vpack.c.b16 %v405, %v373
  %v598 = vpack.c.b16 %v406, %v374
  %v599 = vpack.c.b16 %v407, %v375
  %v600 = vpack.c.b16 %v408, %v376
  %v601 = vpack.c.b16 %v409, %v377
  %v602 = vpack.c.b16 %v410, %v378
  %v603 = vpack.c.b16 %v411, %v379
  %v604 = vpack.c.b16 %v444, %v412
  %v605 = vpack.c.b16 %v445, %v413
  %v606 = vpack.c.b16 %v446, %v414
  %v607 = vpack.c.b16 %v447, %v415
  %v608 = vpack.c.b16 %v448, %v416
  %v609 = vpack.c.b16 %v449, %v417
  %v610 = vpack.c.b16 %v450, %v418
  %v611 = vpack.c.b16 %v451, %v419
  %v612 = vpack.c.b16 %v452, %v420
  %v613 = vpack.c.b16 %v453, %v421
  %v614 = vpack.c.b16 %v454, %v422
  %v615 = vpack.c.b16 %v455, %v423
  %v616 = vpack.c.b16 %v456, %v424
  %v617 = vpack.c.b16 %v457, %v425
  %v618 = vpack.c.b16 %v458, %v426
  %v619 = vpack.c.b16 %v459, %v427
  %v620 = vpack.c.b16 %v460, %v428
  %v621 = vpack.c.b16 %v461, %v429
  %v622 = vpack.c.b16 %v462, %v430
  %v623 = vpack.c.b16 %v463, %v431
  %v624 = vpack.c.b16 %v464, %v432
  %v625 = vpack.c.b16 %v465, %v433
  %v626 = vpack.c.b16 %v466, %v434
  %v627 = vpack.c.b16 %v467, %v435
  %v628 = vpack.c.b16 %v468, %v436
  %v629 = vpack.c.b16 %v469, %v437
  %v630 = vpack.c.b16 %v470, %v438
  %v631 = vpack.c.b16 %v471, %v439
  %v632 = vpack.c.b16 %v472, %v440
  %v633 = vpack.c.b16 %v473, %v441
  %v634 = vpack.c.b16 %v474, %v442
  %v635 = vpack.c.b16 %v475, %v443
  %v636 = vpack.c.b16 %v508, %v476
  %v637 = vpack.c.b16 %v509, %v477
  %v638 = vpack.c.b16 %v510, %v478
  %v639 = vpack.c.b16 %v511, %v479
  %v640 = vpack.c.b16 %v512, %v480
  %v641 = vpack.c.b16 %v513, %v481
  %v642 = vpack.c.b16 %v514, %v482
  %v643 = vpack.c.b16 %v515, %v483
  %v644 = vpack.c.b16 %v516, %v484
  %v645 = vpack.c.b16 %v517, %v485
  %v646 = vpack.c.b16 %v518, %v486
  %v647 = vpack.c.b16 %v519, %v487
  %v648 = vpack.c.b16 %v520, %v488
  %v649 = vpack.c.b16 %v521, %v489
  %v650 = vpack.c.b16 %v522, %v490
  %v651 = vpack.c.b16 %v523, %v491
  %v652 = vpack.c.b16 %v524, %v492
  %v653 = vpack.c.b16 %v525, %v493
  %v654 = vpack.c.b16 %v526, %v494
  %v655 = vpack.c.b16 %v527, %v495
  %v656 = vpack.c.b16 %v528, %v496
  %v657 = vpack.c.b16 %v529, %v497
  %v658 = vpack.c.b16 %v530, %v498
  %v659 = vpack.c.b16 %v531, %v499
  %v660 = vpack.c.b16 %v532, %v500
  %v661 = vpack.c.b16 %v533, %v501
  %v662 = vpack.c.b16 %v534, %v502
  %v663 = vpack.c.b16 %v535, %v503
  %v664 = vpack.c.b16 %v536, %v504
  %v665 = vpack.c.b16 %v537, %v505
  %v666 = vpack.c.b16 %v538, %v506
  %v667 = vpack.c.b16 %v539, %v507
  %vm796 = vcmask 523264
  %v798 = vsel %vm796, %v27, 0
  %800 = vmatprep.subr.bf16.mxu0 %v541
  %801 = vmatpush1.bf16.msra.mxu0 %v540
  %802 = vmatprep.subr.bf16.mxu0 %v573
  %803 = vmatpush1.bf16.msra.mxu0 %v572
  %804 = vmatprep.subr.bf16.mxu0 %v605
  %805 = vmatpush1.bf16.msra.mxu0 %v604
  %806 = vmatprep.subr.bf16.mxu0 %v637
  %807 = vmatpush1.bf16.msra.mxu0 %v636
  %808 = vmatprep.subr.bf16.mxu0 0
  %809 = vmatpush1.bf16.msra.mxu0 0
  %810 = vmatprep.subr.bf16.mxu0 0
  %811 = vmatpush1.bf16.msra.mxu0 0
  %812 = vmatprep.subr.bf16.mxu0 0
  %813 = vmatpush1.bf16.msra.mxu0 0
  %814 = vmatprep.subr.bf16.mxu0 0
  %815 = vmatpush1.bf16.msra.mxu0 0
  %816 = vmatprep.subr.bf16.mxu0 0
  %817 = vmatpush1.bf16.msra.mxu0 0
  %818 = vmatprep.subr.bf16.mxu0 0
  %819 = vmatpush1.bf16.msra.mxu0 0
  %820 = vmatprep.subr.bf16.mxu0 0
  %821 = vmatpush1.bf16.msra.mxu0 0
  %822 = vmatprep.subr.bf16.mxu0 0
  %823 = vmatpush1.bf16.msra.mxu0 0
  %824 = vmatprep.subr.bf16.mxu0 0
  %825 = vmatpush1.bf16.msra.mxu0 0
  %826 = vmatprep.subr.bf16.mxu0 0
  %827 = vmatpush1.bf16.msra.mxu0 0
  %828 = vmatprep.subr.bf16.mxu0 0
  %829 = vmatpush1.bf16.msra.mxu0 0
  %830 = vmatprep.subr.bf16.mxu0 0
  %831 = vmatpush1.bf16.msra.mxu0 0
  %832 = vmatprep.mubr.bf16.mxu0 0
  %833 = vmatmul.mubr.bf16.gmra.mrb[0].mxu0 %v798
  %v834 = vpop.f32.mrb[0].mxu0
  %v835 = vadd.f32 0.0, %v834
  %v836 = vpop.f32.mrb[0].mxu0
  %v837 = vadd.f32 0.0, %v836
  %v838 = vpop.f32.mrb[0].mxu0
  %v839 = vpop.f32.mrb[0].mxu0
  %840 = vdwg.mxu0
  %841 = vmatprep.subr.bf16.mxu0 %v543
  %842 = vmatpush1.bf16.msra.mxu0 %v542
  %843 = vmatprep.subr.bf16.mxu0 %v575
  %844 = vmatpush1.bf16.msra.mxu0 %v574
  %845 = vmatprep.subr.bf16.mxu0 %v607
  %846 = vmatpush1.bf16.msra.mxu0 %v606
  %847 = vmatprep.subr.bf16.mxu0 %v639
  %848 = vmatpush1.bf16.msra.mxu0 %v638
  %849 = vmatprep.subr.bf16.mxu0 0
  %850 = vmatpush1.bf16.msra.mxu0 0
  %851 = vmatprep.subr.bf16.mxu0 0
  %852 = vmatpush1.bf16.msra.mxu0 0
  %853 = vmatprep.subr.bf16.mxu0 0
  %854 = vmatpush1.bf16.msra.mxu0 0
  %855 = vmatprep.subr.bf16.mxu0 0
  %856 = vmatpush1.bf16.msra.mxu0 0
  %857 = vmatprep.subr.bf16.mxu0 0
  %858 = vmatpush1.bf16.msra.mxu0 0
  %859 = vmatprep.subr.bf16.mxu0 0
  %860 = vmatpush1.bf16.msra.mxu0 0
  %861 = vmatprep.subr.bf16.mxu0 0
  %862 = vmatpush1.bf16.msra.mxu0 0
  %863 = vmatprep.subr.bf16.mxu0 0
  %864 = vmatpush1.bf16.msra.mxu0 0
  %865 = vmatprep.subr.bf16.mxu0 0
  %866 = vmatpush1.bf16.msra.mxu0 0
  %867 = vmatprep.subr.bf16.mxu0 0
  %868 = vmatpush1.bf16.msra.mxu0 0
  %869 = vmatprep.subr.bf16.mxu0 0
  %870 = vmatpush1.bf16.msra.mxu0 0
  %871 = vmatprep.subr.bf16.mxu0 0
  %872 = vmatpush1.bf16.msra.mxu0 0
  %873 = vmatprep.mubr.bf16.mxu0 0
  %874 = vmatmul.mubr.bf16.gmra.mrb[0].mxu0 %v798
  %v875 = vpop.f32.mrb[0].mxu0
  %v876 = vadd.f32 0.0, %v875
  %v877 = vpop.f32.mrb[0].mxu0
  %v878 = vadd.f32 0.0, %v877
  %v879 = vpop.f32.mrb[0].mxu0
  %v880 = vpop.f32.mrb[0].mxu0
  %881 = vdwg.mxu0
  %882 = vmatprep.subr.bf16.mxu0 %v545
  %883 = vmatpush1.bf16.msra.mxu0 %v544
  %884 = vmatprep.subr.bf16.mxu0 %v577
  %885 = vmatpush1.bf16.msra.mxu0 %v576
  %886 = vmatprep.subr.bf16.mxu0 %v609
  %887 = vmatpush1.bf16.msra.mxu0 %v608
  %888 = vmatprep.subr.bf16.mxu0 %v641
  %889 = vmatpush1.bf16.msra.mxu0 %v640
  %890 = vmatprep.subr.bf16.mxu0 0
  %891 = vmatpush1.bf16.msra.mxu0 0
  %892 = vmatprep.subr.bf16.mxu0 0
  %893 = vmatpush1.bf16.msra.mxu0 0
  %894 = vmatprep.subr.bf16.mxu0 0
  %895 = vmatpush1.bf16.msra.mxu0 0
  %896 = vmatprep.subr.bf16.mxu0 0
  %897 = vmatpush1.bf16.msra.mxu0 0
  %898 = vmatprep.subr.bf16.mxu0 0
  %899 = vmatpush1.bf16.msra.mxu0 0
  %900 = vmatprep.subr.bf16.mxu0 0
  %901 = vmatpush1.bf16.msra.mxu0 0
  %902 = vmatprep.subr.bf16.mxu0 0
  %903 = vmatpush1.bf16.msra.mxu0 0
  %904 = vmatprep.subr.bf16.mxu0 0
  %905 = vmatpush1.bf16.msra.mxu0 0
  %906 = vmatprep.subr.bf16.mxu0 0
  %907 = vmatpush1.bf16.msra.mxu0 0
  %908 = vmatprep.subr.bf16.mxu0 0
  %909 = vmatpush1.bf16.msra.mxu0 0
  %910 = vmatprep.subr.bf16.mxu0 0
  %911 = vmatpush1.bf16.msra.mxu0 0
  %912 = vmatprep.subr.bf16.mxu0 0
  %913 = vmatpush1.bf16.msra.mxu0 0
  %914 = vmatprep.mubr.bf16.mxu0 0
  %915 = vmatmul.mubr.bf16.gmra.mrb[0].mxu0 %v798
  %v916 = vpop.f32.mrb[0].mxu0
  %v917 = vadd.f32 0.0, %v916
  %v918 = vpop.f32.mrb[0].mxu0
  %v919 = vadd.f32 0.0, %v918
  %v920 = vpop.f32.mrb[0].mxu0
  %v921 = vpop.f32.mrb[0].mxu0
  %922 = vdwg.mxu0
  %923 = vmatprep.subr.bf16.mxu0 %v547
  %924 = vmatpush1.bf16.msra.mxu0 %v546
  %925 = vmatprep.subr.bf16.mxu0 %v579
  %926 = vmatpush1.bf16.msra.mxu0 %v578
  %927 = vmatprep.subr.bf16.mxu0 %v611
  %928 = vmatpush1.bf16.msra.mxu0 %v610
  %929 = vmatprep.subr.bf16.mxu0 %v643
  %930 = vmatpush1.bf16.msra.mxu0 %v642
  %931 = vmatprep.subr.bf16.mxu0 0
  %932 = vmatpush1.bf16.msra.mxu0 0
  %933 = vmatprep.subr.bf16.mxu0 0
  %934 = vmatpush1.bf16.msra.mxu0 0
  %935 = vmatprep.subr.bf16.mxu0 0
  %936 = vmatpush1.bf16.msra.mxu0 0
  %937 = vmatprep.subr.bf16.mxu0 0
  %938 = vmatpush1.bf16.msra.mxu0 0
  %939 = vmatprep.subr.bf16.mxu0 0
  %940 = vmatpush1.bf16.msra.mxu0 0
  %941 = vmatprep.subr.bf16.mxu0 0
  %942 = vmatpush1.bf16.msra.mxu0 0
  %943 = vmatprep.subr.bf16.mxu0 0
  %944 = vmatpush1.bf16.msra.mxu0 0
  %945 = vmatprep.subr.bf16.mxu0 0
  %946 = vmatpush1.bf16.msra.mxu0 0
  %947 = vmatprep.subr.bf16.mxu0 0
  %948 = vmatpush1.bf16.msra.mxu0 0
  %949 = vmatprep.subr.bf16.mxu0 0
  %950 = vmatpush1.bf16.msra.mxu0 0
  %951 = vmatprep.subr.bf16.mxu0 0
  %952 = vmatpush1.bf16.msra.mxu0 0
  %953 = vmatprep.subr.bf16.mxu0 0
  %954 = vmatpush1.bf16.msra.mxu0 0
  %955 = vmatprep.mubr.bf16.mxu0 0
  %956 = vmatmul.mubr.bf16.gmra.mrb[0].mxu0 %v798
  %v957 = vpop.f32.mrb[0].mxu0
  %v958 = vadd.f32 0.0, %v957
  %v959 = vpop.f32.mrb[0].mxu0
  %v960 = vadd.f32 0.0, %v959
  %v961 = vpop.f32.mrb[0].mxu0
  %v962 = vpop.f32.mrb[0].mxu0
  %963 = vdwg.mxu0
  %964 = vmatprep.subr.bf16.mxu0 %v549
  %965 = vmatpush1.bf16.msra.mxu0 %v548
  %966 = vmatprep.subr.bf16.mxu0 %v581
  %967 = vmatpush1.bf16.msra.mxu0 %v580
  %968 = vmatprep.subr.bf16.mxu0 %v613
  %969 = vmatpush1.bf16.msra.mxu0 %v612
  %970 = vmatprep.subr.bf16.mxu0 %v645
  %971 = vmatpush1.bf16.msra.mxu0 %v644
  %972 = vmatprep.subr.bf16.mxu0 0
  %973 = vmatpush1.bf16.msra.mxu0 0
  %974 = vmatprep.subr.bf16.mxu0 0
  %975 = vmatpush1.bf16.msra.mxu0 0
  %976 = vmatprep.subr.bf16.mxu0 0
  %977 = vmatpush1.bf16.msra.mxu0 0
  %978 = vmatprep.subr.bf16.mxu0 0
  %979 = vmatpush1.bf16.msra.mxu0 0
  %980 = vmatprep.subr.bf16.mxu0 0
  %981 = vmatpush1.bf16.msra.mxu0 0
  %982 = vmatprep.subr.bf16.mxu0 0
  %983 = vmatpush1.bf16.msra.mxu0 0
  %984 = vmatprep.subr.bf16.mxu0 0
  %985 = vmatpush1.bf16.msra.mxu0 0
  %986 = vmatprep.subr.bf16.mxu0 0
  %987 = vmatpush1.bf16.msra.mxu0 0
  %988 = vmatprep.subr.bf16.mxu0 0
  %989 = vmatpush1.bf16.msra.mxu0 0
  %990 = vmatprep.subr.bf16.mxu0 0
  %991 = vmatpush1.bf16.msra.mxu0 0
  %992 = vmatprep.subr.bf16.mxu0 0
  %993 = vmatpush1.bf16.msra.mxu0 0
  %994 = vmatprep.subr.bf16.mxu0 0
  %995 = vmatpush1.bf16.msra.mxu0 0
  %996 = vmatprep.mubr.bf16.mxu0 0
  %997 = vmatmul.mubr.bf16.gmra.mrb[0].mxu0 %v798
  %v998 = vpop.f32.mrb[0].mxu0
  %v999 = vadd.f32 0.0, %v998
  %v1000 = vpop.f32.mrb[0].mxu0
  %v1001 = vadd.f32 0.0, %v1000
  %v1002 = vpop.f32.mrb[0].mxu0
  %v1003 = vpop.f32.mrb[0].mxu0
  %1004 = vdwg.mxu0
  %1005 = vmatprep.subr.bf16.mxu0 %v551
  %1006 = vmatpush1.bf16.msra.mxu0 %v550
  %1007 = vmatprep.subr.bf16.mxu0 %v583
  %1008 = vmatpush1.bf16.msra.mxu0 %v582
  %1009 = vmatprep.subr.bf16.mxu0 %v615
  %1010 = vmatpush1.bf16.msra.mxu0 %v614
  %1011 = vmatprep.subr.bf16.mxu0 %v647
  %1012 = vmatpush1.bf16.msra.mxu0 %v646
  %1013 = vmatprep.subr.bf16.mxu0 0
  %1014 = vmatpush1.bf16.msra.mxu0 0
  %1015 = vmatprep.subr.bf16.mxu0 0
  %1016 = vmatpush1.bf16.msra.mxu0 0
  %1017 = vmatprep.subr.bf16.mxu0 0
  %1018 = vmatpush1.bf16.msra.mxu0 0
  %1019 = vmatprep.subr.bf16.mxu0 0
  %1020 = vmatpush1.bf16.msra.mxu0 0
  %1021 = vmatprep.subr.bf16.mxu0 0
  %1022 = vmatpush1.bf16.msra.mxu0 0
  %1023 = vmatprep.subr.bf16.mxu0 0
  %1024 = vmatpush1.bf16.msra.mxu0 0
  %1025 = vmatprep.subr.bf16.mxu0 0
  %1026 = vmatpush1.bf16.msra.mxu0 0
  %1027 = vmatprep.subr.bf16.mxu0 0
  %1028 = vmatpush1.bf16.msra.mxu0 0
  %1029 = vmatprep.subr.bf16.mxu0 0
  %1030 = vmatpush1.bf16.msra.mxu0 0
  %1031 = vmatprep.subr.bf16.mxu0 0
  %1032 = vmatpush1.bf16.msra.mxu0 0
  %1033 = vmatprep.subr.bf16.mxu0 0
  %1034 = vmatpush1.bf16.msra.mxu0 0
  %1035 = vmatprep.subr.bf16.mxu0 0
  %1036 = vmatpush1.bf16.msra.mxu0 0
  %1037 = vmatprep.mubr.bf16.mxu0 0
  %1038 = vmatmul.mubr.bf16.gmra.mrb[0].mxu0 %v798
  %v1039 = vpop.f32.mrb[0].mxu0
  %v1040 = vadd.f32 0.0, %v1039
  %v1041 = vpop.f32.mrb[0].mxu0
  %v1042 = vadd.f32 0.0, %v1041
  %v1043 = vpop.f32.mrb[0].mxu0
  %v1044 = vpop.f32.mrb[0].mxu0
  %1045 = vdwg.mxu0
  %1046 = vmatprep.subr.bf16.mxu0 %v553
  %1047 = vmatpush1.bf16.msra.mxu0 %v552
  %1048 = vmatprep.subr.bf16.mxu0 %v585
  %1049 = vmatpush1.bf16.msra.mxu0 %v584
  %1050 = vmatprep.subr.bf16.mxu0 %v617
  %1051 = vmatpush1.bf16.msra.mxu0 %v616
  %1052 = vmatprep.subr.bf16.mxu0 %v649
  %1053 = vmatpush1.bf16.msra.mxu0 %v648
  %1054 = vmatprep.subr.bf16.mxu0 0
  %1055 = vmatpush1.bf16.msra.mxu0 0
  %1056 = vmatprep.subr.bf16.mxu0 0
  %1057 = vmatpush1.bf16.msra.mxu0 0
  %1058 = vmatprep.subr.bf16.mxu0 0
  %1059 = vmatpush1.bf16.msra.mxu0 0
  %1060 = vmatprep.subr.bf16.mxu0 0
  %1061 = vmatpush1.bf16.msra.mxu0 0
  %1062 = vmatprep.subr.bf16.mxu0 0
  %1063 = vmatpush1.bf16.msra.mxu0 0
  %1064 = vmatprep.subr.bf16.mxu0 0
  %1065 = vmatpush1.bf16.msra.mxu0 0
  %1066 = vmatprep.subr.bf16.mxu0 0
  %1067 = vmatpush1.bf16.msra.mxu0 0
  %1068 = vmatprep.subr.bf16.mxu0 0
  %1069 = vmatpush1.bf16.msra.mxu0 0
  %1070 = vmatprep.subr.bf16.mxu0 0
  %1071 = vmatpush1.bf16.msra.mxu0 0
  %1072 = vmatprep.subr.bf16.mxu0 0
  %1073 = vmatpush1.bf16.msra.mxu0 0
  %1074 = vmatprep.subr.bf16.mxu0 0
  %1075 = vmatpush1.bf16.msra.mxu0 0
  %1076 = vmatprep.subr.bf16.mxu0 0
  %1077 = vmatpush1.bf16.msra.mxu0 0
  %1078 = vmatprep.mubr.bf16.mxu0 0
  %1079 = vmatmul.mubr.bf16.gmra.mrb[0].mxu0 %v798
  %v1080 = vpop.f32.mrb[0].mxu0
  %v1081 = vadd.f32 0.0, %v1080
  %v1082 = vpop.f32.mrb[0].mxu0
  %v1083 = vadd.f32 0.0, %v1082
  %v1084 = vpop.f32.mrb[0].mxu0
  %v1085 = vpop.f32.mrb[0].mxu0
  %1086 = vdwg.mxu0
  %1087 = vmatprep.subr.bf16.mxu0 %v555
  %1088 = vmatpush1.bf16.msra.mxu0 %v554
  %1089 = vmatprep.subr.bf16.mxu0 %v587
  %1090 = vmatpush1.bf16.msra.mxu0 %v586
  %1091 = vmatprep.subr.bf16.mxu0 %v619
  %1092 = vmatpush1.bf16.msra.mxu0 %v618
  %1093 = vmatprep.subr.bf16.mxu0 %v651
  %1094 = vmatpush1.bf16.msra.mxu0 %v650
  %1095 = vmatprep.subr.bf16.mxu0 0
  %1096 = vmatpush1.bf16.msra.mxu0 0
  %1097 = vmatprep.subr.bf16.mxu0 0
  %1098 = vmatpush1.bf16.msra.mxu0 0
  %1099 = vmatprep.subr.bf16.mxu0 0
  %1100 = vmatpush1.bf16.msra.mxu0 0
  %1101 = vmatprep.subr.bf16.mxu0 0
  %1102 = vmatpush1.bf16.msra.mxu0 0
  %1103 = vmatprep.subr.bf16.mxu0 0
  %1104 = vmatpush1.bf16.msra.mxu0 0
  %1105 = vmatprep.subr.bf16.mxu0 0
  %1106 = vmatpush1.bf16.msra.mxu0 0
  %1107 = vmatprep.subr.bf16.mxu0 0
  %1108 = vmatpush1.bf16.msra.mxu0 0
  %1109 = vmatprep.subr.bf16.mxu0 0
  %1110 = vmatpush1.bf16.msra.mxu0 0
  %1111 = vmatprep.subr.bf16.mxu0 0
  %1112 = vmatpush1.bf16.msra.mxu0 0
  %1113 = vmatprep.subr.bf16.mxu0 0
  %1114 = vmatpush1.bf16.msra.mxu0 0
  %1115 = vmatprep.subr.bf16.mxu0 0
  %1116 = vmatpush1.bf16.msra.mxu0 0
  %1117 = vmatprep.subr.bf16.mxu0 0
  %1118 = vmatpush1.bf16.msra.mxu0 0
  %1119 = vmatprep.mubr.bf16.mxu0 0
  %1120 = vmatmul.mubr.bf16.gmra.mrb[0].mxu0 %v798
  %v1121 = vpop.f32.mrb[0].mxu0
  %v1122 = vadd.f32 0.0, %v1121
  %v1123 = vpop.f32.mrb[0].mxu0
  %v1124 = vadd.f32 0.0, %v1123
  %v1125 = vpop.f32.mrb[0].mxu0
  %v1126 = vpop.f32.mrb[0].mxu0
  %1127 = vdwg.mxu0
  %1128 = vmatprep.subr.bf16.mxu0 %v557
  %1129 = vmatpush1.bf16.msra.mxu0 %v556
  %1130 = vmatprep.subr.bf16.mxu0 %v589
  %1131 = vmatpush1.bf16.msra.mxu0 %v588
  %1132 = vmatprep.subr.bf16.mxu0 %v621
  %1133 = vmatpush1.bf16.msra.mxu0 %v620
  %1134 = vmatprep.subr.bf16.mxu0 %v653
  %1135 = vmatpush1.bf16.msra.mxu0 %v652
  %1136 = vmatprep.subr.bf16.mxu0 0
  %1137 = vmatpush1.bf16.msra.mxu0 0
  %1138 = vmatprep.subr.bf16.mxu0 0
  %1139 = vmatpush1.bf16.msra.mxu0 0
  %1140 = vmatprep.subr.bf16.mxu0 0
  %1141 = vmatpush1.bf16.msra.mxu0 0
  %1142 = vmatprep.subr.bf16.mxu0 0
  %1143 = vmatpush1.bf16.msra.mxu0 0
  %1144 = vmatprep.subr.bf16.mxu0 0
  %1145 = vmatpush1.bf16.msra.mxu0 0
  %1146 = vmatprep.subr.bf16.mxu0 0
  %1147 = vmatpush1.bf16.msra.mxu0 0
  %1148 = vmatprep.subr.bf16.mxu0 0
  %1149 = vmatpush1.bf16.msra.mxu0 0
  %1150 = vmatprep.subr.bf16.mxu0 0
  %1151 = vmatpush1.bf16.msra.mxu0 0
  %1152 = vmatprep.subr.bf16.mxu0 0
  %1153 = vmatpush1.bf16.msra.mxu0 0
  %1154 = vmatprep.subr.bf16.mxu0 0
  %1155 = vmatpush1.bf16.msra.mxu0 0
  %1156 = vmatprep.subr.bf16.mxu0 0
  %1157 = vmatpush1.bf16.msra.mxu0 0
  %1158 = vmatprep.subr.bf16.mxu0 0
  %1159 = vmatpush1.bf16.msra.mxu0 0
  %1160 = vmatprep.mubr.bf16.mxu0 0
  %1161 = vmatmul.mubr.bf16.gmra.mrb[0].mxu0 %v798
  %v1162 = vpop.f32.mrb[0].mxu0
  %v1163 = vadd.f32 0.0, %v1162
  %v1164 = vpop.f32.mrb[0].mxu0
  %v1165 = vadd.f32 0.0, %v1164
  %v1166 = vpop.f32.mrb[0].mxu0
  %v1167 = vpop.f32.mrb[0].mxu0
  %1168 = vdwg.mxu0
  %1169 = vmatprep.subr.bf16.mxu0 %v559
  %1170 = vmatpush1.bf16.msra.mxu0 %v558
  %1171 = vmatprep.subr.bf16.mxu0 %v591
  %1172 = vmatpush1.bf16.msra.mxu0 %v590
  %1173 = vmatprep.subr.bf16.mxu0 %v623
  %1174 = vmatpush1.bf16.msra.mxu0 %v622
  %1175 = vmatprep.subr.bf16.mxu0 %v655
  %1176 = vmatpush1.bf16.msra.mxu0 %v654
  %1177 = vmatprep.subr.bf16.mxu0 0
  %1178 = vmatpush1.bf16.msra.mxu0 0
  %1179 = vmatprep.subr.bf16.mxu0 0
  %1180 = vmatpush1.bf16.msra.mxu0 0
  %1181 = vmatprep.subr.bf16.mxu0 0
  %1182 = vmatpush1.bf16.msra.mxu0 0
  %1183 = vmatprep.subr.bf16.mxu0 0
  %1184 = vmatpush1.bf16.msra.mxu0 0
  %1185 = vmatprep.subr.bf16.mxu0 0
  %1186 = vmatpush1.bf16.msra.mxu0 0
  %1187 = vmatprep.subr.bf16.mxu0 0
  %1188 = vmatpush1.bf16.msra.mxu0 0
  %1189 = vmatprep.subr.bf16.mxu0 0
  %1190 = vmatpush1.bf16.msra.mxu0 0
  %1191 = vmatprep.subr.bf16.mxu0 0
  %1192 = vmatpush1.bf16.msra.mxu0 0
  %1193 = vmatprep.subr.bf16.mxu0 0
  %1194 = vmatpush1.bf16.msra.mxu0 0
  %1195 = vmatprep.subr.bf16.mxu0 0
  %1196 = vmatpush1.bf16.msra.mxu0 0
  %1197 = vmatprep.subr.bf16.mxu0 0
  %1198 = vmatpush1.bf16.msra.mxu0 0
  %1199 = vmatprep.subr.bf16.mxu0 0
  %1200 = vmatpush1.bf16.msra.mxu0 0
  %1201 = vmatprep.mubr.bf16.mxu0 0
  %1202 = vmatmul.mubr.bf16.gmra.mrb[0].mxu0 %v798
  %v1203 = vpop.f32.mrb[0].mxu0
  %v1204 = vadd.f32 0.0, %v1203
  %v1205 = vpop.f32.mrb[0].mxu0
  %v1206 = vadd.f32 0.0, %v1205
  %v1207 = vpop.f32.mrb[0].mxu0
  %v1208 = vpop.f32.mrb[0].mxu0
  %1209 = vdwg.mxu0
  %1210 = vmatprep.subr.bf16.mxu0 %v561
  %1211 = vmatpush1.bf16.msra.mxu0 %v560
  %1212 = vmatprep.subr.bf16.mxu0 %v593
  %1213 = vmatpush1.bf16.msra.mxu0 %v592
  %1214 = vmatprep.subr.bf16.mxu0 %v625
  %1215 = vmatpush1.bf16.msra.mxu0 %v624
  %1216 = vmatprep.subr.bf16.mxu0 %v657
  %1217 = vmatpush1.bf16.msra.mxu0 %v656
  %1218 = vmatprep.subr.bf16.mxu0 0
  %1219 = vmatpush1.bf16.msra.mxu0 0
  %1220 = vmatprep.subr.bf16.mxu0 0
  %1221 = vmatpush1.bf16.msra.mxu0 0
  %1222 = vmatprep.subr.bf16.mxu0 0
  %1223 = vmatpush1.bf16.msra.mxu0 0
  %1224 = vmatprep.subr.bf16.mxu0 0
  %1225 = vmatpush1.bf16.msra.mxu0 0
  %1226 = vmatprep.subr.bf16.mxu0 0
  %1227 = vmatpush1.bf16.msra.mxu0 0
  %1228 = vmatprep.subr.bf16.mxu0 0
  %1229 = vmatpush1.bf16.msra.mxu0 0
  %1230 = vmatprep.subr.bf16.mxu0 0
  %1231 = vmatpush1.bf16.msra.mxu0 0
  %1232 = vmatprep.subr.bf16.mxu0 0
  %1233 = vmatpush1.bf16.msra.mxu0 0
  %1234 = vmatprep.subr.bf16.mxu0 0
  %1235 = vmatpush1.bf16.msra.mxu0 0
  %1236 = vmatprep.subr.bf16.mxu0 0
  %1237 = vmatpush1.bf16.msra.mxu0 0
  %1238 = vmatprep.subr.bf16.mxu0 0
  %1239 = vmatpush1.bf16.msra.mxu0 0
  %1240 = vmatprep.subr.bf16.mxu0 0
  %1241 = vmatpush1.bf16.msra.mxu0 0
  %1242 = vmatprep.mubr.bf16.mxu0 0
  %1243 = vmatmul.mubr.bf16.gmra.mrb[0].mxu0 %v798
  %v1244 = vpop.f32.mrb[0].mxu0
  %v1245 = vadd.f32 0.0, %v1244
  %v1246 = vpop.f32.mrb[0].mxu0
  %v1247 = vadd.f32 0.0, %v1246
  %v1248 = vpop.f32.mrb[0].mxu0
  %v1249 = vpop.f32.mrb[0].mxu0
  %1250 = vdwg.mxu0
  %1251 = vmatprep.subr.bf16.mxu0 %v563
  %1252 = vmatpush1.bf16.msra.mxu0 %v562
  %1253 = vmatprep.subr.bf16.mxu0 %v595
  %1254 = vmatpush1.bf16.msra.mxu0 %v594
  %1255 = vmatprep.subr.bf16.mxu0 %v627
  %1256 = vmatpush1.bf16.msra.mxu0 %v626
  %1257 = vmatprep.subr.bf16.mxu0 %v659
  %1258 = vmatpush1.bf16.msra.mxu0 %v658
  %1259 = vmatprep.subr.bf16.mxu0 0
  %1260 = vmatpush1.bf16.msra.mxu0 0
  %1261 = vmatprep.subr.bf16.mxu0 0
  %1262 = vmatpush1.bf16.msra.mxu0 0
  %1263 = vmatprep.subr.bf16.mxu0 0
  %1264 = vmatpush1.bf16.msra.mxu0 0
  %1265 = vmatprep.subr.bf16.mxu0 0
  %1266 = vmatpush1.bf16.msra.mxu0 0
  %1267 = vmatprep.subr.bf16.mxu0 0
  %1268 = vmatpush1.bf16.msra.mxu0 0
  %1269 = vmatprep.subr.bf16.mxu0 0
  %1270 = vmatpush1.bf16.msra.mxu0 0
  %1271 = vmatprep.subr.bf16.mxu0 0
  %1272 = vmatpush1.bf16.msra.mxu0 0
  %1273 = vmatprep.subr.bf16.mxu0 0
  %1274 = vmatpush1.bf16.msra.mxu0 0
  %1275 = vmatprep.subr.bf16.mxu0 0
  %1276 = vmatpush1.bf16.msra.mxu0 0
  %1277 = vmatprep.subr.bf16.mxu0 0
  %1278 = vmatpush1.bf16.msra.mxu0 0
  %1279 = vmatprep.subr.bf16.mxu0 0
  %1280 = vmatpush1.bf16.msra.mxu0 0
  %1281 = vmatprep.subr.bf16.mxu0 0
  %1282 = vmatpush1.bf16.msra.mxu0 0
  %1283 = vmatprep.mubr.bf16.mxu0 0
  %1284 = vmatmul.mubr.bf16.gmra.mrb[0].mxu0 %v798
  %v1285 = vpop.f32.mrb[0].mxu0
  %v1286 = vadd.f32 0.0, %v1285
  %v1287 = vpop.f32.mrb[0].mxu0
  %v1288 = vadd.f32 0.0, %v1287
  %v1289 = vpop.f32.mrb[0].mxu0
  %v1290 = vpop.f32.mrb[0].mxu0
  %1291 = vdwg.mxu0
  %1292 = vmatprep.subr.bf16.mxu0 %v565
  %1293 = vmatpush1.bf16.msra.mxu0 %v564
  %1294 = vmatprep.subr.bf16.mxu0 %v597
  %1295 = vmatpush1.bf16.msra.mxu0 %v596
  %1296 = vmatprep.subr.bf16.mxu0 %v629
  %1297 = vmatpush1.bf16.msra.mxu0 %v628
  %1298 = vmatprep.subr.bf16.mxu0 %v661
  %1299 = vmatpush1.bf16.msra.mxu0 %v660
  %1300 = vmatprep.subr.bf16.mxu0 0
  %1301 = vmatpush1.bf16.msra.mxu0 0
  %1302 = vmatprep.subr.bf16.mxu0 0
  %1303 = vmatpush1.bf16.msra.mxu0 0
  %1304 = vmatprep.subr.bf16.mxu0 0
  %1305 = vmatpush1.bf16.msra.mxu0 0
  %1306 = vmatprep.subr.bf16.mxu0 0
  %1307 = vmatpush1.bf16.msra.mxu0 0
  %1308 = vmatprep.subr.bf16.mxu0 0
  %1309 = vmatpush1.bf16.msra.mxu0 0
  %1310 = vmatprep.subr.bf16.mxu0 0
  %1311 = vmatpush1.bf16.msra.mxu0 0
  %1312 = vmatprep.subr.bf16.mxu0 0
  %1313 = vmatpush1.bf16.msra.mxu0 0
  %1314 = vmatprep.subr.bf16.mxu0 0
  %1315 = vmatpush1.bf16.msra.mxu0 0
  %1316 = vmatprep.subr.bf16.mxu0 0
  %1317 = vmatpush1.bf16.msra.mxu0 0
  %1318 = vmatprep.subr.bf16.mxu0 0
  %1319 = vmatpush1.bf16.msra.mxu0 0
  %1320 = vmatprep.subr.bf16.mxu0 0
  %1321 = vmatpush1.bf16.msra.mxu0 0
  %1322 = vmatprep.subr.bf16.mxu0 0
  %1323 = vmatpush1.bf16.msra.mxu0 0
  %1324 = vmatprep.mubr.bf16.mxu0 0
  %1325 = vmatmul.mubr.bf16.gmra.mrb[0].mxu0 %v798
  %v1326 = vpop.f32.mrb[0].mxu0
  %v1327 = vadd.f32 0.0, %v1326
  %v1328 = vpop.f32.mrb[0].mxu0
  %v1329 = vadd.f32 0.0, %v1328
  %v1330 = vpop.f32.mrb[0].mxu0
  %v1331 = vpop.f32.mrb[0].mxu0
  %1332 = vdwg.mxu0
  %1333 = vmatprep.subr.bf16.mxu0 %v567
  %1334 = vmatpush1.bf16.msra.mxu0 %v566
  %1335 = vmatprep.subr.bf16.mxu0 %v599
  %1336 = vmatpush1.bf16.msra.mxu0 %v598
  %1337 = vmatprep.subr.bf16.mxu0 %v631
  %1338 = vmatpush1.bf16.msra.mxu0 %v630
  %1339 = vmatprep.subr.bf16.mxu0 %v663
  %1340 = vmatpush1.bf16.msra.mxu0 %v662
  %1341 = vmatprep.subr.bf16.mxu0 0
  %1342 = vmatpush1.bf16.msra.mxu0 0
  %1343 = vmatprep.subr.bf16.mxu0 0
  %1344 = vmatpush1.bf16.msra.mxu0 0
  %1345 = vmatprep.subr.bf16.mxu0 0
  %1346 = vmatpush1.bf16.msra.mxu0 0
  %1347 = vmatprep.subr.bf16.mxu0 0
  %1348 = vmatpush1.bf16.msra.mxu0 0
  %1349 = vmatprep.subr.bf16.mxu0 0
  %1350 = vmatpush1.bf16.msra.mxu0 0
  %1351 = vmatprep.subr.bf16.mxu0 0
  %1352 = vmatpush1.bf16.msra.mxu0 0
  %1353 = vmatprep.subr.bf16.mxu0 0
  %1354 = vmatpush1.bf16.msra.mxu0 0
  %1355 = vmatprep.subr.bf16.mxu0 0
  %1356 = vmatpush1.bf16.msra.mxu0 0
  %1357 = vmatprep.subr.bf16.mxu0 0
  %1358 = vmatpush1.bf16.msra.mxu0 0
  %1359 = vmatprep.subr.bf16.mxu0 0
  %1360 = vmatpush1.bf16.msra.mxu0 0
  %1361 = vmatprep.subr.bf16.mxu0 0
  %1362 = vmatpush1.bf16.msra.mxu0 0
  %1363 = vmatprep.subr.bf16.mxu0 0
  %1364 = vmatpush1.bf16.msra.mxu0 0
  %1365 = vmatprep.mubr.bf16.mxu0 0
  %1366 = vmatmul.mubr.bf16.gmra.mrb[0].mxu0 %v798
  %v1367 = vpop.f32.mrb[0].mxu0
  %v1368 = vadd.f32 0.0, %v1367
  %v1369 = vpop.f32.mrb[0].mxu0
  %v1370 = vadd.f32 0.0, %v1369
  %v1371 = vpop.f32.mrb[0].mxu0
  %v1372 = vpop.f32.mrb[0].mxu0
  %1373 = vdwg.mxu0
  %1374 = vmatprep.subr.bf16.mxu0 %v569
  %1375 = vmatpush1.bf16.msra.mxu0 %v568
  %1376 = vmatprep.subr.bf16.mxu0 %v601
  %1377 = vmatpush1.bf16.msra.mxu0 %v600
  %1378 = vmatprep.subr.bf16.mxu0 %v633
  %1379 = vmatpush1.bf16.msra.mxu0 %v632
  %1380 = vmatprep.subr.bf16.mxu0 %v665
  %1381 = vmatpush1.bf16.msra.mxu0 %v664
  %1382 = vmatprep.subr.bf16.mxu0 0
  %1383 = vmatpush1.bf16.msra.mxu0 0
  %1384 = vmatprep.subr.bf16.mxu0 0
  %1385 = vmatpush1.bf16.msra.mxu0 0
  %1386 = vmatprep.subr.bf16.mxu0 0
  %1387 = vmatpush1.bf16.msra.mxu0 0
  %1388 = vmatprep.subr.bf16.mxu0 0
  %1389 = vmatpush1.bf16.msra.mxu0 0
  %1390 = vmatprep.subr.bf16.mxu0 0
  %1391 = vmatpush1.bf16.msra.mxu0 0
  %1392 = vmatprep.subr.bf16.mxu0 0
  %1393 = vmatpush1.bf16.msra.mxu0 0
  %1394 = vmatprep.subr.bf16.mxu0 0
  %1395 = vmatpush1.bf16.msra.mxu0 0
  %1396 = vmatprep.subr.bf16.mxu0 0
  %1397 = vmatpush1.bf16.msra.mxu0 0
  %1398 = vmatprep.subr.bf16.mxu0 0
  %1399 = vmatpush1.bf16.msra.mxu0 0
  %1400 = vmatprep.subr.bf16.mxu0 0
  %1401 = vmatpush1.bf16.msra.mxu0 0
  %1402 = vmatprep.subr.bf16.mxu0 0
  %1403 = vmatpush1.bf16.msra.mxu0 0
  %1404 = vmatprep.subr.bf16.mxu0 0
  %1405 = vmatpush1.bf16.msra.mxu0 0
  %1406 = vmatprep.mubr.bf16.mxu0 0
  %1407 = vmatmul.mubr.bf16.gmra.mrb[0].mxu0 %v798
  %v1408 = vpop.f32.mrb[0].mxu0
  %v1409 = vadd.f32 0.0, %v1408
  %v1410 = vpop.f32.mrb[0].mxu0
  %v1411 = vadd.f32 0.0, %v1410
  %v1412 = vpop.f32.mrb[0].mxu0
  %v1413 = vpop.f32.mrb[0].mxu0
  %1414 = vdwg.mxu0
  %1415 = vmatprep.subr.bf16.mxu0 %v571
  %1416 = vmatpush1.bf16.msra.mxu0 %v570
  %1417 = vmatprep.subr.bf16.mxu0 %v603
  %1418 = vmatpush1.bf16.msra.mxu0 %v602
  %1419 = vmatprep.subr.bf16.mxu0 %v635
  %1420 = vmatpush1.bf16.msra.mxu0 %v634
  %1421 = vmatprep.subr.bf16.mxu0 %v667
  %1422 = vmatpush1.bf16.msra.mxu0 %v666
  %1423 = vmatprep.subr.bf16.mxu0 0
  %1424 = vmatpush1.bf16.msra.mxu0 0
  %1425 = vmatprep.subr.bf16.mxu0 0
  %1426 = vmatpush1.bf16.msra.mxu0 0
  %1427 = vmatprep.subr.bf16.mxu0 0
  %1428 = vmatpush1.bf16.msra.mxu0 0
  %1429 = vmatprep.subr.bf16.mxu0 0
  %1430 = vmatpush1.bf16.msra.mxu0 0
  %1431 = vmatprep.subr.bf16.mxu0 0
  %1432 = vmatpush1.bf16.msra.mxu0 0
  %1433 = vmatprep.subr.bf16.mxu0 0
  %1434 = vmatpush1.bf16.msra.mxu0 0
  %1435 = vmatprep.subr.bf16.mxu0 0
  %1436 = vmatpush1.bf16.msra.mxu0 0
  %1437 = vmatprep.subr.bf16.mxu0 0
  %1438 = vmatpush1.bf16.msra.mxu0 0
  %1439 = vmatprep.subr.bf16.mxu0 0
  %1440 = vmatpush1.bf16.msra.mxu0 0
  %1441 = vmatprep.subr.bf16.mxu0 0
  %1442 = vmatpush1.bf16.msra.mxu0 0
  %1443 = vmatprep.subr.bf16.mxu0 0
  %1444 = vmatpush1.bf16.msra.mxu0 0
  %1445 = vmatprep.subr.bf16.mxu0 0
  %1446 = vmatpush1.bf16.msra.mxu0 0
  %1447 = vmatprep.mubr.bf16.mxu0 0
  %1448 = vmatmul.mubr.bf16.gmra.mrb[0].mxu0 %v798
  %v1449 = vpop.f32.mrb[0].mxu0
  %v1450 = vadd.f32 0.0, %v1449
  %v1451 = vpop.f32.mrb[0].mxu0
  %v1452 = vadd.f32 0.0, %v1451
  %v1453 = vpop.f32.mrb[0].mxu0
  %v1454 = vpop.f32.mrb[0].mxu0
  %1455 = vdwg.mxu0
  %1456 = vst [vmem:[%s2] sm:$0xff] %v835
  %1457 = vst [vmem:[%s2 + $0x8] sm:$0xff] %v837
  %1458 = vst [vmem:[%s2 + $0x10] sm:$0xff] %v876
  %1459 = vst [vmem:[%s2 + $0x18] sm:$0xff] %v878
  %1460 = vst [vmem:[%s2 + $0x20] sm:$0xff] %v917
  %1461 = vst [vmem:[%s2 + $0x28] sm:$0xff] %v919
  %1462 = vst [vmem:[%s2 + $0x30] sm:$0xff] %v958
  %1463 = vst [vmem:[%s2 + $0x38] sm:$0xff] %v960
  %1464 = vst [vmem:[%s2 + $0x40] sm:$0xff] %v999
  %1465 = vst [vmem:[%s2 + $0x48] sm:$0xff] %v1001
  %1466 = vst [vmem:[%s2 + $0x50] sm:$0xff] %v1040
  %1467 = vst [vmem:[%s2 + $0x58] sm:$0xff] %v1042
  %1468 = vst [vmem:[%s2 + $0x60] sm:$0xff] %v1081
  %1469 = vst [vmem:[%s2 + $0x68] sm:$0xff] %v1083
  %1470 = vst [vmem:[%s2 + $0x70] sm:$0xff] %v1122
  %1471 = vst [vmem:[%s2 + $0x78] sm:$0xff] %v1124
  %1472 = vst [vmem:[%s2 + $0x80] sm:$0xff] %v1163
  %1473 = vst [vmem:[%s2 + $0x88] sm:$0xff] %v1165
  %1474 = vst [vmem:[%s2 + $0x90] sm:$0xff] %v1204
  %1475 = vst [vmem:[%s2 + $0x98] sm:$0xff] %v1206
  %1476 = vst [vmem:[%s2 + $0xa0] sm:$0xff] %v1245
  %1477 = vst [vmem:[%s2 + $0xa8] sm:$0xff] %v1247
  %1478 = vst [vmem:[%s2 + $0xb0] sm:$0xff] %v1286
  %1479 = vst [vmem:[%s2 + $0xb8] sm:$0xff] %v1288
  %1480 = vst [vmem:[%s2 + $0xc0] sm:$0xff] %v1327
  %1481 = vst [vmem:[%s2 + $0xc8] sm:$0xff] %v1329
  %1482 = vst [vmem:[%s2 + $0xd0] sm:$0xff] %v1368
  %1483 = vst [vmem:[%s2 + $0xd8] sm:$0xff] %v1370
  %1484 = vst [vmem:[%s2 + $0xe0] sm:$0xff] %v1409
  %1485 = vst [vmem:[%s2 + $0xe8] sm:$0xff] %v1411
  %1486 = vst [vmem:[%s2 + $0xf0] sm:$0xff] %v1450
  %1487 = vst [vmem:[%s2 + $0xf8] sm:$0xff] %v1452
  %v1488 = vrot.slane %v835, 4
  %v1489 = vadd.f32 %v835, %v1488
  %v1490 = vrot.slane %v1489, 2
  %v1491 = vadd.f32 %v1489, %v1490
  %v1492 = vrot.slane %v1491, 1
  %v1493 = vadd.f32 %v1491, %v1492
  %v1494 = vrot.slane %v837, 4
  %v1495 = vadd.f32 %v837, %v1494
  %v1496 = vrot.slane %v1495, 2
  %v1497 = vadd.f32 %v1495, %v1496
  %v1498 = vrot.slane %v1497, 1
  %v1499 = vadd.f32 %v1497, %v1498
  %v1500 = vrot.slane %v876, 4
  %v1501 = vadd.f32 %v876, %v1500
  %v1502 = vrot.slane %v1501, 2
  %v1503 = vadd.f32 %v1501, %v1502
  %v1504 = vrot.slane %v1503, 1
  %v1505 = vadd.f32 %v1503, %v1504
  %v1506 = vrot.slane %v878, 4
  %v1507 = vadd.f32 %v878, %v1506
  %v1508 = vrot.slane %v1507, 2
  %v1509 = vadd.f32 %v1507, %v1508
  %v1510 = vrot.slane %v1509, 1
  %v1511 = vadd.f32 %v1509, %v1510
  %v1512 = vrot.slane %v917, 4
  %v1513 = vadd.f32 %v917, %v1512
  %v1514 = vrot.slane %v1513, 2
  %v1515 = vadd.f32 %v1513, %v1514
  %v1516 = vrot.slane %v1515, 1
  %v1517 = vadd.f32 %v1515, %v1516
  %v1518 = vrot.slane %v919, 4
  %v1519 = vadd.f32 %v919, %v1518
  %v1520 = vrot.slane %v1519, 2
  %v1521 = vadd.f32 %v1519, %v1520
  %v1522 = vrot.slane %v1521, 1
  %v1523 = vadd.f32 %v1521, %v1522
  %v1524 = vrot.slane %v958, 4
  %v1525 = vadd.f32 %v958, %v1524
  %v1526 = vrot.slane %v1525, 2
  %v1527 = vadd.f32 %v1525, %v1526
  %v1528 = vrot.slane %v1527, 1
  %v1529 = vadd.f32 %v1527, %v1528
  %v1530 = vrot.slane %v960, 4
  %v1531 = vadd.f32 %v960, %v1530
  %v1532 = vrot.slane %v1531, 2
  %v1533 = vadd.f32 %v1531, %v1532
  %v1534 = vrot.slane %v1533, 1
  %v1535 = vadd.f32 %v1533, %v1534
  %v1536 = vrot.slane %v999, 4
  %v1537 = vadd.f32 %v999, %v1536
  %v1538 = vrot.slane %v1537, 2
  %v1539 = vadd.f32 %v1537, %v1538
  %v1540 = vrot.slane %v1539, 1
  %v1541 = vadd.f32 %v1539, %v1540
  %v1542 = vrot.slane %v1001, 4
  %v1543 = vadd.f32 %v1001, %v1542
  %v1544 = vrot.slane %v1543, 2
  %v1545 = vadd.f32 %v1543, %v1544
  %v1546 = vrot.slane %v1545, 1
  %v1547 = vadd.f32 %v1545, %v1546
  %v1548 = vrot.slane %v1040, 4
  %v1549 = vadd.f32 %v1040, %v1548
  %v1550 = vrot.slane %v1549, 2
  %v1551 = vadd.f32 %v1549, %v1550
  %v1552 = vrot.slane %v1551, 1
  %v1553 = vadd.f32 %v1551, %v1552
  %v1554 = vrot.slane %v1042, 4
  %v1555 = vadd.f32 %v1042, %v1554
  %v1556 = vrot.slane %v1555, 2
  %v1557 = vadd.f32 %v1555, %v1556
  %v1558 = vrot.slane %v1557, 1
  %v1559 = vadd.f32 %v1557, %v1558
  %v1560 = vrot.slane %v1081, 4
  %v1561 = vadd.f32 %v1081, %v1560
  %v1562 = vrot.slane %v1561, 2
  %v1563 = vadd.f32 %v1561, %v1562
  %v1564 = vrot.slane %v1563, 1
  %v1565 = vadd.f32 %v1563, %v1564
  %v1566 = vrot.slane %v1083, 4
  %v1567 = vadd.f32 %v1083, %v1566
  %v1568 = vrot.slane %v1567, 2
  %v1569 = vadd.f32 %v1567, %v1568
  %v1570 = vrot.slane %v1569, 1
  %v1571 = vadd.f32 %v1569, %v1570
  %v1572 = vrot.slane %v1122, 4
  %v1573 = vadd.f32 %v1122, %v1572
  %v1574 = vrot.slane %v1573, 2
  %v1575 = vadd.f32 %v1573, %v1574
  %v1576 = vrot.slane %v1575, 1
  %v1577 = vadd.f32 %v1575, %v1576
  %v1578 = vrot.slane %v1124, 4
  %v1579 = vadd.f32 %v1124, %v1578
  %v1580 = vrot.slane %v1579, 2
  %v1581 = vadd.f32 %v1579, %v1580
  %v1582 = vrot.slane %v1581, 1
  %v1583 = vadd.f32 %v1581, %v1582
  %v1584 = vrot.slane %v1163, 4
  %v1585 = vadd.f32 %v1163, %v1584
  %v1586 = vrot.slane %v1585, 2
  %v1587 = vadd.f32 %v1585, %v1586
  %v1588 = vrot.slane %v1587, 1
  %v1589 = vadd.f32 %v1587, %v1588
  %v1590 = vrot.slane %v1165, 4
  %v1591 = vadd.f32 %v1165, %v1590
  %v1592 = vrot.slane %v1591, 2
  %v1593 = vadd.f32 %v1591, %v1592
  %v1594 = vrot.slane %v1593, 1
  %v1595 = vadd.f32 %v1593, %v1594
  %v1596 = vrot.slane %v1204, 4
  %v1597 = vadd.f32 %v1204, %v1596
  %v1598 = vrot.slane %v1597, 2
  %v1599 = vadd.f32 %v1597, %v1598
  %v1600 = vrot.slane %v1599, 1
  %v1601 = vadd.f32 %v1599, %v1600
  %v1602 = vrot.slane %v1206, 4
  %v1603 = vadd.f32 %v1206, %v1602
  %v1604 = vrot.slane %v1603, 2
  %v1605 = vadd.f32 %v1603, %v1604
  %v1606 = vrot.slane %v1605, 1
  %v1607 = vadd.f32 %v1605, %v1606
  %v1608 = vrot.slane %v1245, 4
  %v1609 = vadd.f32 %v1245, %v1608
  %v1610 = vrot.slane %v1609, 2
  %v1611 = vadd.f32 %v1609, %v1610
  %v1612 = vrot.slane %v1611, 1
  %v1613 = vadd.f32 %v1611, %v1612
  %v1614 = vrot.slane %v1247, 4
  %v1615 = vadd.f32 %v1247, %v1614
  %v1616 = vrot.slane %v1615, 2
  %v1617 = vadd.f32 %v1615, %v1616
  %v1618 = vrot.slane %v1617, 1
  %v1619 = vadd.f32 %v1617, %v1618
  %v1620 = vrot.slane %v1286, 4
  %v1621 = vadd.f32 %v1286, %v1620
  %v1622 = vrot.slane %v1621, 2
  %v1623 = vadd.f32 %v1621, %v1622
  %v1624 = vrot.slane %v1623, 1
  %v1625 = vadd.f32 %v1623, %v1624
  %v1626 = vrot.slane %v1288, 4
  %v1627 = vadd.f32 %v1288, %v1626
  %v1628 = vrot.slane %v1627, 2
  %v1629 = vadd.f32 %v1627, %v1628
  %v1630 = vrot.slane %v1629, 1
  %v1631 = vadd.f32 %v1629, %v1630
  %v1632 = vrot.slane %v1327, 4
  %v1633 = vadd.f32 %v1327, %v1632
  %v1634 = vrot.slane %v1633, 2
  %v1635 = vadd.f32 %v1633, %v1634
  %v1636 = vrot.slane %v1635, 1
  %v1637 = vadd.f32 %v1635, %v1636
  %v1638 = vrot.slane %v1329, 4
  %v1639 = vadd.f32 %v1329, %v1638
  %v1640 = vrot.slane %v1639, 2
  %v1641 = vadd.f32 %v1639, %v1640
  %v1642 = vrot.slane %v1641, 1
  %v1643 = vadd.f32 %v1641, %v1642
  %v1644 = vrot.slane %v1368, 4
  %v1645 = vadd.f32 %v1368, %v1644
  %v1646 = vrot.slane %v1645, 2
  %v1647 = vadd.f32 %v1645, %v1646
  %v1648 = vrot.slane %v1647, 1
  %v1649 = vadd.f32 %v1647, %v1648
  %v1650 = vrot.slane %v1370, 4
  %v1651 = vadd.f32 %v1370, %v1650
  %v1652 = vrot.slane %v1651, 2
  %v1653 = vadd.f32 %v1651, %v1652
  %v1654 = vrot.slane %v1653, 1
  %v1655 = vadd.f32 %v1653, %v1654
  %v1656 = vrot.slane %v1409, 4
  %v1657 = vadd.f32 %v1409, %v1656
  %v1658 = vrot.slane %v1657, 2
  %v1659 = vadd.f32 %v1657, %v1658
  %v1660 = vrot.slane %v1659, 1
  %v1661 = vadd.f32 %v1659, %v1660
  %v1662 = vrot.slane %v1411, 4
  %v1663 = vadd.f32 %v1411, %v1662
  %v1664 = vrot.slane %v1663, 2
  %v1665 = vadd.f32 %v1663, %v1664
  %v1666 = vrot.slane %v1665, 1
  %v1667 = vadd.f32 %v1665, %v1666
  %v1668 = vrot.slane %v1450, 4
  %v1669 = vadd.f32 %v1450, %v1668
  %v1670 = vrot.slane %v1669, 2
  %v1671 = vadd.f32 %v1669, %v1670
  %v1672 = vrot.slane %v1671, 1
  %v1673 = vadd.f32 %v1671, %v1672
  %v1674 = vrot.slane %v1452, 4
  %v1675 = vadd.f32 %v1452, %v1674
  %v1676 = vrot.slane %v1675, 2
  %v1677 = vadd.f32 %v1675, %v1676
  %v1678 = vrot.slane %v1677, 1
  %v1679 = vadd.f32 %v1677, %v1678
  %v1680 = vmul.f32 %v835, %v835
  %v1681 = vmul.f32 %v837, %v837
  %v1682 = vmul.f32 %v876, %v876
  %v1683 = vmul.f32 %v878, %v878
  %v1684 = vmul.f32 %v917, %v917
  %v1685 = vmul.f32 %v919, %v919
  %v1686 = vmul.f32 %v958, %v958
  %v1687 = vmul.f32 %v960, %v960
  %v1688 = vmul.f32 %v999, %v999
  %v1689 = vmul.f32 %v1001, %v1001
  %v1690 = vmul.f32 %v1040, %v1040
  %v1691 = vmul.f32 %v1042, %v1042
  %v1692 = vmul.f32 %v1081, %v1081
  %v1693 = vmul.f32 %v1083, %v1083
  %v1694 = vmul.f32 %v1122, %v1122
  %v1695 = vmul.f32 %v1124, %v1124
  %v1696 = vmul.f32 %v1163, %v1163
  %v1697 = vmul.f32 %v1165, %v1165
  %v1698 = vmul.f32 %v1204, %v1204
  %v1699 = vmul.f32 %v1206, %v1206
  %v1700 = vmul.f32 %v1245, %v1245
  %v1701 = vmul.f32 %v1247, %v1247
  %v1702 = vmul.f32 %v1286, %v1286
  %v1703 = vmul.f32 %v1288, %v1288
  %v1704 = vmul.f32 %v1327, %v1327
  %v1705 = vmul.f32 %v1329, %v1329
  %v1706 = vmul.f32 %v1368, %v1368
  %v1707 = vmul.f32 %v1370, %v1370
  %v1708 = vmul.f32 %v1409, %v1409
  %v1709 = vmul.f32 %v1411, %v1411
  %v1710 = vmul.f32 %v1450, %v1450
  %v1711 = vmul.f32 %v1452, %v1452
  %v1712 = vrot.slane %v1680, 4
  %v1713 = vadd.f32 %v1680, %v1712
  %v1714 = vrot.slane %v1713, 2
  %v1715 = vadd.f32 %v1713, %v1714
  %v1716 = vrot.slane %v1715, 1
  %v1717 = vadd.f32 %v1715, %v1716
  %v1718 = vrot.slane %v1681, 4
  %v1719 = vadd.f32 %v1681, %v1718
  %v1720 = vrot.slane %v1719, 2
  %v1721 = vadd.f32 %v1719, %v1720
  %v1722 = vrot.slane %v1721, 1
  %v1723 = vadd.f32 %v1721, %v1722
  %v1724 = vrot.slane %v1682, 4
  %v1725 = vadd.f32 %v1682, %v1724
  %v1726 = vrot.slane %v1725, 2
  %v1727 = vadd.f32 %v1725, %v1726
  %v1728 = vrot.slane %v1727, 1
  %v1729 = vadd.f32 %v1727, %v1728
  %v1730 = vrot.slane %v1683, 4
  %v1731 = vadd.f32 %v1683, %v1730
  %v1732 = vrot.slane %v1731, 2
  %v1733 = vadd.f32 %v1731, %v1732
  %v1734 = vrot.slane %v1733, 1
  %v1735 = vadd.f32 %v1733, %v1734
  %v1736 = vrot.slane %v1684, 4
  %v1737 = vadd.f32 %v1684, %v1736
  %v1738 = vrot.slane %v1737, 2
  %v1739 = vadd.f32 %v1737, %v1738
  %v1740 = vrot.slane %v1739, 1
  %v1741 = vadd.f32 %v1739, %v1740
  %v1742 = vrot.slane %v1685, 4
  %v1743 = vadd.f32 %v1685, %v1742
  %v1744 = vrot.slane %v1743, 2
  %v1745 = vadd.f32 %v1743, %v1744
  %v1746 = vrot.slane %v1745, 1
  %v1747 = vadd.f32 %v1745, %v1746
  %v1748 = vrot.slane %v1686, 4
  %v1749 = vadd.f32 %v1686, %v1748
  %v1750 = vrot.slane %v1749, 2
  %v1751 = vadd.f32 %v1749, %v1750
  %v1752 = vrot.slane %v1751, 1
  %v1753 = vadd.f32 %v1751, %v1752
  %v1754 = vrot.slane %v1687, 4
  %v1755 = vadd.f32 %v1687, %v1754
  %v1756 = vrot.slane %v1755, 2
  %v1757 = vadd.f32 %v1755, %v1756
  %v1758 = vrot.slane %v1757, 1
  %v1759 = vadd.f32 %v1757, %v1758
  %v1760 = vrot.slane %v1688, 4
  %v1761 = vadd.f32 %v1688, %v1760
  %v1762 = vrot.slane %v1761, 2
  %v1763 = vadd.f32 %v1761, %v1762
  %v1764 = vrot.slane %v1763, 1
  %v1765 = vadd.f32 %v1763, %v1764
  %v1766 = vrot.slane %v1689, 4
  %v1767 = vadd.f32 %v1689, %v1766
  %v1768 = vrot.slane %v1767, 2
  %v1769 = vadd.f32 %v1767, %v1768
  %v1770 = vrot.slane %v1769, 1
  %v1771 = vadd.f32 %v1769, %v1770
  %v1772 = vrot.slane %v1690, 4
  %v1773 = vadd.f32 %v1690, %v1772
  %v1774 = vrot.slane %v1773, 2
  %v1775 = vadd.f32 %v1773, %v1774
  %v1776 = vrot.slane %v1775, 1
  %v1777 = vadd.f32 %v1775, %v1776
  %v1778 = vrot.slane %v1691, 4
  %v1779 = vadd.f32 %v1691, %v1778
  %v1780 = vrot.slane %v1779, 2
  %v1781 = vadd.f32 %v1779, %v1780
  %v1782 = vrot.slane %v1781, 1
  %v1783 = vadd.f32 %v1781, %v1782
  %v1784 = vrot.slane %v1692, 4
  %v1785 = vadd.f32 %v1692, %v1784
  %v1786 = vrot.slane %v1785, 2
  %v1787 = vadd.f32 %v1785, %v1786
  %v1788 = vrot.slane %v1787, 1
  %v1789 = vadd.f32 %v1787, %v1788
  %v1790 = vrot.slane %v1693, 4
  %v1791 = vadd.f32 %v1693, %v1790
  %v1792 = vrot.slane %v1791, 2
  %v1793 = vadd.f32 %v1791, %v1792
  %v1794 = vrot.slane %v1793, 1
  %v1795 = vadd.f32 %v1793, %v1794
  %v1796 = vrot.slane %v1694, 4
  %v1797 = vadd.f32 %v1694, %v1796
  %v1798 = vrot.slane %v1797, 2
  %v1799 = vadd.f32 %v1797, %v1798
  %v1800 = vrot.slane %v1799, 1
  %v1801 = vadd.f32 %v1799, %v1800
  %v1802 = vrot.slane %v1695, 4
  %v1803 = vadd.f32 %v1695, %v1802
  %v1804 = vrot.slane %v1803, 2
  %v1805 = vadd.f32 %v1803, %v1804
  %v1806 = vrot.slane %v1805, 1
  %v1807 = vadd.f32 %v1805, %v1806
  %v1808 = vrot.slane %v1696, 4
  %v1809 = vadd.f32 %v1696, %v1808
  %v1810 = vrot.slane %v1809, 2
  %v1811 = vadd.f32 %v1809, %v1810
  %v1812 = vrot.slane %v1811, 1
  %v1813 = vadd.f32 %v1811, %v1812
  %v1814 = vrot.slane %v1697, 4
  %v1815 = vadd.f32 %v1697, %v1814
  %v1816 = vrot.slane %v1815, 2
  %v1817 = vadd.f32 %v1815, %v1816
  %v1818 = vrot.slane %v1817, 1
  %v1819 = vadd.f32 %v1817, %v1818
  %v1820 = vrot.slane %v1698, 4
  %v1821 = vadd.f32 %v1698, %v1820
  %v1822 = vrot.slane %v1821, 2
  %v1823 = vadd.f32 %v1821, %v1822
  %v1824 = vrot.slane %v1823, 1
  %v1825 = vadd.f32 %v1823, %v1824
  %v1826 = vrot.slane %v1699, 4
  %v1827 = vadd.f32 %v1699, %v1826
  %v1828 = vrot.slane %v1827, 2
  %v1829 = vadd.f32 %v1827, %v1828
  %v1830 = vrot.slane %v1829, 1
  %v1831 = vadd.f32 %v1829, %v1830
  %v1832 = vrot.slane %v1700, 4
  %v1833 = vadd.f32 %v1700, %v1832
  %v1834 = vrot.slane %v1833, 2
  %v1835 = vadd.f32 %v1833, %v1834
  %v1836 = vrot.slane %v1835, 1
  %v1837 = vadd.f32 %v1835, %v1836
  %v1838 = vrot.slane %v1701, 4
  %v1839 = vadd.f32 %v1701, %v1838
  %v1840 = vrot.slane %v1839, 2
  %v1841 = vadd.f32 %v1839, %v1840
  %v1842 = vrot.slane %v1841, 1
  %v1843 = vadd.f32 %v1841, %v1842
  %v1844 = vrot.slane %v1702, 4
  %v1845 = vadd.f32 %v1702, %v1844
  %v1846 = vrot.slane %v1845, 2
  %v1847 = vadd.f32 %v1845, %v1846
  %v1848 = vrot.slane %v1847, 1
  %v1849 = vadd.f32 %v1847, %v1848
  %v1850 = vrot.slane %v1703, 4
  %v1851 = vadd.f32 %v1703, %v1850
  %v1852 = vrot.slane %v1851, 2
  %v1853 = vadd.f32 %v1851, %v1852
  %v1854 = vrot.slane %v1853, 1
  %v1855 = vadd.f32 %v1853, %v1854
  %v1856 = vrot.slane %v1704, 4
  %v1857 = vadd.f32 %v1704, %v1856
  %v1858 = vrot.slane %v1857, 2
  %v1859 = vadd.f32 %v1857, %v1858
  %v1860 = vrot.slane %v1859, 1
  %v1861 = vadd.f32 %v1859, %v1860
  %v1862 = vrot.slane %v1705, 4
  %v1863 = vadd.f32 %v1705, %v1862
  %v1864 = vrot.slane %v1863, 2
  %v1865 = vadd.f32 %v1863, %v1864
  %v1866 = vrot.slane %v1865, 1
  %v1867 = vadd.f32 %v1865, %v1866
  %v1868 = vrot.slane %v1706, 4
  %v1869 = vadd.f32 %v1706, %v1868
  %v1870 = vrot.slane %v1869, 2
  %v1871 = vadd.f32 %v1869, %v1870
  %v1872 = vrot.slane %v1871, 1
  %v1873 = vadd.f32 %v1871, %v1872
  %v1874 = vrot.slane %v1707, 4
  %v1875 = vadd.f32 %v1707, %v1874
  %v1876 = vrot.slane %v1875, 2
  %v1877 = vadd.f32 %v1875, %v1876
  %v1878 = vrot.slane %v1877, 1
  %v1879 = vadd.f32 %v1877, %v1878
  %v1880 = vrot.slane %v1708, 4
  %v1881 = vadd.f32 %v1708, %v1880
  %v1882 = vrot.slane %v1881, 2
  %v1883 = vadd.f32 %v1881, %v1882
  %v1884 = vrot.slane %v1883, 1
  %v1885 = vadd.f32 %v1883, %v1884
  %v1886 = vrot.slane %v1709, 4
  %v1887 = vadd.f32 %v1709, %v1886
  %v1888 = vrot.slane %v1887, 2
  %v1889 = vadd.f32 %v1887, %v1888
  %v1890 = vrot.slane %v1889, 1
  %v1891 = vadd.f32 %v1889, %v1890
  %v1892 = vrot.slane %v1710, 4
  %v1893 = vadd.f32 %v1710, %v1892
  %v1894 = vrot.slane %v1893, 2
  %v1895 = vadd.f32 %v1893, %v1894
  %v1896 = vrot.slane %v1895, 1
  %v1897 = vadd.f32 %v1895, %v1896
  %v1898 = vrot.slane %v1711, 4
  %v1899 = vadd.f32 %v1711, %v1898
  %v1900 = vrot.slane %v1899, 2
  %v1901 = vadd.f32 %v1899, %v1900
  %v1902 = vrot.slane %v1901, 1
  %v1903 = vadd.f32 %v1901, %v1902
  %vm1904 = vcmask 1040384
  %v1905 = vsel %vm1904, %v1493, %v1717
  %v1906 = vsel %vm1904, %v1499, %v1723
  %v1907 = vsel %vm1904, %v1505, %v1729
  %v1908 = vsel %vm1904, %v1511, %v1735
  %v1909 = vsel %vm1904, %v1517, %v1741
  %v1910 = vsel %vm1904, %v1523, %v1747
  %v1911 = vsel %vm1904, %v1529, %v1753
  %v1912 = vsel %vm1904, %v1535, %v1759
  %v1913 = vsel %vm1904, %v1541, %v1765
  %v1914 = vsel %vm1904, %v1547, %v1771
  %v1915 = vsel %vm1904, %v1553, %v1777
  %v1916 = vsel %vm1904, %v1559, %v1783
  %v1917 = vsel %vm1904, %v1565, %v1789
  %v1918 = vsel %vm1904, %v1571, %v1795
  %v1919 = vsel %vm1904, %v1577, %v1801
  %v1920 = vsel %vm1904, %v1583, %v1807
  %v1921 = vsel %vm1904, %v1589, %v1813
  %v1922 = vsel %vm1904, %v1595, %v1819
  %v1923 = vsel %vm1904, %v1601, %v1825
  %v1924 = vsel %vm1904, %v1607, %v1831
  %v1925 = vsel %vm1904, %v1613, %v1837
  %v1926 = vsel %vm1904, %v1619, %v1843
  %v1927 = vsel %vm1904, %v1625, %v1849
  %v1928 = vsel %vm1904, %v1631, %v1855
  %v1929 = vsel %vm1904, %v1637, %v1861
  %v1930 = vsel %vm1904, %v1643, %v1867
  %v1931 = vsel %vm1904, %v1649, %v1873
  %v1932 = vsel %vm1904, %v1655, %v1879
  %v1933 = vsel %vm1904, %v1661, %v1885
  %v1934 = vsel %vm1904, %v1667, %v1891
  %v1935 = vsel %vm1904, %v1673, %v1897
  %v1936 = vsel %vm1904, %v1679, %v1903
  %v1969 = vcombine.low %v1905, %v1906
  %v1970 = vcombine.low %v1907, %v1908
  %v1972 = vunpack.c.l.s4 1983009808
  %v1973 = vunpack.c.0.s8 %v1972
  %v1974 = vlaneseq
  %v1975 = vshrl.u32 %v1974, 7
  %v1976 = vsub.s32 %v1973, %v1975
  %v1977 = vrot.slane %v1969, %v1976
  %v1979 = vunpack.c.l.s4 1983009808
  %v1980 = vunpack.c.0.s8 %v1979
  %v1981 = vlaneseq
  %v1982 = vshrl.u32 %v1981, 7
  %v1983 = vsub.s32 %v1980, %v1982
  %v1984 = vrot.slane %v1970, %v1983
  %v1985 = vcombine.low %v1977, %v1984
  %v1986 = vcombine.low %v1909, %v1910
  %v1987 = vcombine.low %v1911, %v1912
  %v1989 = vunpack.c.l.s4 1983009808
  %v1990 = vunpack.c.0.s8 %v1989
  %v1991 = vlaneseq
  %v1992 = vshrl.u32 %v1991, 7
  %v1993 = vsub.s32 %v1990, %v1992
  %v1994 = vrot.slane %v1986, %v1993
  %v1996 = vunpack.c.l.s4 1983009808
  %v1997 = vunpack.c.0.s8 %v1996
  %v1998 = vlaneseq
  %v1999 = vshrl.u32 %v1998, 7
  %v2000 = vsub.s32 %v1997, %v1999
  %v2001 = vrot.slane %v1987, %v2000
  %v2002 = vcombine.low %v1994, %v2001
  %v2003 = vcombine.low %v1913, %v1914
  %v2004 = vcombine.low %v1915, %v1916
  %v2006 = vunpack.c.l.s4 1983009808
  %v2007 = vunpack.c.0.s8 %v2006
  %v2008 = vlaneseq
  %v2009 = vshrl.u32 %v2008, 7
  %v2010 = vsub.s32 %v2007, %v2009
  %v2011 = vrot.slane %v2003, %v2010
  %v2013 = vunpack.c.l.s4 1983009808
  %v2014 = vunpack.c.0.s8 %v2013
  %v2015 = vlaneseq
  %v2016 = vshrl.u32 %v2015, 7
  %v2017 = vsub.s32 %v2014, %v2016
  %v2018 = vrot.slane %v2004, %v2017
  %v2019 = vcombine.low %v2011, %v2018
  %v2020 = vcombine.low %v1917, %v1918
  %v2021 = vcombine.low %v1919, %v1920
  %v2023 = vunpack.c.l.s4 1983009808
  %v2024 = vunpack.c.0.s8 %v2023
  %v2025 = vlaneseq
  %v2026 = vshrl.u32 %v2025, 7
  %v2027 = vsub.s32 %v2024, %v2026
  %v2028 = vrot.slane %v2020, %v2027
  %v2030 = vunpack.c.l.s4 1983009808
  %v2031 = vunpack.c.0.s8 %v2030
  %v2032 = vlaneseq
  %v2033 = vshrl.u32 %v2032, 7
  %v2034 = vsub.s32 %v2031, %v2033
  %v2035 = vrot.slane %v2021, %v2034
  %v2036 = vcombine.low %v2028, %v2035
  %v2037 = vcombine.low %v1921, %v1922
  %v2038 = vcombine.low %v1923, %v1924
  %v2040 = vunpack.c.l.s4 1983009808
  %v2041 = vunpack.c.0.s8 %v2040
  %v2042 = vlaneseq
  %v2043 = vshrl.u32 %v2042, 7
  %v2044 = vsub.s32 %v2041, %v2043
  %v2045 = vrot.slane %v2037, %v2044
  %v2047 = vunpack.c.l.s4 1983009808
  %v2048 = vunpack.c.0.s8 %v2047
  %v2049 = vlaneseq
  %v2050 = vshrl.u32 %v2049, 7
  %v2051 = vsub.s32 %v2048, %v2050
  %v2052 = vrot.slane %v2038, %v2051
  %v2053 = vcombine.low %v2045, %v2052
  %v2054 = vcombine.low %v1925, %v1926
  %v2055 = vcombine.low %v1927, %v1928
  %v2057 = vunpack.c.l.s4 1983009808
  %v2058 = vunpack.c.0.s8 %v2057
  %v2059 = vlaneseq
  %v2060 = vshrl.u32 %v2059, 7
  %v2061 = vsub.s32 %v2058, %v2060
  %v2062 = vrot.slane %v2054, %v2061
  %v2064 = vunpack.c.l.s4 1983009808
  %v2065 = vunpack.c.0.s8 %v2064
  %v2066 = vlaneseq
  %v2067 = vshrl.u32 %v2066, 7
  %v2068 = vsub.s32 %v2065, %v2067
  %v2069 = vrot.slane %v2055, %v2068
  %v2070 = vcombine.low %v2062, %v2069
  %v2071 = vcombine.low %v1929, %v1930
  %v2072 = vcombine.low %v1931, %v1932
  %v2074 = vunpack.c.l.s4 1983009808
  %v2075 = vunpack.c.0.s8 %v2074
  %v2076 = vlaneseq
  %v2077 = vshrl.u32 %v2076, 7
  %v2078 = vsub.s32 %v2075, %v2077
  %v2079 = vrot.slane %v2071, %v2078
  %v2081 = vunpack.c.l.s4 1983009808
  %v2082 = vunpack.c.0.s8 %v2081
  %v2083 = vlaneseq
  %v2084 = vshrl.u32 %v2083, 7
  %v2085 = vsub.s32 %v2082, %v2084
  %v2086 = vrot.slane %v2072, %v2085
  %v2087 = vcombine.low %v2079, %v2086
  %v2088 = vcombine.low %v1933, %v1934
  %v2089 = vcombine.low %v1935, %v1936
  %v2091 = vunpack.c.l.s4 1983009808
  %v2092 = vunpack.c.0.s8 %v2091
  %v2093 = vlaneseq
  %v2094 = vshrl.u32 %v2093, 7
  %v2095 = vsub.s32 %v2092, %v2094
  %v2096 = vrot.slane %v2088, %v2095
  %v2098 = vunpack.c.l.s4 1983009808
  %v2099 = vunpack.c.0.s8 %v2098
  %v2100 = vlaneseq
  %v2101 = vshrl.u32 %v2100, 7
  %v2102 = vsub.s32 %v2099, %v2101
  %v2103 = vrot.slane %v2089, %v2102
  %v2104 = vcombine.low %v2096, %v2103
  %2113 = vst [vmem:[%s24] sm:$0xff] %v1985
  %2114 = vst [vmem:[%s24 + $0x8] sm:$0xff] %v2002
  %2115 = vst [vmem:[%s24 + $0x10] sm:$0xff] %v2019
  %2116 = vst [vmem:[%s24 + $0x18] sm:$0xff] %v2036
  %2117 = vst [vmem:[%s24 + $0x20] sm:$0xff] %v2053
  %2118 = vst [vmem:[%s24 + $0x28] sm:$0xff] %v2070
  %2119 = vst [vmem:[%s24 + $0x30] sm:$0xff] %v2087
  %2120 = vst [vmem:[%s24 + $0x38] sm:$0xff] %v2104
  %s2121 = sadd.s32 0, 0
  %p2122 = scmp.lt.s32.totalorder %s2121, 0
  %s2123 = scalar_select %p2122, %s2121, 0
  %s2124 = smul.addr %s2123, 32
  %s2125 = smul.addr %s2124, 2
  %s2126 = scalar_lea.vmem %s3, %s2125
  // Predicated region
  $region10: #{generator_forward.7} parent=0 // pred_check
    _
  $region11: #{generator_forward.7} parent=0 // pred_check_branch
    %2128 = sbr.rel (0) target = $region13
  $region12: #{generator_forward.7} parent=0 // pred_region
    _
  $region13: #{generator_forward.7} parent=0 // pred_fallthru
    _
  // Predicated region
  $region14: #{generator_forward.7} parent=0 // pred_check
    _
  $region15: #{generator_forward.7} parent=0 // pred_check_branch
    %2130 = sbr.rel (0) target = $region17
  $region16: #{generator_forward.7} parent=0 // pred_region
    %s2131 = sadd.s32 0, 0
  $region17: #{generator_forward.7} parent=0 // pred_fallthru
    _
  // Predicated region
  $region18: #{generator_forward.7} parent=0 // pred_check
    _
  $region19: #{generator_forward.7} parent=0 // pred_check_branch
    %2133 = sbr.rel (0) target = $region21
  $region20: #{generator_forward.7} parent=0 // pred_region
    _
  $region21: #{generator_forward.7} parent=0 // pred_fallthru
    _
  // Predicated region
  $region22: #{generator_forward.7} parent=0 // pred_check
    _
  $region23: #{generator_forward.7} parent=0 // pred_check_branch
    %2135 = sbr.rel (0) target = $region25
  $region24: #{generator_forward.7} parent=0 // pred_region
    %s2136 = sadd.s32 0, 0
    %p2137 = scmp.lt.s32.totalorder %s2136, 0
    %s2138 = scalar_select %p2137, %s2136, 0
    %s2139 = smul.addr %s2138, 32
    %s2140 = smul.addr %s2139, 2
    %s2141 = scalar_lea.vmem %s3, %s2140
  $region25: #{generator_forward.7} parent=0 // pred_fallthru
    _

// kernel: generator_forward.10
$region0: #{generator_forward.10}
  #allocation0 [shape = 'u32[]', space=smem, size = 0x4, offset = 0x4, fixed_abs, tag = 'smem constant byte address 0x4 - core index']
  #allocation1 [shape = 'u32[144,128]{1,0:T(1,128)}', space=vmem, size = 0x12000, scoped, tag = 'internal scratch']
  %s0 = inlined_call_operand.vmem [shape: f32[128,128], index: 0, kind: input, shape index: {}]
  %s1 = inlined_call_operand.vmem [shape: f32[1,128], index: 1, kind: input, shape index: {}]
  %s2 = inlined_call_operand.vmem [shape: f32[1,128], index: 2, kind: input, shape index: {}]
  %s3 = inlined_call_operand.vmem [shape: bf16[128,128], index: 3, kind: output, shape index: {}]
  %s4 = sld [smem:[#allocation0]]
  $region22: #{generator_forward.10} parent=0
    _
  %s6 = ssub.s32 1, %s4
  %s7 = scalar_select 0, %s6, %s4
  // Predicated region
  $region2: #{generator_forward.10} parent=0 // pred_check
    _
  $region3: #{generator_forward.10} parent=0 // pred_check_branch
    %9 = sbr.rel (0) target = $region5
  $region4: #{generator_forward.10} parent=0 // pred_region
    _
  $region5: #{generator_forward.10} parent=0 // pred_fallthru
    _
  // Predicated region
  $region6: #{generator_forward.10} parent=0 // pred_check
    _
  $region7: #{generator_forward.10} parent=0 // pred_check_branch
    %11 = sbr.rel (0) target = $region9
  $region8: #{generator_forward.10} parent=0 // pred_region
    _
  $region9: #{generator_forward.10} parent=0 // pred_fallthru
    _
  // Predicated region
  $region10: #{generator_forward.10} parent=0 // pred_check
    _
  $region11: #{generator_forward.10} parent=0 // pred_check_branch
    %13 = sbr.rel (0) target = $region13
  $region12: #{generator_forward.10} parent=0 // pred_region
    _
  $region13: #{generator_forward.10} parent=0 // pred_fallthru
    _
  %v14 = vld [vmem:[%s0] sm:$0xff]
  %v15 = vld [vmem:[%s0 + $0x8] sm:$0xff]
  %v16 = vld [vmem:[%s0 + $0x10] sm:$0xff]
  %v17 = vld [vmem:[%s0 + $0x18] sm:$0xff]
  %v18 = vld [vmem:[%s0 + $0x20] sm:$0xff]
  %v19 = vld [vmem:[%s0 + $0x28] sm:$0xff]
  %v20 = vld [vmem:[%s0 + $0x30] sm:$0xff]
  %v21 = vld [vmem:[%s0 + $0x38] sm:$0xff]
  %v22 = vld [vmem:[%s0 + $0x40] sm:$0xff]
  %v23 = vld [vmem:[%s0 + $0x48] sm:$0xff]
  %v24 = vld [vmem:[%s0 + $0x50] sm:$0xff]
  %v25 = vld [vmem:[%s0 + $0x58] sm:$0xff]
  %v26 = vld [vmem:[%s0 + $0x60] sm:$0xff]
  %v27 = vld [vmem:[%s0 + $0x68] sm:$0xff]
  %v28 = vld [vmem:[%s0 + $0x70] sm:$0xff]
  %v29 = vld [vmem:[%s0 + $0x78] sm:$0xff]
  %v30 = vld [vmem:[%s1] sm:$0x1]
  %v32 = vlaneseq
  %v33 = vshrl.u32 %v32, 7
  %v34 = vsub.s32 0, %v33
  %v35 = vrot.slane %v30, %v34
  %v37 = vmul.f32 %v14, %v35
  %v38 = vmul.f32 %v15, %v35
  %v39 = vmul.f32 %v16, %v35
  %v40 = vmul.f32 %v17, %v35
  %v41 = vmul.f32 %v18, %v35
  %v42 = vmul.f32 %v19, %v35
  %v43 = vmul.f32 %v20, %v35
  %v44 = vmul.f32 %v21, %v35
  %v45 = vmul.f32 %v22, %v35
  %v46 = vmul.f32 %v23, %v35
  %v47 = vmul.f32 %v24, %v35
  %v48 = vmul.f32 %v25, %v35
  %v49 = vmul.f32 %v26, %v35
  %v50 = vmul.f32 %v27, %v35
  %v51 = vmul.f32 %v28, %v35
  %v52 = vmul.f32 %v29, %v35
  %v53 = vld [vmem:[%s2] sm:$0x1]
  %v55 = vlaneseq
  %v56 = vshrl.u32 %v55, 7
  %v57 = vsub.s32 0, %v56
  %v58 = vrot.slane %v53, %v57
  %v60 = vadd.f32 %v37, %v58
  %v61 = vadd.f32 %v38, %v58
  %v62 = vadd.f32 %v39, %v58
  %v63 = vadd.f32 %v40, %v58
  %v64 = vadd.f32 %v41, %v58
  %v65 = vadd.f32 %v42, %v58
  %v66 = vadd.f32 %v43, %v58
  %v67 = vadd.f32 %v44, %v58
  %v68 = vadd.f32 %v45, %v58
  %v69 = vadd.f32 %v46, %v58
  %v70 = vadd.f32 %v47, %v58
  %v71 = vadd.f32 %v48, %v58
  %v72 = vadd.f32 %v49, %v58
  %v73 = vadd.f32 %v50, %v58
  %v74 = vadd.f32 %v51, %v58
  %v75 = vadd.f32 %v52, %v58
  %v76 = vmax.f32 %v60, 0.0
  %v77 = vmax.f32 %v61, 0.0
  %v78 = vmax.f32 %v62, 0.0
  %v79 = vmax.f32 %v63, 0.0
  %v80 = vmax.f32 %v64, 0.0
  %v81 = vmax.f32 %v65, 0.0
  %v82 = vmax.f32 %v66, 0.0
  %v83 = vmax.f32 %v67, 0.0
  %v84 = vmax.f32 %v68, 0.0
  %v85 = vmax.f32 %v69, 0.0
  %v86 = vmax.f32 %v70, 0.0
  %v87 = vmax.f32 %v71, 0.0
  %v88 = vmax.f32 %v72, 0.0
  %v89 = vmax.f32 %v73, 0.0
  %v90 = vmax.f32 %v74, 0.0
  %v91 = vmax.f32 %v75, 0.0
  %v92 = vpack.c.bf16 %v77, %v76
  %v93 = vpack.c.bf16 %v79, %v78
  %v94 = vpack.c.bf16 %v81, %v80
  %v95 = vpack.c.bf16 %v83, %v82
  %v96 = vpack.c.bf16 %v85, %v84
  %v97 = vpack.c.bf16 %v87, %v86
  %v98 = vpack.c.bf16 %v89, %v88
  %v99 = vpack.c.bf16 %v91, %v90
  %v108 = vunpack.c.l.b16 %v92
  %v109 = vunpack.c.h.b16 %v92
  %v110 = vunpack.c.l.b16 %v93
  %v111 = vunpack.c.h.b16 %v93
  %v112 = vunpack.c.l.b16 %v94
  %v113 = vunpack.c.h.b16 %v94
  %v114 = vunpack.c.l.b16 %v95
  %v115 = vunpack.c.h.b16 %v95
  %v116 = vunpack.c.l.b16 %v96
  %v117 = vunpack.c.h.b16 %v96
  %v118 = vunpack.c.l.b16 %v97
  %v119 = vunpack.c.h.b16 %v97
  %v120 = vunpack.c.l.b16 %v98
  %v121 = vunpack.c.h.b16 %v98
  %v122 = vunpack.c.l.b16 %v99
  %v123 = vunpack.c.h.b16 %v99
  %v124 = vpack.c.b16 %v108, %v108
  %v125 = vpack.c.b16 %v109, %v109
  %v126 = vpack.c.b16 %v110, %v110
  %v127 = vpack.c.b16 %v111, %v111
  %v128 = vpack.c.b16 %v112, %v112
  %v129 = vpack.c.b16 %v113, %v113
  %v130 = vpack.c.b16 %v114, %v114
  %v131 = vpack.c.b16 %v115, %v115
  %v132 = vpack.c.b16 %v116, %v116
  %v133 = vpack.c.b16 %v117, %v117
  %v134 = vpack.c.b16 %v118, %v118
  %v135 = vpack.c.b16 %v119, %v119
  %v136 = vpack.c.b16 %v120, %v120
  %v137 = vpack.c.b16 %v121, %v121
  %v138 = vpack.c.b16 %v122, %v122
  %v139 = vpack.c.b16 %v123, %v123
  %156 = vst [vmem:[%s3] sm:$0xf] %v124
  %157 = vst [vmem:[%s3 + $0x4] sm:$0xf] %v125
  %158 = vst [vmem:[%s3 + $0x8] sm:$0xf] %v126
  %159 = vst [vmem:[%s3 + $0xc] sm:$0xf] %v127
  %160 = vst [vmem:[%s3 + $0x10] sm:$0xf] %v128
  %161 = vst [vmem:[%s3 + $0x14] sm:$0xf] %v129
  %162 = vst [vmem:[%s3 + $0x18] sm:$0xf] %v130
  %163 = vst [vmem:[%s3 + $0x1c] sm:$0xf] %v131
  %164 = vst [vmem:[%s3 + $0x20] sm:$0xf] %v132
  %165 = vst [vmem:[%s3 + $0x24] sm:$0xf] %v133
  %166 = vst [vmem:[%s3 + $0x28] sm:$0xf] %v134
  %167 = vst [vmem:[%s3 + $0x2c] sm:$0xf] %v135
  %168 = vst [vmem:[%s3 + $0x30] sm:$0xf] %v136
  %169 = vst [vmem:[%s3 + $0x34] sm:$0xf] %v137
  %170 = vst [vmem:[%s3 + $0x38] sm:$0xf] %v138
  %171 = vst [vmem:[%s3 + $0x3c] sm:$0xf] %v139
  // Predicated region
  $region14: #{generator_forward.10} parent=0 // pred_check
    _
  $region15: #{generator_forward.10} parent=0 // pred_check_branch
    %173 = sbr.rel (0) target = $region17
  $region16: #{generator_forward.10} parent=0 // pred_region
    _
  $region17: #{generator_forward.10} parent=0 // pred_fallthru
    _
  // Predicated region
  $region18: #{generator_forward.10} parent=0 // pred_check
    _
  $region19: #{generator_forward.10} parent=0 // pred_check_branch
    %175 = sbr.rel (0) target = $region21
  $region20: #{generator_forward.10} parent=0 // pred_region
    _
  $region21: #{generator_forward.10} parent=0 // pred_fallthru
    _

// kernel: generator_forward.9
$region0: #{generator_forward.9}
  #allocation0 [shape = 'u32[]', space=smem, size = 0x4, offset = 0x4, fixed_abs, tag = 'smem constant byte address 0x4 - core index']
  #allocation1 [shape = 'u32[144,128]{1,0:T(1,128)}', space=vmem, size = 0x12000, scoped, tag = 'internal scratch']
  %s0 = inlined_call_operand.vmem [shape: bf16[4,32,1024], index: 0, kind: input, shape index: {}]
  %s1 = inlined_call_operand.vmem [shape: bf16[4,1024,128], index: 1, kind: input, shape index: {}]
  %s2 = inlined_call_operand.vmem [shape: f32[4,32,128], index: 2, kind: output, shape index: {0}]
  %s3 = inlined_call_operand.vmem [shape: f32[4,2,128], index: 3, kind: output, shape index: {1}]
  %4 = xla_tuple %s2, %s3
  %s5 = sld [smem:[#allocation0]]
  $region49: #{generator_forward.9} parent=0
    _
  %s7 = ssub.s32 1, %s5
  %s8 = scalar_select 0, %s7, %s5
  loop: start=0, step=1, limit=6
  $region2: #{generator_forward.9} parent=0 // loop_pre_header
    _
  $region3: #{generator_forward.9} parent=0 // loop_header
    %s10 = sphi 0, %s14
    %p11 = scmp.ge.s32.totalorder %s10, 6
    %s17 = sphi 0, %s29
    %s18 = sphi 0, %s25
    %s19 = sphi 0, %s17
    %s20 = sphi 0, %s18
    %s21 = sphi 0, %s19
    %s22 = sphi 0, %s20
    %s34 = sphi 0, %s36
    %s37 = sphi 0, %s34
    %s38 = sphi 0, %s37
    %s54 = sphi 0, %s38
    %s60 = sphi 0, %s62
    %s63 = sphi 0, %s60
    %s64 = sphi 0, %s63
    %s80 = sphi 0, %s64
    %s88 = sphi 0, %s90
    %s91 = sphi 0, %s88
    %s92 = sphi 0, %s91
    %s108 = sphi 0, %s92
    %s116 = sphi 0, %s118
    %s119 = sphi 0, %s116
    %s120 = sphi 0, %s119
    %s136 = sphi 0, %s120
  $region4: #{generator_forward.9} parent=0 // loop_header_branch
    %13 = sbr.rel (%p11) target = $region8
  $region5: #{generator_forward.9} parent=0 // loop_body
    %s15 = ssub.s32 %s10, 1
    %s16 = ssub.s32 %s10, 2
    %s23 = sadd.s32 1, %s18
    %p24 = scmp.ge.s32.totalorder %s23, 1
    %s25 = scalar_select %p24, 0, %s23
    %s26 = sadd.s32 1, %s17
    %s27 = scalar_select %p24, %s26, %s17
    %p28 = scmp.ge.s32.totalorder %s27, 4
    %s29 = scalar_select %p28, 0, %s27
    %s30 = ssub.s32 %s17, %s29
    %s31 = ssub.s32 %s18, %s25
    %s32 = sor.u32 %s30, %s31
    %p33 = scmp.eq.s32.totalorder %s32, 0
    %s35 = sadd.s32 %s34, 1
    %s36 = scalar_select %p33, %s34, %s35
    %p39 = pneg %p33
    %p40 = scmp.eq.s32.totalorder %s10, 3
    %p41 = por %p39, %p40
    %p42 = scmp.ne.s32.totalorder %s34, %s37
    %p43 = scmp.eq.s32.totalorder %s10, 0
    %p44 = por %p42, %p43
    %p45 = scmp.ne.s32.totalorder %s34, %s37
    %p46 = scmp.eq.s32.totalorder %s15, 3
    %p47 = por %p45, %p46
    %p48 = scmp.ne.s32.totalorder %s37, %s38
    %p49 = scmp.eq.s32.totalorder %s15, 0
    %p50 = por %p48, %p49
    %p51 = scmp.ne.s32.totalorder %s37, %s38
    %p52 = scmp.eq.s32.totalorder %s16, 3
    %p53 = por %p51, %p52
    %p55 = scmp.ne.s32.totalorder %s38, %s54
    %p56 = scmp.eq.s32.totalorder %s16, 0
    %p57 = por %p55, %p56
    %s58 = ssub.s32 %s17, %s29
    %p59 = scmp.eq.s32.totalorder %s58, 0
    %s61 = sadd.s32 %s60, 1
    %s62 = scalar_select %p59, %s60, %s61
    %p65 = pneg %p59
    %p66 = scmp.eq.s32.totalorder %s10, 3
    %p67 = por %p65, %p66
    %p68 = scmp.ne.s32.totalorder %s60, %s63
    %p69 = scmp.eq.s32.totalorder %s10, 0
    %p70 = por %p68, %p69
    %p71 = scmp.ne.s32.totalorder %s60, %s63
    %p72 = scmp.eq.s32.totalorder %s15, 3
    %p73 = por %p71, %p72
    %p74 = scmp.ne.s32.totalorder %s63, %s64
    %p75 = scmp.eq.s32.totalorder %s15, 0
    %p76 = por %p74, %p75
    %p77 = scmp.ne.s32.totalorder %s63, %s64
    %p78 = scmp.eq.s32.totalorder %s16, 3
    %p79 = por %p77, %p78
    %p81 = scmp.ne.s32.totalorder %s64, %s80
    %p82 = scmp.eq.s32.totalorder %s16, 0
    %p83 = por %p81, %p82
    %s84 = ssub.s32 %s17, %s29
    %s85 = ssub.s32 %s18, %s25
    %s86 = sor.u32 %s84, %s85
    %p87 = scmp.eq.s32.totalorder %s86, 0
    %s89 = sadd.s32 %s88, 1
    %s90 = scalar_select %p87, %s88, %s89
    %p93 = pneg %p87
    %p94 = scmp.eq.s32.totalorder %s10, 3
    %p95 = por %p93, %p94
    %p96 = scmp.ne.s32.totalorder %s88, %s91
    %p97 = scmp.eq.s32.totalorder %s10, 0
    %p98 = por %p96, %p97
    %p99 = scmp.ne.s32.totalorder %s88, %s91
    %p100 = scmp.eq.s32.totalorder %s15, 3
    %p101 = por %p99, %p100
    %p102 = scmp.ne.s32.totalorder %s91, %s92
    %p103 = scmp.eq.s32.totalorder %s15, 0
    %p104 = por %p102, %p103
    %p105 = scmp.ne.s32.totalorder %s91, %s92
    %p106 = scmp.eq.s32.totalorder %s16, 3
    %p107 = por %p105, %p106
    %p109 = scmp.ne.s32.totalorder %s92, %s108
    %p110 = scmp.eq.s32.totalorder %s16, 0
    %p111 = por %p109, %p110
    %s112 = sadd.s32 %s17, %s18
    %s113 = sadd.s32 %s29, %s25
    %s114 = ssub.s32 %s112, %s113
    %p115 = scmp.eq.s32.totalorder %s114, 0
    %s117 = sadd.s32 %s116, 1
    %s118 = scalar_select %p115, %s116, %s117
    %p121 = pneg %p115
    %p122 = scmp.eq.s32.totalorder %s10, 3
    %p123 = por %p121, %p122
    %p124 = scmp.ne.s32.totalorder %s116, %s119
    %p125 = scmp.eq.s32.totalorder %s10, 0
    %p126 = por %p124, %p125
    %p127 = scmp.ne.s32.totalorder %s116, %s119
    %p128 = scmp.eq.s32.totalorder %s15, 3
    %p129 = por %p127, %p128
    %p130 = scmp.ne.s32.totalorder %s119, %s120
    %p131 = scmp.eq.s32.totalorder %s15, 0
    %p132 = por %p130, %p131
    %p133 = scmp.ne.s32.totalorder %s119, %s120
    %p134 = scmp.eq.s32.totalorder %s16, 3
    %p135 = por %p133, %p134
    %p137 = scmp.ne.s32.totalorder %s120, %s136
    %p138 = scmp.eq.s32.totalorder %s16, 0
    %p139 = por %p137, %p138
    %p140 = scmp.le.s32.totalorder 1, %s10
    %p141 = scmp.lt.s32.totalorder %s10, 5
    %p142 = pnand %p140, %p141
    %p143 = pneg %p142
    // Predicated region
    $region9: #{generator_forward.9} parent=5 // pred_check
      _
    $region10: #{generator_forward.9} parent=5 // pred_check_branch
      %145 = sbr.rel (%p142) target = $region12
    $region11: #{generator_forward.9} parent=5 // pred_region
      %s146 = ssub.s32 %s10, 1
    $region12: #{generator_forward.9} parent=5 // pred_fallthru
      _
    %p147 = scmp.lt.s32.totalorder %s10, 4
    // Predicated region
    $region13: #{generator_forward.9} parent=5 // pred_check
      %p148 = pneg %p147
    $region14: #{generator_forward.9} parent=5 // pred_check_branch
      %150 = sbr.rel (%p148) target = $region16
    $region15: #{generator_forward.9} parent=5 // pred_region
      // Predicated region
      $region17: #{generator_forward.9} parent=15 // pred_check
        %p151 = pneg %p44
      $region18: #{generator_forward.9} parent=15 // pred_check_branch
        %153 = sbr.rel (%p151) target = $region20
      $region19: #{generator_forward.9} parent=15 // pred_region
        %s154 = smul.u32 4, %s18
        %p155 = scmp.lt.s32.totalorder %s17, 3
        %s156 = scalar_select %p155, %s17, 3
        %p157 = scmp.lt.s32.totalorder %s154, 3
        %s158 = scalar_select %p157, %s154, 3
        %s159 = smul.addr %s158, 8
        %s160 = smul.addr %s156, 32
        %s161 = sadd.s32 %s159, %s160
        %s162 = smul.addr %s161, 4
        %s163 = scalar_lea.vmem %s0, %s162
        %s164 = smul.u32 4, %s18
      $region20: #{generator_forward.9} parent=15 // pred_fallthru
        _
      // Predicated region
      $region21: #{generator_forward.9} parent=15 // pred_check
        %p165 = pneg %p70
      $region22: #{generator_forward.9} parent=15 // pred_check_branch
        %167 = sbr.rel (%p165) target = $region24
      $region23: #{generator_forward.9} parent=15 // pred_region
        %p168 = scmp.lt.s32.totalorder %s17, 3
        %s169 = scalar_select %p168, %s17, 3
        %s170 = smul.addr %s169, 128
        %s171 = smul.addr %s170, 4
        %s172 = scalar_lea.vmem %s1, %s171
      $region24: #{generator_forward.9} parent=15 // pred_fallthru
        _
    $region16: #{generator_forward.9} parent=5 // pred_fallthru
      _
    %p173 = scmp.le.s32.totalorder 1, %s10
    %p174 = scmp.lt.s32.totalorder %s10, 5
    %p175 = pnand %p173, %p174
    %p176 = pneg %p175
    // Predicated region
    $region25: #{generator_forward.9} parent=5 // pred_check
      _
    $region26: #{generator_forward.9} parent=5 // pred_check_branch
      %178 = sbr.rel (%p175) target = $region28
    $region27: #{generator_forward.9} parent=5 // pred_region
      %s179 = ssub.s32 %s10, 1
      %s180 = smul.u32 4, %s20
      %p181 = scmp.lt.s32.totalorder %s19, 3
      %s182 = scalar_select %p181, %s19, 3
      %p183 = scmp.lt.s32.totalorder %s180, 3
      %s184 = scalar_select %p183, %s180, 3
      %s185 = smul.addr %s184, 8
      %s186 = smul.addr %s182, 32
      %s187 = sadd.s32 %s185, %s186
      %s188 = smul.addr %s187, 4
      %s189 = scalar_lea.vmem %s0, %s188
      %p190 = pneg %p50
      %p191 = pneg %p47
      %p192 = scmp.lt.s32.totalorder %s19, 3
      %s193 = scalar_select %p192, %s19, 3
      %s194 = smul.addr %s193, 128
      %s195 = smul.addr %s194, 4
      %s196 = scalar_lea.vmem %s1, %s195
      %p197 = pneg %p76
      %p198 = pneg %p73
      %p199 = pneg %p104
      %p200 = pneg %p101
      %s201 = smul.u32 4, %s20
      %p202 = scmp.lt.s32.totalorder %s19, 3
      %s203 = scalar_select %p202, %s19, 3
      %p204 = scmp.lt.s32.totalorder %s201, 3
      %s205 = scalar_select %p204, %s201, 3
      %s206 = smul.addr %s203, 4
      %s207 = sadd.s32 %s205, %s206
      %s208 = smul.addr %s207, 8
      %s209 = scalar_lea.vmem %s2, %s208
      %p210 = pneg %p132
      %p211 = pneg %p129
      %s212 = sadd.s32 %s19, %s20
      %p213 = scmp.lt.s32.totalorder %s212, 3
      %s214 = scalar_select %p213, %s212, 3
      %s215 = smul.addr %s214, 2
      %s216 = scalar_lea.vmem %s3, %s215
      %s217 = smul.u32 4, %s20
      %p218 = scmp.lt.s32.totalorder %s19, 3
      %s219 = scalar_select %p218, %s19, 3
      %p220 = scmp.lt.s32.totalorder %s217, 3
      %s221 = scalar_select %p220, %s217, 3
      %s222 = smul.addr %s221, 8
      %s223 = smul.addr %s219, 32
      %s224 = sadd.s32 %s222, %s223
      %s225 = smul.addr %s224, 4
      %s226 = scalar_lea.vmem %s0, %s225
      %s227 = smul.u32 4, %s20
      %p228 = scmp.lt.s32.totalorder %s19, 3
      %s229 = scalar_select %p228, %s19, 3
      %s230 = smul.addr %s229, 128
      %s231 = smul.addr %s230, 4
      %s232 = scalar_lea.vmem %s1, %s231
      %s233 = smul.u32 4, %s20
      %p234 = scmp.lt.s32.totalorder %s19, 3
      %s235 = scalar_select %p234, %s19, 3
      %p236 = scmp.lt.s32.totalorder %s233, 3
      %s237 = scalar_select %p236, %s233, 3
      %s238 = smul.addr %s235, 4
      %s239 = sadd.s32 %s237, %s238
      %s240 = smul.addr %s239, 8
      %s241 = scalar_lea.vmem %s2, %s240
      %s242 = smul.u32 4, %s20
      %s243 = sadd.s32 %s19, %s20
      %p244 = scmp.lt.s32.totalorder %s243, 3
      %s245 = scalar_select %p244, %s243, 3
      %s246 = smul.addr %s245, 2
      %s247 = scalar_lea.vmem %s3, %s246
      %s248 = sadd.s32 %s19, %s20
      %v250 = vld [vmem:[%s226] sm:$0xff]
      %v251 = vld [vmem:[%s226 + $0x8] sm:$0xff]
      %v252 = vld [vmem:[%s226 + $0x10] sm:$0xff]
      %v253 = vld [vmem:[%s226 + $0x18] sm:$0xff]
      %v254 = vld [vmem:[%s226 + $0x20] sm:$0xff]
      %v255 = vld [vmem:[%s226 + $0x28] sm:$0xff]
      %v256 = vld [vmem:[%s226 + $0x30] sm:$0xff]
      %v257 = vld [vmem:[%s226 + $0x38] sm:$0xff]
      %v258 = vld [vmem:[%s226 + $0x40] sm:$0xff]
      %v259 = vld [vmem:[%s226 + $0x48] sm:$0xff]
      %v260 = vld [vmem:[%s226 + $0x50] sm:$0xff]
      %v261 = vld [vmem:[%s226 + $0x58] sm:$0xff]
      %v262 = vld [vmem:[%s226 + $0x60] sm:$0xff]
      %v263 = vld [vmem:[%s226 + $0x68] sm:$0xff]
      %v264 = vld [vmem:[%s226 + $0x70] sm:$0xff]
      %v265 = vld [vmem:[%s226 + $0x78] sm:$0xff]
      %v266 = vld [vmem:[%s232] sm:$0xf]
      %v267 = vld [vmem:[%s232 + $0x4] sm:$0xf]
      %v268 = vld [vmem:[%s232 + $0x8] sm:$0xf]
      %v269 = vld [vmem:[%s232 + $0xc] sm:$0xf]
      %v270 = vld [vmem:[%s232 + $0x10] sm:$0xf]
      %v271 = vld [vmem:[%s232 + $0x14] sm:$0xf]
      %v272 = vld [vmem:[%s232 + $0x18] sm:$0xf]
      %v273 = vld [vmem:[%s232 + $0x1c] sm:$0xf]
      %v274 = vld [vmem:[%s232 + $0x20] sm:$0xf]
      %v275 = vld [vmem:[%s232 + $0x24] sm:$0xf]
      %v276 = vld [vmem:[%s232 + $0x28] sm:$0xf]
      %v277 = vld [vmem:[%s232 + $0x2c] sm:$0xf]
      %v278 = vld [vmem:[%s232 + $0x30] sm:$0xf]
      %v279 = vld [vmem:[%s232 + $0x34] sm:$0xf]
      %v280 = vld [vmem:[%s232 + $0x38] sm:$0xf]
      %v281 = vld [vmem:[%s232 + $0x3c] sm:$0xf]
      %v282 = vld [vmem:[%s232 + $0x40] sm:$0xf]
      %v283 = vld [vmem:[%s232 + $0x44] sm:$0xf]
      %v284 = vld [vmem:[%s232 + $0x48] sm:$0xf]
      %v285 = vld [vmem:[%s232 + $0x4c] sm:$0xf]
      %v286 = vld [vmem:[%s232 + $0x50] sm:$0xf]
      %v287 = vld [vmem:[%s232 + $0x54] sm:$0xf]
      %v288 = vld [vmem:[%s232 + $0x58] sm:$0xf]
      %v289 = vld [vmem:[%s232 + $0x5c] sm:$0xf]
      %v290 = vld [vmem:[%s232 + $0x60] sm:$0xf]
      %v291 = vld [vmem:[%s232 + $0x64] sm:$0xf]
      %v292 = vld [vmem:[%s232 + $0x68] sm:$0xf]
      %v293 = vld [vmem:[%s232 + $0x6c] sm:$0xf]
      %v294 = vld [vmem:[%s232 + $0x70] sm:$0xf]
      %v295 = vld [vmem:[%s232 + $0x74] sm:$0xf]
      %v296 = vld [vmem:[%s232 + $0x78] sm:$0xf]
      %v297 = vld [vmem:[%s232 + $0x7c] sm:$0xf]
      %v298 = vld [vmem:[%s232 + $0x80] sm:$0xf]
      %v299 = vld [vmem:[%s232 + $0x84] sm:$0xf]
      %v300 = vld [vmem:[%s232 + $0x88] sm:$0xf]
      %v301 = vld [vmem:[%s232 + $0x8c] sm:$0xf]
      %v302 = vld [vmem:[%s232 + $0x90] sm:$0xf]
      %v303 = vld [vmem:[%s232 + $0x94] sm:$0xf]
      %v304 = vld [vmem:[%s232 + $0x98] sm:$0xf]
      %v305 = vld [vmem:[%s232 + $0x9c] sm:$0xf]
      %v306 = vld [vmem:[%s232 + $0xa0] sm:$0xf]
      %v307 = vld [vmem:[%s232 + $0xa4] sm:$0xf]
      %v308 = vld [vmem:[%s232 + $0xa8] sm:$0xf]
      %v309 = vld [vmem:[%s232 + $0xac] sm:$0xf]
      %v310 = vld [vmem:[%s232 + $0xb0] sm:$0xf]
      %v311 = vld [vmem:[%s232 + $0xb4] sm:$0xf]
      %v312 = vld [vmem:[%s232 + $0xb8] sm:$0xf]
      %v313 = vld [vmem:[%s232 + $0xbc] sm:$0xf]
      %v314 = vld [vmem:[%s232 + $0xc0] sm:$0xf]
      %v315 = vld [vmem:[%s232 + $0xc4] sm:$0xf]
      %v316 = vld [vmem:[%s232 + $0xc8] sm:$0xf]
      %v317 = vld [vmem:[%s232 + $0xcc] sm:$0xf]
      %v318 = vld [vmem:[%s232 + $0xd0] sm:$0xf]
      %v319 = vld [vmem:[%s232 + $0xd4] sm:$0xf]
      %v320 = vld [vmem:[%s232 + $0xd8] sm:$0xf]
      %v321 = vld [vmem:[%s232 + $0xdc] sm:$0xf]
      %v322 = vld [vmem:[%s232 + $0xe0] sm:$0xf]
      %v323 = vld [vmem:[%s232 + $0xe4] sm:$0xf]
      %v324 = vld [vmem:[%s232 + $0xe8] sm:$0xf]
      %v325 = vld [vmem:[%s232 + $0xec] sm:$0xf]
      %v326 = vld [vmem:[%s232 + $0xf0] sm:$0xf]
      %v327 = vld [vmem:[%s232 + $0xf4] sm:$0xf]
      %v328 = vld [vmem:[%s232 + $0xf8] sm:$0xf]
      %v329 = vld [vmem:[%s232 + $0xfc] sm:$0xf]
      %v330 = vld [vmem:[%s232 + $0x100] sm:$0xf]
      %v331 = vld [vmem:[%s232 + $0x104] sm:$0xf]
      %v332 = vld [vmem:[%s232 + $0x108] sm:$0xf]
      %v333 = vld [vmem:[%s232 + $0x10c] sm:$0xf]
      %v334 = vld [vmem:[%s232 + $0x110] sm:$0xf]
      %v335 = vld [vmem:[%s232 + $0x114] sm:$0xf]
      %v336 = vld [vmem:[%s232 + $0x118] sm:$0xf]
      %v337 = vld [vmem:[%s232 + $0x11c] sm:$0xf]
      %v338 = vld [vmem:[%s232 + $0x120] sm:$0xf]
      %v339 = vld [vmem:[%s232 + $0x124] sm:$0xf]
      %v340 = vld [vmem:[%s232 + $0x128] sm:$0xf]
      %v341 = vld [vmem:[%s232 + $0x12c] sm:$0xf]
      %v342 = vld [vmem:[%s232 + $0x130] sm:$0xf]
      %v343 = vld [vmem:[%s232 + $0x134] sm:$0xf]
      %v344 = vld [vmem:[%s232 + $0x138] sm:$0xf]
      %v345 = vld [vmem:[%s232 + $0x13c] sm:$0xf]
      %v346 = vld [vmem:[%s232 + $0x140] sm:$0xf]
      %v347 = vld [vmem:[%s232 + $0x144] sm:$0xf]
      %v348 = vld [vmem:[%s232 + $0x148] sm:$0xf]
      %v349 = vld [vmem:[%s232 + $0x14c] sm:$0xf]
      %v350 = vld [vmem:[%s232 + $0x150] sm:$0xf]
      %v351 = vld [vmem:[%s232 + $0x154] sm:$0xf]
      %v352 = vld [vmem:[%s232 + $0x158] sm:$0xf]
      %v353 = vld [vmem:[%s232 + $0x15c] sm:$0xf]
      %v354 = vld [vmem:[%s232 + $0x160] sm:$0xf]
      %v355 = vld [vmem:[%s232 + $0x164] sm:$0xf]
      %v356 = vld [vmem:[%s232 + $0x168] sm:$0xf]
      %v357 = vld [vmem:[%s232 + $0x16c] sm:$0xf]
      %v358 = vld [vmem:[%s232 + $0x170] sm:$0xf]
      %v359 = vld [vmem:[%s232 + $0x174] sm:$0xf]
      %v360 = vld [vmem:[%s232 + $0x178] sm:$0xf]
      %v361 = vld [vmem:[%s232 + $0x17c] sm:$0xf]
      %v362 = vld [vmem:[%s232 + $0x180] sm:$0xf]
      %v363 = vld [vmem:[%s232 + $0x184] sm:$0xf]
      %v364 = vld [vmem:[%s232 + $0x188] sm:$0xf]
      %v365 = vld [vmem:[%s232 + $0x18c] sm:$0xf]
      %v366 = vld [vmem:[%s232 + $0x190] sm:$0xf]
      %v367 = vld [vmem:[%s232 + $0x194] sm:$0xf]
      %v368 = vld [vmem:[%s232 + $0x198] sm:$0xf]
      %v369 = vld [vmem:[%s232 + $0x19c] sm:$0xf]
      %v370 = vld [vmem:[%s232 + $0x1a0] sm:$0xf]
      %v371 = vld [vmem:[%s232 + $0x1a4] sm:$0xf]
      %v372 = vld [vmem:[%s232 + $0x1a8] sm:$0xf]
      %v373 = vld [vmem:[%s232 + $0x1ac] sm:$0xf]
      %v374 = vld [vmem:[%s232 + $0x1b0] sm:$0xf]
      %v375 = vld [vmem:[%s232 + $0x1b4] sm:$0xf]
      %v376 = vld [vmem:[%s232 + $0x1b8] sm:$0xf]
      %v377 = vld [vmem:[%s232 + $0x1bc] sm:$0xf]
      %v378 = vld [vmem:[%s232 + $0x1c0] sm:$0xf]
      %v379 = vld [vmem:[%s232 + $0x1c4] sm:$0xf]
      %v380 = vld [vmem:[%s232 + $0x1c8] sm:$0xf]
      %v381 = vld [vmem:[%s232 + $0x1cc] sm:$0xf]
      %v382 = vld [vmem:[%s232 + $0x1d0] sm:$0xf]
      %v383 = vld [vmem:[%s232 + $0x1d4] sm:$0xf]
      %v384 = vld [vmem:[%s232 + $0x1d8] sm:$0xf]
      %v385 = vld [vmem:[%s232 + $0x1dc] sm:$0xf]
      %v386 = vld [vmem:[%s232 + $0x1e0] sm:$0xf]
      %v387 = vld [vmem:[%s232 + $0x1e4] sm:$0xf]
      %v388 = vld [vmem:[%s232 + $0x1e8] sm:$0xf]
      %v389 = vld [vmem:[%s232 + $0x1ec] sm:$0xf]
      %v390 = vld [vmem:[%s232 + $0x1f0] sm:$0xf]
      %v391 = vld [vmem:[%s232 + $0x1f4] sm:$0xf]
      %v392 = vld [vmem:[%s232 + $0x1f8] sm:$0xf]
      %v393 = vld [vmem:[%s232 + $0x1fc] sm:$0xf]
      %v410 = vunpack.c.l.b16 %v250
      %v411 = vunpack.c.h.b16 %v250
      %v412 = vunpack.c.l.b16 %v251
      %v413 = vunpack.c.h.b16 %v251
      %v414 = vunpack.c.l.b16 %v252
      %v415 = vunpack.c.h.b16 %v252
      %v416 = vunpack.c.l.b16 %v253
      %v417 = vunpack.c.h.b16 %v253
      %v418 = vunpack.c.l.b16 %v254
      %v419 = vunpack.c.h.b16 %v254
      %v420 = vunpack.c.l.b16 %v255
      %v421 = vunpack.c.h.b16 %v255
      %v422 = vunpack.c.l.b16 %v256
      %v423 = vunpack.c.h.b16 %v256
      %v424 = vunpack.c.l.b16 %v257
      %v425 = vunpack.c.h.b16 %v257
      %v426 = vunpack.c.l.b16 %v258
      %v427 = vunpack.c.h.b16 %v258
      %v428 = vunpack.c.l.b16 %v259
      %v429 = vunpack.c.h.b16 %v259
      %v430 = vunpack.c.l.b16 %v260
      %v431 = vunpack.c.h.b16 %v260
      %v432 = vunpack.c.l.b16 %v261
      %v433 = vunpack.c.h.b16 %v261
      %v434 = vunpack.c.l.b16 %v262
      %v435 = vunpack.c.h.b16 %v262
      %v436 = vunpack.c.l.b16 %v263
      %v437 = vunpack.c.h.b16 %v263
      %v438 = vunpack.c.l.b16 %v264
      %v439 = vunpack.c.h.b16 %v264
      %v440 = vunpack.c.l.b16 %v265
      %v441 = vunpack.c.h.b16 %v265
      %v442 = vpack.c.b16 %v418, %v410
      %v443 = vpack.c.b16 %v419, %v411
      %v444 = vpack.c.b16 %v420, %v412
      %v445 = vpack.c.b16 %v421, %v413
      %v446 = vpack.c.b16 %v422, %v414
      %v447 = vpack.c.b16 %v423, %v415
      %v448 = vpack.c.b16 %v424, %v416
      %v449 = vpack.c.b16 %v425, %v417
      %v450 = vpack.c.b16 %v434, %v426
      %v451 = vpack.c.b16 %v435, %v427
      %v452 = vpack.c.b16 %v436, %v428
      %v453 = vpack.c.b16 %v437, %v429
      %v454 = vpack.c.b16 %v438, %v430
      %v455 = vpack.c.b16 %v439, %v431
      %v456 = vpack.c.b16 %v440, %v432
      %v457 = vpack.c.b16 %v441, %v433
      %v602 = vunpack.c.l.b16 %v266
      %v603 = vunpack.c.l.b16 %v267
      %v604 = vunpack.c.l.b16 %v268
      %v605 = vunpack.c.l.b16 %v269
      %v606 = vunpack.c.l.b16 %v270
      %v607 = vunpack.c.l.b16 %v271
      %v608 = vunpack.c.l.b16 %v272
      %v609 = vunpack.c.l.b16 %v273
      %v610 = vunpack.c.l.b16 %v274
      %v611 = vunpack.c.l.b16 %v275
      %v612 = vunpack.c.l.b16 %v276
      %v613 = vunpack.c.l.b16 %v277
      %v614 = vunpack.c.l.b16 %v278
      %v615 = vunpack.c.l.b16 %v279
      %v616 = vunpack.c.l.b16 %v280
      %v617 = vunpack.c.l.b16 %v281
      %v618 = vunpack.c.l.b16 %v282
      %v619 = vunpack.c.l.b16 %v283
      %v620 = vunpack.c.l.b16 %v284
      %v621 = vunpack.c.l.b16 %v285
      %v622 = vunpack.c.l.b16 %v286
      %v623 = vunpack.c.l.b16 %v287
      %v624 = vunpack.c.l.b16 %v288
      %v625 = vunpack.c.l.b16 %v289
      %v626 = vunpack.c.l.b16 %v290
      %v627 = vunpack.c.l.b16 %v291
      %v628 = vunpack.c.l.b16 %v292
      %v629 = vunpack.c.l.b16 %v293
      %v630 = vunpack.c.l.b16 %v294
      %v631 = vunpack.c.l.b16 %v295
      %v632 = vunpack.c.l.b16 %v296
      %v633 = vunpack.c.l.b16 %v297
      %v634 = vunpack.c.l.b16 %v298
      %v635 = vunpack.c.l.b16 %v299
      %v636 = vunpack.c.l.b16 %v300
      %v637 = vunpack.c.l.b16 %v301
      %v638 = vunpack.c.l.b16 %v302
      %v639 = vunpack.c.l.b16 %v303
      %v640 = vunpack.c.l.b16 %v304
      %v641 = vunpack.c.l.b16 %v305
      %v642 = vunpack.c.l.b16 %v306
      %v643 = vunpack.c.l.b16 %v307
      %v644 = vunpack.c.l.b16 %v308
      %v645 = vunpack.c.l.b16 %v309
      %v646 = vunpack.c.l.b16 %v310
      %v647 = vunpack.c.l.b16 %v311
      %v648 = vunpack.c.l.b16 %v312
      %v649 = vunpack.c.l.b16 %v313
      %v650 = vunpack.c.l.b16 %v314
      %v651 = vunpack.c.l.b16 %v315
      %v652 = vunpack.c.l.b16 %v316
      %v653 = vunpack.c.l.b16 %v317
      %v654 = vunpack.c.l.b16 %v318
      %v655 = vunpack.c.l.b16 %v319
      %v656 = vunpack.c.l.b16 %v320
      %v657 = vunpack.c.l.b16 %v321
      %v658 = vunpack.c.l.b16 %v322
      %v659 = vunpack.c.l.b16 %v323
      %v660 = vunpack.c.l.b16 %v324
      %v661 = vunpack.c.l.b16 %v325
      %v662 = vunpack.c.l.b16 %v326
      %v663 = vunpack.c.l.b16 %v327
      %v664 = vunpack.c.l.b16 %v328
      %v665 = vunpack.c.l.b16 %v329
      %v666 = vunpack.c.l.b16 %v330
      %v667 = vunpack.c.l.b16 %v331
      %v668 = vunpack.c.l.b16 %v332
      %v669 = vunpack.c.l.b16 %v333
      %v670 = vunpack.c.l.b16 %v334
      %v671 = vunpack.c.l.b16 %v335
      %v672 = vunpack.c.l.b16 %v336
      %v673 = vunpack.c.l.b16 %v337
      %v674 = vunpack.c.l.b16 %v338
      %v675 = vunpack.c.l.b16 %v339
      %v676 = vunpack.c.l.b16 %v340
      %v677 = vunpack.c.l.b16 %v341
      %v678 = vunpack.c.l.b16 %v342
      %v679 = vunpack.c.l.b16 %v343
      %v680 = vunpack.c.l.b16 %v344
      %v681 = vunpack.c.l.b16 %v345
      %v682 = vunpack.c.l.b16 %v346
      %v683 = vunpack.c.l.b16 %v347
      %v684 = vunpack.c.l.b16 %v348
      %v685 = vunpack.c.l.b16 %v349
      %v686 = vunpack.c.l.b16 %v350
      %v687 = vunpack.c.l.b16 %v351
      %v688 = vunpack.c.l.b16 %v352
      %v689 = vunpack.c.l.b16 %v353
      %v690 = vunpack.c.l.b16 %v354
      %v691 = vunpack.c.l.b16 %v355
      %v692 = vunpack.c.l.b16 %v356
      %v693 = vunpack.c.l.b16 %v357
      %v694 = vunpack.c.l.b16 %v358
      %v695 = vunpack.c.l.b16 %v359
      %v696 = vunpack.c.l.b16 %v360
      %v697 = vunpack.c.l.b16 %v361
      %v698 = vunpack.c.l.b16 %v362
      %v699 = vunpack.c.l.b16 %v363
      %v700 = vunpack.c.l.b16 %v364
      %v701 = vunpack.c.l.b16 %v365
      %v702 = vunpack.c.l.b16 %v366
      %v703 = vunpack.c.l.b16 %v367
      %v704 = vunpack.c.l.b16 %v368
      %v705 = vunpack.c.l.b16 %v369
      %v706 = vunpack.c.l.b16 %v370
      %v707 = vunpack.c.l.b16 %v371
      %v708 = vunpack.c.l.b16 %v372
      %v709 = vunpack.c.l.b16 %v373
      %v710 = vunpack.c.l.b16 %v374
      %v711 = vunpack.c.l.b16 %v375
      %v712 = vunpack.c.l.b16 %v376
      %v713 = vunpack.c.l.b16 %v377
      %v714 = vunpack.c.l.b16 %v378
      %v715 = vunpack.c.l.b16 %v379
      %v716 = vunpack.c.l.b16 %v380
      %v717 = vunpack.c.l.b16 %v381
      %v718 = vunpack.c.l.b16 %v382
      %v719 = vunpack.c.l.b16 %v383
      %v720 = vunpack.c.l.b16 %v384
      %v721 = vunpack.c.l.b16 %v385
      %v722 = vunpack.c.l.b16 %v386
      %v723 = vunpack.c.l.b16 %v387
      %v724 = vunpack.c.l.b16 %v388
      %v725 = vunpack.c.l.b16 %v389
      %v726 = vunpack.c.l.b16 %v390
      %v727 = vunpack.c.l.b16 %v391
      %v728 = vunpack.c.l.b16 %v392
      %v729 = vunpack.c.l.b16 %v393
      %v730 = vpack.c.b16 %v603, %v602
      %v731 = vpack.c.b16 %v605, %v604
      %v732 = vpack.c.b16 %v607, %v606
      %v733 = vpack.c.b16 %v609, %v608
      %v734 = vpack.c.b16 %v611, %v610
      %v735 = vpack.c.b16 %v613, %v612
      %v736 = vpack.c.b16 %v615, %v614
      %v737 = vpack.c.b16 %v617, %v616
      %v738 = vpack.c.b16 %v619, %v618
      %v739 = vpack.c.b16 %v621, %v620
      %v740 = vpack.c.b16 %v623, %v622
      %v741 = vpack.c.b16 %v625, %v624
      %v742 = vpack.c.b16 %v627, %v626
      %v743 = vpack.c.b16 %v629, %v628
      %v744 = vpack.c.b16 %v631, %v630
      %v745 = vpack.c.b16 %v633, %v632
      %v746 = vpack.c.b16 %v635, %v634
      %v747 = vpack.c.b16 %v637, %v636
      %v748 = vpack.c.b16 %v639, %v638
      %v749 = vpack.c.b16 %v641, %v640
      %v750 = vpack.c.b16 %v643, %v642
      %v751 = vpack.c.b16 %v645, %v644
      %v752 = vpack.c.b16 %v647, %v646
      %v753 = vpack.c.b16 %v649, %v648
      %v754 = vpack.c.b16 %v651, %v650
      %v755 = vpack.c.b16 %v653, %v652
      %v756 = vpack.c.b16 %v655, %v654
      %v757 = vpack.c.b16 %v657, %v656
      %v758 = vpack.c.b16 %v659, %v658
      %v759 = vpack.c.b16 %v661, %v660
      %v760 = vpack.c.b16 %v663, %v662
      %v761 = vpack.c.b16 %v665, %v664
      %v762 = vpack.c.b16 %v667, %v666
      %v763 = vpack.c.b16 %v669, %v668
      %v764 = vpack.c.b16 %v671, %v670
      %v765 = vpack.c.b16 %v673, %v672
      %v766 = vpack.c.b16 %v675, %v674
      %v767 = vpack.c.b16 %v677, %v676
      %v768 = vpack.c.b16 %v679, %v678
      %v769 = vpack.c.b16 %v681, %v680
      %v770 = vpack.c.b16 %v683, %v682
      %v771 = vpack.c.b16 %v685, %v684
      %v772 = vpack.c.b16 %v687, %v686
      %v773 = vpack.c.b16 %v689, %v688
      %v774 = vpack.c.b16 %v691, %v690
      %v775 = vpack.c.b16 %v693, %v692
      %v776 = vpack.c.b16 %v695, %v694
      %v777 = vpack.c.b16 %v697, %v696
      %v778 = vpack.c.b16 %v699, %v698
      %v779 = vpack.c.b16 %v701, %v700
      %v780 = vpack.c.b16 %v703, %v702
      %v781 = vpack.c.b16 %v705, %v704
      %v782 = vpack.c.b16 %v707, %v706
      %v783 = vpack.c.b16 %v709, %v708
      %v784 = vpack.c.b16 %v711, %v710
      %v785 = vpack.c.b16 %v713, %v712
      %v786 = vpack.c.b16 %v715, %v714
      %v787 = vpack.c.b16 %v717, %v716
      %v788 = vpack.c.b16 %v719, %v718
      %v789 = vpack.c.b16 %v721, %v720
      %v790 = vpack.c.b16 %v723, %v722
      %v791 = vpack.c.b16 %v725, %v724
      %v792 = vpack.c.b16 %v727, %v726
      %v793 = vpack.c.b16 %v729, %v728
      %858 = vmatprep.subr.bf16.mxu0 0
      %859 = vmatpush1.bf16.msra.mxu0 %v730
      %860 = vmatprep.subr.bf16.mxu0 0
      %861 = vmatpush1.bf16.msra.mxu0 %v731
      %862 = vmatprep.subr.bf16.mxu0 0
      %863 = vmatpush1.bf16.msra.mxu0 %v732
      %864 = vmatprep.subr.bf16.mxu0 0
      %865 = vmatpush1.bf16.msra.mxu0 %v733
      %866 = vmatprep.subr.bf16.mxu0 0
      %867 = vmatpush1.bf16.msra.mxu0 %v734
      %868 = vmatprep.subr.bf16.mxu0 0
      %869 = vmatpush1.bf16.msra.mxu0 %v735
      %870 = vmatprep.subr.bf16.mxu0 0
      %871 = vmatpush1.bf16.msra.mxu0 %v736
      %872 = vmatprep.subr.bf16.mxu0 0
      %873 = vmatpush1.bf16.msra.mxu0 %v737
      %874 = vmatprep.subr.bf16.mxu0 0
      %875 = vmatpush1.bf16.msra.mxu0 %v738
      %876 = vmatprep.subr.bf16.mxu0 0
      %877 = vmatpush1.bf16.msra.mxu0 %v739
      %878 = vmatprep.subr.bf16.mxu0 0
      %879 = vmatpush1.bf16.msra.mxu0 %v740
      %880 = vmatprep.subr.bf16.mxu0 0
      %881 = vmatpush1.bf16.msra.mxu0 %v741
      %882 = vmatprep.subr.bf16.mxu0 0
      %883 = vmatpush1.bf16.msra.mxu0 %v742
      %884 = vmatprep.subr.bf16.mxu0 0
      %885 = vmatpush1.bf16.msra.mxu0 %v743
      %886 = vmatprep.subr.bf16.mxu0 0
      %887 = vmatpush1.bf16.msra.mxu0 %v744
      %888 = vmatprep.subr.bf16.mxu0 0
      %889 = vmatpush1.bf16.msra.mxu0 %v745
      %890 = vmatprep.mubr.bf16.mxu0 %v443
      %891 = vmatmul.mubr.bf16.gmra.mrb[0].mxu0 %v442
      %v892 = vpop.f32.mrb[0].mxu0
      %v893 = vadd.f32 0.0, %v892
      %v894 = vpop.f32.mrb[0].mxu0
      %v895 = vpop.f32.mrb[0].mxu0
      %v896 = vadd.f32 0.0, %v895
      %v897 = vpop.f32.mrb[0].mxu0
      %898 = vmatprep.mubr.bf16.mxu0 %v451
      %899 = vmatmul.mubr.bf16.gmra.mrb[0].mxu0 %v450
      %v900 = vpop.f32.mrb[0].mxu0
      %v901 = vadd.f32 0.0, %v900
      %v902 = vpop.f32.mrb[0].mxu0
      %v903 = vpop.f32.mrb[0].mxu0
      %v904 = vadd.f32 0.0, %v903
      %v905 = vpop.f32.mrb[0].mxu0
      %906 = vdwg.mxu0
      %907 = vmatprep.subr.bf16.mxu0 0
      %908 = vmatpush1.bf16.msra.mxu0 %v746
      %909 = vmatprep.subr.bf16.mxu0 0
      %910 = vmatpush1.bf16.msra.mxu0 %v747
      %911 = vmatprep.subr.bf16.mxu0 0
      %912 = vmatpush1.bf16.msra.mxu0 %v748
      %913 = vmatprep.subr.bf16.mxu0 0
      %914 = vmatpush1.bf16.msra.mxu0 %v749
      %915 = vmatprep.subr.bf16.mxu0 0
      %916 = vmatpush1.bf16.msra.mxu0 %v750
      %917 = vmatprep.subr.bf16.mxu0 0
      %918 = vmatpush1.bf16.msra.mxu0 %v751
      %919 = vmatprep.subr.bf16.mxu0 0
      %920 = vmatpush1.bf16.msra.mxu0 %v752
      %921 = vmatprep.subr.bf16.mxu0 0
      %922 = vmatpush1.bf16.msra.mxu0 %v753
      %923 = vmatprep.subr.bf16.mxu0 0
      %924 = vmatpush1.bf16.msra.mxu0 %v754
      %925 = vmatprep.subr.bf16.mxu0 0
      %926 = vmatpush1.bf16.msra.mxu0 %v755
      %927 = vmatprep.subr.bf16.mxu0 0
      %928 = vmatpush1.bf16.msra.mxu0 %v756
      %929 = vmatprep.subr.bf16.mxu0 0
      %930 = vmatpush1.bf16.msra.mxu0 %v757
      %931 = vmatprep.subr.bf16.mxu0 0
      %932 = vmatpush1.bf16.msra.mxu0 %v758
      %933 = vmatprep.subr.bf16.mxu0 0
      %934 = vmatpush1.bf16.msra.mxu0 %v759
      %935 = vmatprep.subr.bf16.mxu0 0
      %936 = vmatpush1.bf16.msra.mxu0 %v760
      %937 = vmatprep.subr.bf16.mxu0 0
      %938 = vmatpush1.bf16.msra.mxu0 %v761
      %939 = vmatprep.mubr.bf16.mxu0 %v445
      %940 = vmatmul.mubr.bf16.gmra.mrb[0].mxu0 %v444
      %v941 = vpop.f32.mrb[0].mxu0
      %v942 = vadd.f32 %v893, %v941
      %v943 = vpop.f32.mrb[0].mxu0
      %v944 = vpop.f32.mrb[0].mxu0
      %v945 = vadd.f32 %v896, %v944
      %v946 = vpop.f32.mrb[0].mxu0
      %947 = vmatprep.mubr.bf16.mxu0 %v453
      %948 = vmatmul.mubr.bf16.gmra.mrb[0].mxu0 %v452
      %v949 = vpop.f32.mrb[0].mxu0
      %v950 = vadd.f32 %v901, %v949
      %v951 = vpop.f32.mrb[0].mxu0
      %v952 = vpop.f32.mrb[0].mxu0
      %v953 = vadd.f32 %v904, %v952
      %v954 = vpop.f32.mrb[0].mxu0
      %955 = vdwg.mxu0
      %956 = vmatprep.subr.bf16.mxu0 0
      %957 = vmatpush1.bf16.msra.mxu0 %v762
      %958 = vmatprep.subr.bf16.mxu0 0
      %959 = vmatpush1.bf16.msra.mxu0 %v763
      %960 = vmatprep.subr.bf16.mxu0 0
      %961 = vmatpush1.bf16.msra.mxu0 %v764
      %962 = vmatprep.subr.bf16.mxu0 0
      %963 = vmatpush1.bf16.msra.mxu0 %v765
      %964 = vmatprep.subr.bf16.mxu0 0
      %965 = vmatpush1.bf16.msra.mxu0 %v766
      %966 = vmatprep.subr.bf16.mxu0 0
      %967 = vmatpush1.bf16.msra.mxu0 %v767
      %968 = vmatprep.subr.bf16.mxu0 0
      %969 = vmatpush1.bf16.msra.mxu0 %v768
      %970 = vmatprep.subr.bf16.mxu0 0
      %971 = vmatpush1.bf16.msra.mxu0 %v769
      %972 = vmatprep.subr.bf16.mxu0 0
      %973 = vmatpush1.bf16.msra.mxu0 %v770
      %974 = vmatprep.subr.bf16.mxu0 0
      %975 = vmatpush1.bf16.msra.mxu0 %v771
      %976 = vmatprep.subr.bf16.mxu0 0
      %977 = vmatpush1.bf16.msra.mxu0 %v772
      %978 = vmatprep.subr.bf16.mxu0 0
      %979 = vmatpush1.bf16.msra.mxu0 %v773
      %980 = vmatprep.subr.bf16.mxu0 0
      %981 = vmatpush1.bf16.msra.mxu0 %v774
      %982 = vmatprep.subr.bf16.mxu0 0
      %983 = vmatpush1.bf16.msra.mxu0 %v775
      %984 = vmatprep.subr.bf16.mxu0 0
      %985 = vmatpush1.bf16.msra.mxu0 %v776
      %986 = vmatprep.subr.bf16.mxu0 0
      %987 = vmatpush1.bf16.msra.mxu0 %v777
      %988 = vmatprep.mubr.bf16.mxu0 %v447
      %989 = vmatmul.mubr.bf16.gmra.mrb[0].mxu0 %v446
      %v990 = vpop.f32.mrb[0].mxu0
      %v991 = vadd.f32 %v942, %v990
      %v992 = vpop.f32.mrb[0].mxu0
      %v993 = vpop.f32.mrb[0].mxu0
      %v994 = vadd.f32 %v945, %v993
      %v995 = vpop.f32.mrb[0].mxu0
      %996 = vmatprep.mubr.bf16.mxu0 %v455
      %997 = vmatmul.mubr.bf16.gmra.mrb[0].mxu0 %v454
      %v998 = vpop.f32.mrb[0].mxu0
      %v999 = vadd.f32 %v950, %v998
      %v1000 = vpop.f32.mrb[0].mxu0
      %v1001 = vpop.f32.mrb[0].mxu0
      %v1002 = vadd.f32 %v953, %v1001
      %v1003 = vpop.f32.mrb[0].mxu0
      %1004 = vdwg.mxu0
      %1005 = vmatprep.subr.bf16.mxu0 0
      %1006 = vmatpush1.bf16.msra.mxu0 %v778
      %1007 = vmatprep.subr.bf16.mxu0 0
      %1008 = vmatpush1.bf16.msra.mxu0 %v779
      %1009 = vmatprep.subr.bf16.mxu0 0
      %1010 = vmatpush1.bf16.msra.mxu0 %v780
      %1011 = vmatprep.subr.bf16.mxu0 0
      %1012 = vmatpush1.bf16.msra.mxu0 %v781
      %1013 = vmatprep.subr.bf16.mxu0 0
      %1014 = vmatpush1.bf16.msra.mxu0 %v782
      %1015 = vmatprep.subr.bf16.mxu0 0
      %1016 = vmatpush1.bf16.msra.mxu0 %v783
      %1017 = vmatprep.subr.bf16.mxu0 0
      %1018 = vmatpush1.bf16.msra.mxu0 %v784
      %1019 = vmatprep.subr.bf16.mxu0 0
      %1020 = vmatpush1.bf16.msra.mxu0 %v785
      %1021 = vmatprep.subr.bf16.mxu0 0
      %1022 = vmatpush1.bf16.msra.mxu0 %v786
      %1023 = vmatprep.subr.bf16.mxu0 0
      %1024 = vmatpush1.bf16.msra.mxu0 %v787
      %1025 = vmatprep.subr.bf16.mxu0 0
      %1026 = vmatpush1.bf16.msra.mxu0 %v788
      %1027 = vmatprep.subr.bf16.mxu0 0
      %1028 = vmatpush1.bf16.msra.mxu0 %v789
      %1029 = vmatprep.subr.bf16.mxu0 0
      %1030 = vmatpush1.bf16.msra.mxu0 %v790
      %1031 = vmatprep.subr.bf16.mxu0 0
      %1032 = vmatpush1.bf16.msra.mxu0 %v791
      %1033 = vmatprep.subr.bf16.mxu0 0
      %1034 = vmatpush1.bf16.msra.mxu0 %v792
      %1035 = vmatprep.subr.bf16.mxu0 0
      %1036 = vmatpush1.bf16.msra.mxu0 %v793
      %1037 = vmatprep.mubr.bf16.mxu0 %v449
      %1038 = vmatmul.mubr.bf16.gmra.mrb[0].mxu0 %v448
      %v1039 = vpop.f32.mrb[0].mxu0
      %v1040 = vadd.f32 %v991, %v1039
      %v1041 = vpop.f32.mrb[0].mxu0
      %v1042 = vpop.f32.mrb[0].mxu0
      %v1043 = vadd.f32 %v994, %v1042
      %v1044 = vpop.f32.mrb[0].mxu0
      %1045 = vmatprep.mubr.bf16.mxu0 %v457
      %1046 = vmatmul.mubr.bf16.gmra.mrb[0].mxu0 %v456
      %v1047 = vpop.f32.mrb[0].mxu0
      %v1048 = vadd.f32 %v999, %v1047
      %v1049 = vpop.f32.mrb[0].mxu0
      %v1050 = vpop.f32.mrb[0].mxu0
      %v1051 = vadd.f32 %v1002, %v1050
      %v1052 = vpop.f32.mrb[0].mxu0
      %1053 = vdwg.mxu0
      %1054 = vst [vmem:[%s241] sm:$0xff] %v1040
      %1055 = vst [vmem:[%s241 + $0x8] sm:$0xff] %v1043
      %1056 = vst [vmem:[%s241 + $0x10] sm:$0xff] %v1048
      %1057 = vst [vmem:[%s241 + $0x18] sm:$0xff] %v1051
      %v1058 = vadd.f32 %v1040, %v1043
      %v1059 = vadd.f32 %v1058, %v1048
      %v1060 = vadd.f32 %v1059, %v1051
      %v1061 = vrot.slane %v1060, 4
      %v1062 = vadd.f32 %v1060, %v1061
      %v1063 = vrot.slane %v1062, 2
      %v1064 = vadd.f32 %v1062, %v1063
      %v1065 = vrot.slane %v1064, 1
      %v1066 = vadd.f32 %v1064, %v1065
      %v1067 = vmul.f32 %v1040, %v1040
      %v1068 = vmul.f32 %v1043, %v1043
      %v1069 = vmul.f32 %v1048, %v1048
      %v1070 = vmul.f32 %v1051, %v1051
      %v1071 = vadd.f32 %v1067, %v1068
      %v1072 = vadd.f32 %v1071, %v1069
      %v1073 = vadd.f32 %v1072, %v1070
      %v1074 = vrot.slane %v1073, 4
      %v1075 = vadd.f32 %v1073, %v1074
      %v1076 = vrot.slane %v1075, 2
      %v1077 = vadd.f32 %v1075, %v1076
      %v1078 = vrot.slane %v1077, 1
      %v1079 = vadd.f32 %v1077, %v1078
      %vm1080 = vcmask 1040384
      %v1081 = vsel %vm1080, %v1066, %v1079
      %1082 = vst [vmem:[%s247] sm:$0x3] %v1081
      %s1083 = smul.u32 4, %s20
      %p1084 = scmp.lt.s32.totalorder %s19, 3
      %s1085 = scalar_select %p1084, %s19, 3
      %p1086 = scmp.lt.s32.totalorder %s1083, 3
      %s1087 = scalar_select %p1086, %s1083, 3
      %s1088 = smul.addr %s1085, 4
      %s1089 = sadd.s32 %s1087, %s1088
      %s1090 = smul.addr %s1089, 8
      %s1091 = scalar_lea.vmem %s2, %s1090
      %s1092 = sadd.s32 %s19, %s20
      %p1093 = scmp.lt.s32.totalorder %s1092, 3
      %s1094 = scalar_select %p1093, %s1092, 3
      %s1095 = smul.addr %s1094, 2
      %s1096 = scalar_lea.vmem %s3, %s1095
      // Predicated region
      $region29: #{generator_forward.9} parent=27 // pred_check
        %p1097 = pneg %p101
      $region30: #{generator_forward.9} parent=27 // pred_check_branch
        %1099 = sbr.rel (%p1097) target = $region32
      $region31: #{generator_forward.9} parent=27 // pred_region
        %s1100 = smul.u32 4, %s20
      $region32: #{generator_forward.9} parent=27 // pred_fallthru
        _
      // Predicated region
      $region33: #{generator_forward.9} parent=27 // pred_check
        %p1101 = pneg %p129
      $region34: #{generator_forward.9} parent=27 // pred_check_branch
        %1103 = sbr.rel (%p1101) target = $region36
      $region35: #{generator_forward.9} parent=27 // pred_region
        %s1104 = sadd.s32 %s19, %s20
      $region36: #{generator_forward.9} parent=27 // pred_fallthru
        _
    $region28: #{generator_forward.9} parent=5 // pred_fallthru
      _
    %p1105 = scmp.le.s32.totalorder 2, %s10
    // Predicated region
    $region37: #{generator_forward.9} parent=5 // pred_check
      %p1106 = pneg %p1105
    $region38: #{generator_forward.9} parent=5 // pred_check_branch
      %1108 = sbr.rel (%p1106) target = $region40
    $region39: #{generator_forward.9} parent=5 // pred_region
      %s1109 = ssub.s32 %s10, 2
      // Predicated region
      $region41: #{generator_forward.9} parent=39 // pred_check
        %p1110 = pneg %p107
      $region42: #{generator_forward.9} parent=39 // pred_check_branch
        %1112 = sbr.rel (%p1110) target = $region44
      $region43: #{generator_forward.9} parent=39 // pred_region
        %s1113 = smul.u32 4, %s22
        %p1114 = scmp.lt.s32.totalorder %s21, 3
        %s1115 = scalar_select %p1114, %s21, 3
        %p1116 = scmp.lt.s32.totalorder %s1113, 3
        %s1117 = scalar_select %p1116, %s1113, 3
        %s1118 = smul.addr %s1115, 4
        %s1119 = sadd.s32 %s1117, %s1118
        %s1120 = smul.addr %s1119, 8
        %s1121 = scalar_lea.vmem %s2, %s1120
      $region44: #{generator_forward.9} parent=39 // pred_fallthru
        _
      // Predicated region
      $region45: #{generator_forward.9} parent=39 // pred_check
        %p1122 = pneg %p135
      $region46: #{generator_forward.9} parent=39 // pred_check_branch
        %1124 = sbr.rel (%p1122) target = $region48
      $region47: #{generator_forward.9} parent=39 // pred_region
        %s1125 = sadd.s32 %s21, %s22
        %p1126 = scmp.lt.s32.totalorder %s1125, 3
        %s1127 = scalar_select %p1126, %s1125, 3
        %s1128 = smul.addr %s1127, 2
        %s1129 = scalar_lea.vmem %s3, %s1128
      $region48: #{generator_forward.9} parent=39 // pred_fallthru
        _
    $region40: #{generator_forward.9} parent=5 // pred_fallthru
      _
  $region6: #{generator_forward.9} parent=0 // loop_footer
    %s14 = sadd.s32 1, %s10
  $region7: #{generator_forward.9} parent=0 // loop_footer_branch
    %9 = sbr.rel target = $region3
  $region8: #{generator_forward.9} parent=0 // loop_exit
    _

// kernel: generator_forward.11
$region0: #{generator_forward.11}
  #allocation0 [shape = 'u32[]', space=smem, size = 0x4, offset = 0x4, fixed_abs, tag = 'smem constant byte address 0x4 - core index']
  #allocation1 [shape = 'u32[144,128]{1,0:T(1,128)}', space=vmem, size = 0x12000, scoped, tag = 'internal scratch']
  %s0 = inlined_call_operand.vmem [shape: bf16[4,128,512], index: 0, kind: input, shape index: {}]
  %s1 = inlined_call_operand.vmem [shape: bf16[4,512,128], index: 1, kind: input, shape index: {}]
  %s2 = inlined_call_operand.vmem [shape: f32[4,128,128], index: 2, kind: output, shape index: {0}]
  %s3 = inlined_call_operand.vmem [shape: f32[4,2,128], index: 3, kind: output, shape index: {1}]
  %4 = xla_tuple %s2, %s3
  %s5 = sld [smem:[#allocation0]]
  $region49: #{generator_forward.11} parent=0
    _
  %s7 = ssub.s32 1, %s5
  %s8 = scalar_select 0, %s7, %s5
  loop: start=0, step=1, limit=6
  $region2: #{generator_forward.11} parent=0 // loop_pre_header
    _
  $region3: #{generator_forward.11} parent=0 // loop_header
    %s10 = sphi 0, %s14
    %p11 = scmp.ge.s32.totalorder %s10, 6
    %s17 = sphi 0, %s29
    %s18 = sphi 0, %s25
    %s19 = sphi 0, %s17
    %s20 = sphi 0, %s18
    %s21 = sphi 0, %s19
    %s22 = sphi 0, %s20
    %s34 = sphi 0, %s36
    %s37 = sphi 0, %s34
    %s38 = sphi 0, %s37
    %s54 = sphi 0, %s38
    %s60 = sphi 0, %s62
    %s63 = sphi 0, %s60
    %s64 = sphi 0, %s63
    %s80 = sphi 0, %s64
    %s88 = sphi 0, %s90
    %s91 = sphi 0, %s88
    %s92 = sphi 0, %s91
    %s108 = sphi 0, %s92
    %s116 = sphi 0, %s118
    %s119 = sphi 0, %s116
    %s120 = sphi 0, %s119
    %s136 = sphi 0, %s120
  $region4: #{generator_forward.11} parent=0 // loop_header_branch
    %13 = sbr.rel (%p11) target = $region8
  $region5: #{generator_forward.11} parent=0 // loop_body
    %s15 = ssub.s32 %s10, 1
    %s16 = ssub.s32 %s10, 2
    %s23 = sadd.s32 1, %s18
    %p24 = scmp.ge.s32.totalorder %s23, 1
    %s25 = scalar_select %p24, 0, %s23
    %s26 = sadd.s32 1, %s17
    %s27 = scalar_select %p24, %s26, %s17
    %p28 = scmp.ge.s32.totalorder %s27, 4
    %s29 = scalar_select %p28, 0, %s27
    %s30 = ssub.s32 %s17, %s29
    %s31 = ssub.s32 %s18, %s25
    %s32 = sor.u32 %s30, %s31
    %p33 = scmp.eq.s32.totalorder %s32, 0
    %s35 = sadd.s32 %s34, 1
    %s36 = scalar_select %p33, %s34, %s35
    %p39 = pneg %p33
    %p40 = scmp.eq.s32.totalorder %s10, 3
    %p41 = por %p39, %p40
    %p42 = scmp.ne.s32.totalorder %s34, %s37
    %p43 = scmp.eq.s32.totalorder %s10, 0
    %p44 = por %p42, %p43
    %p45 = scmp.ne.s32.totalorder %s34, %s37
    %p46 = scmp.eq.s32.totalorder %s15, 3
    %p47 = por %p45, %p46
    %p48 = scmp.ne.s32.totalorder %s37, %s38
    %p49 = scmp.eq.s32.totalorder %s15, 0
    %p50 = por %p48, %p49
    %p51 = scmp.ne.s32.totalorder %s37, %s38
    %p52 = scmp.eq.s32.totalorder %s16, 3
    %p53 = por %p51, %p52
    %p55 = scmp.ne.s32.totalorder %s38, %s54
    %p56 = scmp.eq.s32.totalorder %s16, 0
    %p57 = por %p55, %p56
    %s58 = ssub.s32 %s17, %s29
    %p59 = scmp.eq.s32.totalorder %s58, 0
    %s61 = sadd.s32 %s60, 1
    %s62 = scalar_select %p59, %s60, %s61
    %p65 = pneg %p59
    %p66 = scmp.eq.s32.totalorder %s10, 3
    %p67 = por %p65, %p66
    %p68 = scmp.ne.s32.totalorder %s60, %s63
    %p69 = scmp.eq.s32.totalorder %s10, 0
    %p70 = por %p68, %p69
    %p71 = scmp.ne.s32.totalorder %s60, %s63
    %p72 = scmp.eq.s32.totalorder %s15, 3
    %p73 = por %p71, %p72
    %p74 = scmp.ne.s32.totalorder %s63, %s64
    %p75 = scmp.eq.s32.totalorder %s15, 0
    %p76 = por %p74, %p75
    %p77 = scmp.ne.s32.totalorder %s63, %s64
    %p78 = scmp.eq.s32.totalorder %s16, 3
    %p79 = por %p77, %p78
    %p81 = scmp.ne.s32.totalorder %s64, %s80
    %p82 = scmp.eq.s32.totalorder %s16, 0
    %p83 = por %p81, %p82
    %s84 = ssub.s32 %s17, %s29
    %s85 = ssub.s32 %s18, %s25
    %s86 = sor.u32 %s84, %s85
    %p87 = scmp.eq.s32.totalorder %s86, 0
    %s89 = sadd.s32 %s88, 1
    %s90 = scalar_select %p87, %s88, %s89
    %p93 = pneg %p87
    %p94 = scmp.eq.s32.totalorder %s10, 3
    %p95 = por %p93, %p94
    %p96 = scmp.ne.s32.totalorder %s88, %s91
    %p97 = scmp.eq.s32.totalorder %s10, 0
    %p98 = por %p96, %p97
    %p99 = scmp.ne.s32.totalorder %s88, %s91
    %p100 = scmp.eq.s32.totalorder %s15, 3
    %p101 = por %p99, %p100
    %p102 = scmp.ne.s32.totalorder %s91, %s92
    %p103 = scmp.eq.s32.totalorder %s15, 0
    %p104 = por %p102, %p103
    %p105 = scmp.ne.s32.totalorder %s91, %s92
    %p106 = scmp.eq.s32.totalorder %s16, 3
    %p107 = por %p105, %p106
    %p109 = scmp.ne.s32.totalorder %s92, %s108
    %p110 = scmp.eq.s32.totalorder %s16, 0
    %p111 = por %p109, %p110
    %s112 = sadd.s32 %s17, %s18
    %s113 = sadd.s32 %s29, %s25
    %s114 = ssub.s32 %s112, %s113
    %p115 = scmp.eq.s32.totalorder %s114, 0
    %s117 = sadd.s32 %s116, 1
    %s118 = scalar_select %p115, %s116, %s117
    %p121 = pneg %p115
    %p122 = scmp.eq.s32.totalorder %s10, 3
    %p123 = por %p121, %p122
    %p124 = scmp.ne.s32.totalorder %s116, %s119
    %p125 = scmp.eq.s32.totalorder %s10, 0
    %p126 = por %p124, %p125
    %p127 = scmp.ne.s32.totalorder %s116, %s119
    %p128 = scmp.eq.s32.totalorder %s15, 3
    %p129 = por %p127, %p128
    %p130 = scmp.ne.s32.totalorder %s119, %s120
    %p131 = scmp.eq.s32.totalorder %s15, 0
    %p132 = por %p130, %p131
    %p133 = scmp.ne.s32.totalorder %s119, %s120
    %p134 = scmp.eq.s32.totalorder %s16, 3
    %p135 = por %p133, %p134
    %p137 = scmp.ne.s32.totalorder %s120, %s136
    %p138 = scmp.eq.s32.totalorder %s16, 0
    %p139 = por %p137, %p138
    %p140 = scmp.le.s32.totalorder 1, %s10
    %p141 = scmp.lt.s32.totalorder %s10, 5
    %p142 = pnand %p140, %p141
    %p143 = pneg %p142
    // Predicated region
    $region9: #{generator_forward.11} parent=5 // pred_check
      _
    $region10: #{generator_forward.11} parent=5 // pred_check_branch
      %145 = sbr.rel (%p142) target = $region12
    $region11: #{generator_forward.11} parent=5 // pred_region
      %s146 = ssub.s32 %s10, 1
    $region12: #{generator_forward.11} parent=5 // pred_fallthru
      _
    %p147 = scmp.lt.s32.totalorder %s10, 4
    // Predicated region
    $region13: #{generator_forward.11} parent=5 // pred_check
      %p148 = pneg %p147
    $region14: #{generator_forward.11} parent=5 // pred_check_branch
      %150 = sbr.rel (%p148) target = $region16
    $region15: #{generator_forward.11} parent=5 // pred_region
      // Predicated region
      $region17: #{generator_forward.11} parent=15 // pred_check
        %p151 = pneg %p44
      $region18: #{generator_forward.11} parent=15 // pred_check_branch
        %153 = sbr.rel (%p151) target = $region20
      $region19: #{generator_forward.11} parent=15 // pred_region
        %s154 = smul.u32 16, %s18
        %p155 = scmp.lt.s32.totalorder %s17, 3
        %s156 = scalar_select %p155, %s17, 3
        %p157 = scmp.lt.s32.totalorder %s154, 15
        %s158 = scalar_select %p157, %s154, 15
        %s159 = smul.addr %s158, 4
        %s160 = smul.addr %s156, 64
        %s161 = sadd.s32 %s159, %s160
        %s162 = smul.addr %s161, 4
        %s163 = scalar_lea.vmem %s0, %s162
        %s164 = smul.u32 16, %s18
      $region20: #{generator_forward.11} parent=15 // pred_fallthru
        _
      // Predicated region
      $region21: #{generator_forward.11} parent=15 // pred_check
        %p165 = pneg %p70
      $region22: #{generator_forward.11} parent=15 // pred_check_branch
        %167 = sbr.rel (%p165) target = $region24
      $region23: #{generator_forward.11} parent=15 // pred_region
        %p168 = scmp.lt.s32.totalorder %s17, 3
        %s169 = scalar_select %p168, %s17, 3
        %s170 = smul.addr %s169, 64
        %s171 = smul.addr %s170, 4
        %s172 = scalar_lea.vmem %s1, %s171
      $region24: #{generator_forward.11} parent=15 // pred_fallthru
        _
    $region16: #{generator_forward.11} parent=5 // pred_fallthru
      _
    %p173 = scmp.le.s32.totalorder 1, %s10
    %p174 = scmp.lt.s32.totalorder %s10, 5
    %p175 = pnand %p173, %p174
    %p176 = pneg %p175
    // Predicated region
    $region25: #{generator_forward.11} parent=5 // pred_check
      _
    $region26: #{generator_forward.11} parent=5 // pred_check_branch
      %178 = sbr.rel (%p175) target = $region28
    $region27: #{generator_forward.11} parent=5 // pred_region
      %s179 = ssub.s32 %s10, 1
      %s180 = smul.u32 16, %s20
      %p181 = scmp.lt.s32.totalorder %s19, 3
      %s182 = scalar_select %p181, %s19, 3
      %p183 = scmp.lt.s32.totalorder %s180, 15
      %s184 = scalar_select %p183, %s180, 15
      %s185 = smul.addr %s184, 4
      %s186 = smul.addr %s182, 64
      %s187 = sadd.s32 %s185, %s186
      %s188 = smul.addr %s187, 4
      %s189 = scalar_lea.vmem %s0, %s188
      %p190 = pneg %p50
      %p191 = pneg %p47
      %p192 = scmp.lt.s32.totalorder %s19, 3
      %s193 = scalar_select %p192, %s19, 3
      %s194 = smul.addr %s193, 64
      %s195 = smul.addr %s194, 4
      %s196 = scalar_lea.vmem %s1, %s195
      %p197 = pneg %p76
      %p198 = pneg %p73
      %p199 = pneg %p104
      %p200 = pneg %p101
      %s201 = smul.u32 16, %s20
      %p202 = scmp.lt.s32.totalorder %s19, 3
      %s203 = scalar_select %p202, %s19, 3
      %p204 = scmp.lt.s32.totalorder %s201, 15
      %s205 = scalar_select %p204, %s201, 15
      %s206 = smul.addr %s203, 16
      %s207 = sadd.s32 %s205, %s206
      %s208 = smul.addr %s207, 8
      %s209 = scalar_lea.vmem %s2, %s208
      %p210 = pneg %p132
      %p211 = pneg %p129
      %s212 = sadd.s32 %s19, %s20
      %p213 = scmp.lt.s32.totalorder %s212, 3
      %s214 = scalar_select %p213, %s212, 3
      %s215 = smul.addr %s214, 2
      %s216 = scalar_lea.vmem %s3, %s215
      %s217 = smul.u32 16, %s20
      %p218 = scmp.lt.s32.totalorder %s19, 3
      %s219 = scalar_select %p218, %s19, 3
      %p220 = scmp.lt.s32.totalorder %s217, 15
      %s221 = scalar_select %p220, %s217, 15
      %s222 = smul.addr %s221, 4
      %s223 = smul.addr %s219, 64
      %s224 = sadd.s32 %s222, %s223
      %s225 = smul.addr %s224, 4
      %s226 = scalar_lea.vmem %s0, %s225
      %s227 = smul.u32 16, %s20
      %p228 = scmp.lt.s32.totalorder %s19, 3
      %s229 = scalar_select %p228, %s19, 3
      %s230 = smul.addr %s229, 64
      %s231 = smul.addr %s230, 4
      %s232 = scalar_lea.vmem %s1, %s231
      %s233 = smul.u32 16, %s20
      %p234 = scmp.lt.s32.totalorder %s19, 3
      %s235 = scalar_select %p234, %s19, 3
      %p236 = scmp.lt.s32.totalorder %s233, 15
      %s237 = scalar_select %p236, %s233, 15
      %s238 = smul.addr %s235, 16
      %s239 = sadd.s32 %s237, %s238
      %s240 = smul.addr %s239, 8
      %s241 = scalar_lea.vmem %s2, %s240
      %s242 = smul.u32 16, %s20
      %s243 = sadd.s32 %s19, %s20
      %p244 = scmp.lt.s32.totalorder %s243, 3
      %s245 = scalar_select %p244, %s243, 3
      %s246 = smul.addr %s245, 2
      %s247 = scalar_lea.vmem %s3, %s246
      %s248 = sadd.s32 %s19, %s20
      %v250 = vld [vmem:[%s226] sm:$0xff]
      %v251 = vld [vmem:[%s226 + $0x8] sm:$0xff]
      %v252 = vld [vmem:[%s226 + $0x10] sm:$0xff]
      %v253 = vld [vmem:[%s226 + $0x18] sm:$0xff]
      %v254 = vld [vmem:[%s226 + $0x20] sm:$0xff]
      %v255 = vld [vmem:[%s226 + $0x28] sm:$0xff]
      %v256 = vld [vmem:[%s226 + $0x30] sm:$0xff]
      %v257 = vld [vmem:[%s226 + $0x38] sm:$0xff]
      %v258 = vld [vmem:[%s226 + $0x40] sm:$0xff]
      %v259 = vld [vmem:[%s226 + $0x48] sm:$0xff]
      %v260 = vld [vmem:[%s226 + $0x50] sm:$0xff]
      %v261 = vld [vmem:[%s226 + $0x58] sm:$0xff]
      %v262 = vld [vmem:[%s226 + $0x60] sm:$0xff]
      %v263 = vld [vmem:[%s226 + $0x68] sm:$0xff]
      %v264 = vld [vmem:[%s226 + $0x70] sm:$0xff]
      %v265 = vld [vmem:[%s226 + $0x78] sm:$0xff]
      %v266 = vld [vmem:[%s226 + $0x80] sm:$0xff]
      %v267 = vld [vmem:[%s226 + $0x88] sm:$0xff]
      %v268 = vld [vmem:[%s226 + $0x90] sm:$0xff]
      %v269 = vld [vmem:[%s226 + $0x98] sm:$0xff]
      %v270 = vld [vmem:[%s226 + $0xa0] sm:$0xff]
      %v271 = vld [vmem:[%s226 + $0xa8] sm:$0xff]
      %v272 = vld [vmem:[%s226 + $0xb0] sm:$0xff]
      %v273 = vld [vmem:[%s226 + $0xb8] sm:$0xff]
      %v274 = vld [vmem:[%s226 + $0xc0] sm:$0xff]
      %v275 = vld [vmem:[%s226 + $0xc8] sm:$0xff]
      %v276 = vld [vmem:[%s226 + $0xd0] sm:$0xff]
      %v277 = vld [vmem:[%s226 + $0xd8] sm:$0xff]
      %v278 = vld [vmem:[%s226 + $0xe0] sm:$0xff]
      %v279 = vld [vmem:[%s226 + $0xe8] sm:$0xff]
      %v280 = vld [vmem:[%s226 + $0xf0] sm:$0xff]
      %v281 = vld [vmem:[%s226 + $0xf8] sm:$0xff]
      %v282 = vld [vmem:[%s232] sm:$0xf]
      %v283 = vld [vmem:[%s232 + $0x4] sm:$0xf]
      %v284 = vld [vmem:[%s232 + $0x8] sm:$0xf]
      %v285 = vld [vmem:[%s232 + $0xc] sm:$0xf]
      %v286 = vld [vmem:[%s232 + $0x10] sm:$0xf]
      %v287 = vld [vmem:[%s232 + $0x14] sm:$0xf]
      %v288 = vld [vmem:[%s232 + $0x18] sm:$0xf]
      %v289 = vld [vmem:[%s232 + $0x1c] sm:$0xf]
      %v290 = vld [vmem:[%s232 + $0x20] sm:$0xf]
      %v291 = vld [vmem:[%s232 + $0x24] sm:$0xf]
      %v292 = vld [vmem:[%s232 + $0x28] sm:$0xf]
      %v293 = vld [vmem:[%s232 + $0x2c] sm:$0xf]
      %v294 = vld [vmem:[%s232 + $0x30] sm:$0xf]
      %v295 = vld [vmem:[%s232 + $0x34] sm:$0xf]
      %v296 = vld [vmem:[%s232 + $0x38] sm:$0xf]
      %v297 = vld [vmem:[%s232 + $0x3c] sm:$0xf]
      %v298 = vld [vmem:[%s232 + $0x40] sm:$0xf]
      %v299 = vld [vmem:[%s232 + $0x44] sm:$0xf]
      %v300 = vld [vmem:[%s232 + $0x48] sm:$0xf]
      %v301 = vld [vmem:[%s232 + $0x4c] sm:$0xf]
      %v302 = vld [vmem:[%s232 + $0x50] sm:$0xf]
      %v303 = vld [vmem:[%s232 + $0x54] sm:$0xf]
      %v304 = vld [vmem:[%s232 + $0x58] sm:$0xf]
      %v305 = vld [vmem:[%s232 + $0x5c] sm:$0xf]
      %v306 = vld [vmem:[%s232 + $0x60] sm:$0xf]
      %v307 = vld [vmem:[%s232 + $0x64] sm:$0xf]
      %v308 = vld [vmem:[%s232 + $0x68] sm:$0xf]
      %v309 = vld [vmem:[%s232 + $0x6c] sm:$0xf]
      %v310 = vld [vmem:[%s232 + $0x70] sm:$0xf]
      %v311 = vld [vmem:[%s232 + $0x74] sm:$0xf]
      %v312 = vld [vmem:[%s232 + $0x78] sm:$0xf]
      %v313 = vld [vmem:[%s232 + $0x7c] sm:$0xf]
      %v314 = vld [vmem:[%s232 + $0x80] sm:$0xf]
      %v315 = vld [vmem:[%s232 + $0x84] sm:$0xf]
      %v316 = vld [vmem:[%s232 + $0x88] sm:$0xf]
      %v317 = vld [vmem:[%s232 + $0x8c] sm:$0xf]
      %v318 = vld [vmem:[%s232 + $0x90] sm:$0xf]
      %v319 = vld [vmem:[%s232 + $0x94] sm:$0xf]
      %v320 = vld [vmem:[%s232 + $0x98] sm:$0xf]
      %v321 = vld [vmem:[%s232 + $0x9c] sm:$0xf]
      %v322 = vld [vmem:[%s232 + $0xa0] sm:$0xf]
      %v323 = vld [vmem:[%s232 + $0xa4] sm:$0xf]
      %v324 = vld [vmem:[%s232 + $0xa8] sm:$0xf]
      %v325 = vld [vmem:[%s232 + $0xac] sm:$0xf]
      %v326 = vld [vmem:[%s232 + $0xb0] sm:$0xf]
      %v327 = vld [vmem:[%s232 + $0xb4] sm:$0xf]
      %v328 = vld [vmem:[%s232 + $0xb8] sm:$0xf]
      %v329 = vld [vmem:[%s232 + $0xbc] sm:$0xf]
      %v330 = vld [vmem:[%s232 + $0xc0] sm:$0xf]
      %v331 = vld [vmem:[%s232 + $0xc4] sm:$0xf]
      %v332 = vld [vmem:[%s232 + $0xc8] sm:$0xf]
      %v333 = vld [vmem:[%s232 + $0xcc] sm:$0xf]
      %v334 = vld [vmem:[%s232 + $0xd0] sm:$0xf]
      %v335 = vld [vmem:[%s232 + $0xd4] sm:$0xf]
      %v336 = vld [vmem:[%s232 + $0xd8] sm:$0xf]
      %v337 = vld [vmem:[%s232 + $0xdc] sm:$0xf]
      %v338 = vld [vmem:[%s232 + $0xe0] sm:$0xf]
      %v339 = vld [vmem:[%s232 + $0xe4] sm:$0xf]
      %v340 = vld [vmem:[%s232 + $0xe8] sm:$0xf]
      %v341 = vld [vmem:[%s232 + $0xec] sm:$0xf]
      %v342 = vld [vmem:[%s232 + $0xf0] sm:$0xf]
      %v343 = vld [vmem:[%s232 + $0xf4] sm:$0xf]
      %v344 = vld [vmem:[%s232 + $0xf8] sm:$0xf]
      %v345 = vld [vmem:[%s232 + $0xfc] sm:$0xf]
      %v378 = vunpack.c.l.b16 %v250
      %v379 = vunpack.c.h.b16 %v250
      %v380 = vunpack.c.l.b16 %v251
      %v381 = vunpack.c.h.b16 %v251
      %v382 = vunpack.c.l.b16 %v252
      %v383 = vunpack.c.h.b16 %v252
      %v384 = vunpack.c.l.b16 %v253
      %v385 = vunpack.c.h.b16 %v253
      %v386 = vunpack.c.l.b16 %v254
      %v387 = vunpack.c.h.b16 %v254
      %v388 = vunpack.c.l.b16 %v255
      %v389 = vunpack.c.h.b16 %v255
      %v390 = vunpack.c.l.b16 %v256
      %v391 = vunpack.c.h.b16 %v256
      %v392 = vunpack.c.l.b16 %v257
      %v393 = vunpack.c.h.b16 %v257
      %v394 = vunpack.c.l.b16 %v258
      %v395 = vunpack.c.h.b16 %v258
      %v396 = vunpack.c.l.b16 %v259
      %v397 = vunpack.c.h.b16 %v259
      %v398 = vunpack.c.l.b16 %v260
      %v399 = vunpack.c.h.b16 %v260
      %v400 = vunpack.c.l.b16 %v261
      %v401 = vunpack.c.h.b16 %v261
      %v402 = vunpack.c.l.b16 %v262
      %v403 = vunpack.c.h.b16 %v262
      %v404 = vunpack.c.l.b16 %v263
      %v405 = vunpack.c.h.b16 %v263
      %v406 = vunpack.c.l.b16 %v264
      %v407 = vunpack.c.h.b16 %v264
      %v408 = vunpack.c.l.b16 %v265
      %v409 = vunpack.c.h.b16 %v265
      %v410 = vunpack.c.l.b16 %v266
      %v411 = vunpack.c.h.b16 %v266
      %v412 = vunpack.c.l.b16 %v267
      %v413 = vunpack.c.h.b16 %v267
      %v414 = vunpack.c.l.b16 %v268
      %v415 = vunpack.c.h.b16 %v268
      %v416 = vunpack.c.l.b16 %v269
      %v417 = vunpack.c.h.b16 %v269
      %v418 = vunpack.c.l.b16 %v270
      %v419 = vunpack.c.h.b16 %v270
      %v420 = vunpack.c.l.b16 %v271
      %v421 = vunpack.c.h.b16 %v271
      %v422 = vunpack.c.l.b16 %v272
      %v423 = vunpack.c.h.b16 %v272
      %v424 = vunpack.c.l.b16 %v273
      %v425 = vunpack.c.h.b16 %v273
      %v426 = vunpack.c.l.b16 %v274
      %v427 = vunpack.c.h.b16 %v274
      %v428 = vunpack.c.l.b16 %v275
      %v429 = vunpack.c.h.b16 %v275
      %v430 = vunpack.c.l.b16 %v276
      %v431 = vunpack.c.h.b16 %v276
      %v432 = vunpack.c.l.b16 %v277
      %v433 = vunpack.c.h.b16 %v277
      %v434 = vunpack.c.l.b16 %v278
      %v435 = vunpack.c.h.b16 %v278
      %v436 = vunpack.c.l.b16 %v279
      %v437 = vunpack.c.h.b16 %v279
      %v438 = vunpack.c.l.b16 %v280
      %v439 = vunpack.c.h.b16 %v280
      %v440 = vunpack.c.l.b16 %v281
      %v441 = vunpack.c.h.b16 %v281
      %v442 = vpack.c.b16 %v382, %v378
      %v443 = vpack.c.b16 %v383, %v379
      %v444 = vpack.c.b16 %v384, %v380
      %v445 = vpack.c.b16 %v385, %v381
      %v446 = vpack.c.b16 %v390, %v386
      %v447 = vpack.c.b16 %v391, %v387
      %v448 = vpack.c.b16 %v392, %v388
      %v449 = vpack.c.b16 %v393, %v389
      %v450 = vpack.c.b16 %v398, %v394
      %v451 = vpack.c.b16 %v399, %v395
      %v452 = vpack.c.b16 %v400, %v396
      %v453 = vpack.c.b16 %v401, %v397
      %v454 = vpack.c.b16 %v406, %v402
      %v455 = vpack.c.b16 %v407, %v403
      %v456 = vpack.c.b16 %v408, %v404
      %v457 = vpack.c.b16 %v409, %v405
      %v458 = vpack.c.b16 %v414, %v410
      %v459 = vpack.c.b16 %v415, %v411
      %v460 = vpack.c.b16 %v416, %v412
      %v461 = vpack.c.b16 %v417, %v413
      %v462 = vpack.c.b16 %v422, %v418
      %v463 = vpack.c.b16 %v423, %v419
      %v464 = vpack.c.b16 %v424, %v420
      %v465 = vpack.c.b16 %v425, %v421
      %v466 = vpack.c.b16 %v430, %v426
      %v467 = vpack.c.b16 %v431, %v427
      %v468 = vpack.c.b16 %v432, %v428
      %v469 = vpack.c.b16 %v433, %v429
      %v470 = vpack.c.b16 %v438, %v434
      %v471 = vpack.c.b16 %v439, %v435
      %v472 = vpack.c.b16 %v440, %v436
      %v473 = vpack.c.b16 %v441, %v437
      %v570 = vunpack.c.l.b16 %v282
      %v571 = vunpack.c.l.b16 %v283
      %v572 = vunpack.c.l.b16 %v284
      %v573 = vunpack.c.l.b16 %v285
      %v574 = vunpack.c.l.b16 %v286
      %v575 = vunpack.c.l.b16 %v287
      %v576 = vunpack.c.l.b16 %v288
      %v577 = vunpack.c.l.b16 %v289
      %v578 = vunpack.c.l.b16 %v290
      %v579 = vunpack.c.l.b16 %v291
      %v580 = vunpack.c.l.b16 %v292
      %v581 = vunpack.c.l.b16 %v293
      %v582 = vunpack.c.l.b16 %v294
      %v583 = vunpack.c.l.b16 %v295
      %v584 = vunpack.c.l.b16 %v296
      %v585 = vunpack.c.l.b16 %v297
      %v586 = vunpack.c.l.b16 %v298
      %v587 = vunpack.c.l.b16 %v299
      %v588 = vunpack.c.l.b16 %v300
      %v589 = vunpack.c.l.b16 %v301
      %v590 = vunpack.c.l.b16 %v302
      %v591 = vunpack.c.l.b16 %v303
      %v592 = vunpack.c.l.b16 %v304
      %v593 = vunpack.c.l.b16 %v305
      %v594 = vunpack.c.l.b16 %v306
      %v595 = vunpack.c.l.b16 %v307
      %v596 = vunpack.c.l.b16 %v308
      %v597 = vunpack.c.l.b16 %v309
      %v598 = vunpack.c.l.b16 %v310
      %v599 = vunpack.c.l.b16 %v311
      %v600 = vunpack.c.l.b16 %v312
      %v601 = vunpack.c.l.b16 %v313
      %v602 = vunpack.c.l.b16 %v314
      %v603 = vunpack.c.l.b16 %v315
      %v604 = vunpack.c.l.b16 %v316
      %v605 = vunpack.c.l.b16 %v317
      %v606 = vunpack.c.l.b16 %v318
      %v607 = vunpack.c.l.b16 %v319
      %v608 = vunpack.c.l.b16 %v320
      %v609 = vunpack.c.l.b16 %v321
      %v610 = vunpack.c.l.b16 %v322
      %v611 = vunpack.c.l.b16 %v323
      %v612 = vunpack.c.l.b16 %v324
      %v613 = vunpack.c.l.b16 %v325
      %v614 = vunpack.c.l.b16 %v326
      %v615 = vunpack.c.l.b16 %v327
      %v616 = vunpack.c.l.b16 %v328
      %v617 = vunpack.c.l.b16 %v329
      %v618 = vunpack.c.l.b16 %v330
      %v619 = vunpack.c.l.b16 %v331
      %v620 = vunpack.c.l.b16 %v332
      %v621 = vunpack.c.l.b16 %v333
      %v622 = vunpack.c.l.b16 %v334
      %v623 = vunpack.c.l.b16 %v335
      %v624 = vunpack.c.l.b16 %v336
      %v625 = vunpack.c.l.b16 %v337
      %v626 = vunpack.c.l.b16 %v338
      %v627 = vunpack.c.l.b16 %v339
      %v628 = vunpack.c.l.b16 %v340
      %v629 = vunpack.c.l.b16 %v341
      %v630 = vunpack.c.l.b16 %v342
      %v631 = vunpack.c.l.b16 %v343
      %v632 = vunpack.c.l.b16 %v344
      %v633 = vunpack.c.l.b16 %v345
      %v634 = vpack.c.b16 %v571, %v570
      %v635 = vpack.c.b16 %v573, %v572
      %v636 = vpack.c.b16 %v575, %v574
      %v637 = vpack.c.b16 %v577, %v576
      %v638 = vpack.c.b16 %v579, %v578
      %v639 = vpack.c.b16 %v581, %v580
      %v640 = vpack.c.b16 %v583, %v582
      %v641 = vpack.c.b16 %v585, %v584
      %v642 = vpack.c.b16 %v587, %v586
      %v643 = vpack.c.b16 %v589, %v588
      %v644 = vpack.c.b16 %v591, %v590
      %v645 = vpack.c.b16 %v593, %v592
      %v646 = vpack.c.b16 %v595, %v594
      %v647 = vpack.c.b16 %v597, %v596
      %v648 = vpack.c.b16 %v599, %v598
      %v649 = vpack.c.b16 %v601, %v600
      %v650 = vpack.c.b16 %v603, %v602
      %v651 = vpack.c.b16 %v605, %v604
      %v652 = vpack.c.b16 %v607, %v606
      %v653 = vpack.c.b16 %v609, %v608
      %v654 = vpack.c.b16 %v611, %v610
      %v655 = vpack.c.b16 %v613, %v612
      %v656 = vpack.c.b16 %v615, %v614
      %v657 = vpack.c.b16 %v617, %v616
      %v658 = vpack.c.b16 %v619, %v618
      %v659 = vpack.c.b16 %v621, %v620
      %v660 = vpack.c.b16 %v623, %v622
      %v661 = vpack.c.b16 %v625, %v624
      %v662 = vpack.c.b16 %v627, %v626
      %v663 = vpack.c.b16 %v629, %v628
      %v664 = vpack.c.b16 %v631, %v630
      %v665 = vpack.c.b16 %v633, %v632
      %698 = vmatprep.subr.bf16.mxu0 0
      %699 = vmatpush1.bf16.msra.mxu0 %v634
      %700 = vmatprep.subr.bf16.mxu0 0
      %701 = vmatpush1.bf16.msra.mxu0 %v635
      %702 = vmatprep.subr.bf16.mxu0 0
      %703 = vmatpush1.bf16.msra.mxu0 %v636
      %704 = vmatprep.subr.bf16.mxu0 0
      %705 = vmatpush1.bf16.msra.mxu0 %v637
      %706 = vmatprep.subr.bf16.mxu0 0
      %707 = vmatpush1.bf16.msra.mxu0 %v638
      %708 = vmatprep.subr.bf16.mxu0 0
      %709 = vmatpush1.bf16.msra.mxu0 %v639
      %710 = vmatprep.subr.bf16.mxu0 0
      %711 = vmatpush1.bf16.msra.mxu0 %v640
      %712 = vmatprep.subr.bf16.mxu0 0
      %713 = vmatpush1.bf16.msra.mxu0 %v641
      %714 = vmatprep.subr.bf16.mxu0 0
      %715 = vmatpush1.bf16.msra.mxu0 %v642
      %716 = vmatprep.subr.bf16.mxu0 0
      %717 = vmatpush1.bf16.msra.mxu0 %v643
      %718 = vmatprep.subr.bf16.mxu0 0
      %719 = vmatpush1.bf16.msra.mxu0 %v644
      %720 = vmatprep.subr.bf16.mxu0 0
      %721 = vmatpush1.bf16.msra.mxu0 %v645
      %722 = vmatprep.subr.bf16.mxu0 0
      %723 = vmatpush1.bf16.msra.mxu0 %v646
      %724 = vmatprep.subr.bf16.mxu0 0
      %725 = vmatpush1.bf16.msra.mxu0 %v647
      %726 = vmatprep.subr.bf16.mxu0 0
      %727 = vmatpush1.bf16.msra.mxu0 %v648
      %728 = vmatprep.subr.bf16.mxu0 0
      %729 = vmatpush1.bf16.msra.mxu0 %v649
      %730 = vmatprep.mubr.bf16.mxu0 %v443
      %731 = vmatmul.mubr.bf16.gmra.mrb[0].mxu0 %v442
      %v732 = vpop.f32.mrb[0].mxu0
      %v733 = vadd.f32 0.0, %v732
      %v734 = vpop.f32.mrb[0].mxu0
      %v735 = vpop.f32.mrb[0].mxu0
      %v736 = vadd.f32 0.0, %v735
      %v737 = vpop.f32.mrb[0].mxu0
      %738 = vmatprep.mubr.bf16.mxu0 %v447
      %739 = vmatmul.mubr.bf16.gmra.mrb[0].mxu0 %v446
      %v740 = vpop.f32.mrb[0].mxu0
      %v741 = vadd.f32 0.0, %v740
      %v742 = vpop.f32.mrb[0].mxu0
      %v743 = vpop.f32.mrb[0].mxu0
      %v744 = vadd.f32 0.0, %v743
      %v745 = vpop.f32.mrb[0].mxu0
      %746 = vmatprep.mubr.bf16.mxu0 %v451
      %747 = vmatmul.mubr.bf16.gmra.mrb[0].mxu0 %v450
      %v748 = vpop.f32.mrb[0].mxu0
      %v749 = vadd.f32 0.0, %v748
      %v750 = vpop.f32.mrb[0].mxu0
      %v751 = vpop.f32.mrb[0].mxu0
      %v752 = vadd.f32 0.0, %v751
      %v753 = vpop.f32.mrb[0].mxu0
      %754 = vmatprep.mubr.bf16.mxu0 %v455
      %755 = vmatmul.mubr.bf16.gmra.mrb[0].mxu0 %v454
      %v756 = vpop.f32.mrb[0].mxu0
      %v757 = vadd.f32 0.0, %v756
      %v758 = vpop.f32.mrb[0].mxu0
      %v759 = vpop.f32.mrb[0].mxu0
      %v760 = vadd.f32 0.0, %v759
      %v761 = vpop.f32.mrb[0].mxu0
      %762 = vmatprep.mubr.bf16.mxu0 %v459
      %763 = vmatmul.mubr.bf16.gmra.mrb[0].mxu0 %v458
      %v764 = vpop.f32.mrb[0].mxu0
      %v765 = vadd.f32 0.0, %v764
      %v766 = vpop.f32.mrb[0].mxu0
      %v767 = vpop.f32.mrb[0].mxu0
      %v768 = vadd.f32 0.0, %v767
      %v769 = vpop.f32.mrb[0].mxu0
      %770 = vmatprep.mubr.bf16.mxu0 %v463
      %771 = vmatmul.mubr.bf16.gmra.mrb[0].mxu0 %v462
      %v772 = vpop.f32.mrb[0].mxu0
      %v773 = vadd.f32 0.0, %v772
      %v774 = vpop.f32.mrb[0].mxu0
      %v775 = vpop.f32.mrb[0].mxu0
      %v776 = vadd.f32 0.0, %v775
      %v777 = vpop.f32.mrb[0].mxu0
      %778 = vmatprep.mubr.bf16.mxu0 %v467
      %779 = vmatmul.mubr.bf16.gmra.mrb[0].mxu0 %v466
      %v780 = vpop.f32.mrb[0].mxu0
      %v781 = vadd.f32 0.0, %v780
      %v782 = vpop.f32.mrb[0].mxu0
      %v783 = vpop.f32.mrb[0].mxu0
      %v784 = vadd.f32 0.0, %v783
      %v785 = vpop.f32.mrb[0].mxu0
      %786 = vmatprep.mubr.bf16.mxu0 %v471
      %787 = vmatmul.mubr.bf16.gmra.mrb[0].mxu0 %v470
      %v788 = vpop.f32.mrb[0].mxu0
      %v789 = vadd.f32 0.0, %v788
      %v790 = vpop.f32.mrb[0].mxu0
      %v791 = vpop.f32.mrb[0].mxu0
      %v792 = vadd.f32 0.0, %v791
      %v793 = vpop.f32.mrb[0].mxu0
      %794 = vdwg.mxu0
      %795 = vmatprep.subr.bf16.mxu0 0
      %796 = vmatpush1.bf16.msra.mxu0 %v650
      %797 = vmatprep.subr.bf16.mxu0 0
      %798 = vmatpush1.bf16.msra.mxu0 %v651
      %799 = vmatprep.subr.bf16.mxu0 0
      %800 = vmatpush1.bf16.msra.mxu0 %v652
      %801 = vmatprep.subr.bf16.mxu0 0
      %802 = vmatpush1.bf16.msra.mxu0 %v653
      %803 = vmatprep.subr.bf16.mxu0 0
      %804 = vmatpush1.bf16.msra.mxu0 %v654
      %805 = vmatprep.subr.bf16.mxu0 0
      %806 = vmatpush1.bf16.msra.mxu0 %v655
      %807 = vmatprep.subr.bf16.mxu0 0
      %808 = vmatpush1.bf16.msra.mxu0 %v656
      %809 = vmatprep.subr.bf16.mxu0 0
      %810 = vmatpush1.bf16.msra.mxu0 %v657
      %811 = vmatprep.subr.bf16.mxu0 0
      %812 = vmatpush1.bf16.msra.mxu0 %v658
      %813 = vmatprep.subr.bf16.mxu0 0
      %814 = vmatpush1.bf16.msra.mxu0 %v659
      %815 = vmatprep.subr.bf16.mxu0 0
      %816 = vmatpush1.bf16.msra.mxu0 %v660
      %817 = vmatprep.subr.bf16.mxu0 0
      %818 = vmatpush1.bf16.msra.mxu0 %v661
      %819 = vmatprep.subr.bf16.mxu0 0
      %820 = vmatpush1.bf16.msra.mxu0 %v662
      %821 = vmatprep.subr.bf16.mxu0 0
      %822 = vmatpush1.bf16.msra.mxu0 %v663
      %823 = vmatprep.subr.bf16.mxu0 0
      %824 = vmatpush1.bf16.msra.mxu0 %v664
      %825 = vmatprep.subr.bf16.mxu0 0
      %826 = vmatpush1.bf16.msra.mxu0 %v665
      %827 = vmatprep.mubr.bf16.mxu0 %v445
      %828 = vmatmul.mubr.bf16.gmra.mrb[0].mxu0 %v444
      %v829 = vpop.f32.mrb[0].mxu0
      %v830 = vadd.f32 %v733, %v829
      %v831 = vpop.f32.mrb[0].mxu0
      %v832 = vpop.f32.mrb[0].mxu0
      %v833 = vadd.f32 %v736, %v832
      %v834 = vpop.f32.mrb[0].mxu0
      %835 = vmatprep.mubr.bf16.mxu0 %v449
      %836 = vmatmul.mubr.bf16.gmra.mrb[0].mxu0 %v448
      %v837 = vpop.f32.mrb[0].mxu0
      %v838 = vadd.f32 %v741, %v837
      %v839 = vpop.f32.mrb[0].mxu0
      %v840 = vpop.f32.mrb[0].mxu0
      %v841 = vadd.f32 %v744, %v840
      %v842 = vpop.f32.mrb[0].mxu0
      %843 = vmatprep.mubr.bf16.mxu0 %v453
      %844 = vmatmul.mubr.bf16.gmra.mrb[0].mxu0 %v452
      %v845 = vpop.f32.mrb[0].mxu0
      %v846 = vadd.f32 %v749, %v845
      %v847 = vpop.f32.mrb[0].mxu0
      %v848 = vpop.f32.mrb[0].mxu0
      %v849 = vadd.f32 %v752, %v848
      %v850 = vpop.f32.mrb[0].mxu0
      %851 = vmatprep.mubr.bf16.mxu0 %v457
      %852 = vmatmul.mubr.bf16.gmra.mrb[0].mxu0 %v456
      %v853 = vpop.f32.mrb[0].mxu0
      %v854 = vadd.f32 %v757, %v853
      %v855 = vpop.f32.mrb[0].mxu0
      %v856 = vpop.f32.mrb[0].mxu0
      %v857 = vadd.f32 %v760, %v856
      %v858 = vpop.f32.mrb[0].mxu0
      %859 = vmatprep.mubr.bf16.mxu0 %v461
      %860 = vmatmul.mubr.bf16.gmra.mrb[0].mxu0 %v460
      %v861 = vpop.f32.mrb[0].mxu0
      %v862 = vadd.f32 %v765, %v861
      %v863 = vpop.f32.mrb[0].mxu0
      %v864 = vpop.f32.mrb[0].mxu0
      %v865 = vadd.f32 %v768, %v864
      %v866 = vpop.f32.mrb[0].mxu0
      %867 = vmatprep.mubr.bf16.mxu0 %v465
      %868 = vmatmul.mubr.bf16.gmra.mrb[0].mxu0 %v464
      %v869 = vpop.f32.mrb[0].mxu0
      %v870 = vadd.f32 %v773, %v869
      %v871 = vpop.f32.mrb[0].mxu0
      %v872 = vpop.f32.mrb[0].mxu0
      %v873 = vadd.f32 %v776, %v872
      %v874 = vpop.f32.mrb[0].mxu0
      %875 = vmatprep.mubr.bf16.mxu0 %v469
      %876 = vmatmul.mubr.bf16.gmra.mrb[0].mxu0 %v468
      %v877 = vpop.f32.mrb[0].mxu0
      %v878 = vadd.f32 %v781, %v877
      %v879 = vpop.f32.mrb[0].mxu0
      %v880 = vpop.f32.mrb[0].mxu0
      %v881 = vadd.f32 %v784, %v880
      %v882 = vpop.f32.mrb[0].mxu0
      %883 = vmatprep.mubr.bf16.mxu0 %v473
      %884 = vmatmul.mubr.bf16.gmra.mrb[0].mxu0 %v472
      %v885 = vpop.f32.mrb[0].mxu0
      %v886 = vadd.f32 %v789, %v885
      %v887 = vpop.f32.mrb[0].mxu0
      %v888 = vpop.f32.mrb[0].mxu0
      %v889 = vadd.f32 %v792, %v888
      %v890 = vpop.f32.mrb[0].mxu0
      %891 = vdwg.mxu0
      %892 = vst [vmem:[%s241] sm:$0xff] %v830
      %893 = vst [vmem:[%s241 + $0x8] sm:$0xff] %v833
      %894 = vst [vmem:[%s241 + $0x10] sm:$0xff] %v838
      %895 = vst [vmem:[%s241 + $0x18] sm:$0xff] %v841
      %896 = vst [vmem:[%s241 + $0x20] sm:$0xff] %v846
      %897 = vst [vmem:[%s241 + $0x28] sm:$0xff] %v849
      %898 = vst [vmem:[%s241 + $0x30] sm:$0xff] %v854
      %899 = vst [vmem:[%s241 + $0x38] sm:$0xff] %v857
      %900 = vst [vmem:[%s241 + $0x40] sm:$0xff] %v862
      %901 = vst [vmem:[%s241 + $0x48] sm:$0xff] %v865
      %902 = vst [vmem:[%s241 + $0x50] sm:$0xff] %v870
      %903 = vst [vmem:[%s241 + $0x58] sm:$0xff] %v873
      %904 = vst [vmem:[%s241 + $0x60] sm:$0xff] %v878
      %905 = vst [vmem:[%s241 + $0x68] sm:$0xff] %v881
      %906 = vst [vmem:[%s241 + $0x70] sm:$0xff] %v886
      %907 = vst [vmem:[%s241 + $0x78] sm:$0xff] %v889
      %v908 = vadd.f32 %v830, %v833
      %v909 = vadd.f32 %v908, %v838
      %v910 = vadd.f32 %v909, %v841
      %v911 = vadd.f32 %v910, %v846
      %v912 = vadd.f32 %v911, %v849
      %v913 = vadd.f32 %v912, %v854
      %v914 = vadd.f32 %v913, %v857
      %v915 = vadd.f32 %v914, %v862
      %v916 = vadd.f32 %v915, %v865
      %v917 = vadd.f32 %v916, %v870
      %v918 = vadd.f32 %v917, %v873
      %v919 = vadd.f32 %v918, %v878
      %v920 = vadd.f32 %v919, %v881
      %v921 = vadd.f32 %v920, %v886
      %v922 = vadd.f32 %v921, %v889
      %v923 = vrot.slane %v922, 4
      %v924 = vadd.f32 %v922, %v923
      %v925 = vrot.slane %v924, 2
      %v926 = vadd.f32 %v924, %v925
      %v927 = vrot.slane %v926, 1
      %v928 = vadd.f32 %v926, %v927
      %v929 = vmul.f32 %v830, %v830
      %v930 = vmul.f32 %v833, %v833
      %v931 = vmul.f32 %v838, %v838
      %v932 = vmul.f32 %v841, %v841
      %v933 = vmul.f32 %v846, %v846
      %v934 = vmul.f32 %v849, %v849
      %v935 = vmul.f32 %v854, %v854
      %v936 = vmul.f32 %v857, %v857
      %v937 = vmul.f32 %v862, %v862
      %v938 = vmul.f32 %v865, %v865
      %v939 = vmul.f32 %v870, %v870
      %v940 = vmul.f32 %v873, %v873
      %v941 = vmul.f32 %v878, %v878
      %v942 = vmul.f32 %v881, %v881
      %v943 = vmul.f32 %v886, %v886
      %v944 = vmul.f32 %v889, %v889
      %v945 = vadd.f32 %v929, %v930
      %v946 = vadd.f32 %v945, %v931
      %v947 = vadd.f32 %v946, %v932
      %v948 = vadd.f32 %v947, %v933
      %v949 = vadd.f32 %v948, %v934
      %v950 = vadd.f32 %v949, %v935
      %v951 = vadd.f32 %v950, %v936
      %v952 = vadd.f32 %v951, %v937
      %v953 = vadd.f32 %v952, %v938
      %v954 = vadd.f32 %v953, %v939
      %v955 = vadd.f32 %v954, %v940
      %v956 = vadd.f32 %v955, %v941
      %v957 = vadd.f32 %v956, %v942
      %v958 = vadd.f32 %v957, %v943
      %v959 = vadd.f32 %v958, %v944
      %v960 = vrot.slane %v959, 4
      %v961 = vadd.f32 %v959, %v960
      %v962 = vrot.slane %v961, 2
      %v963 = vadd.f32 %v961, %v962
      %v964 = vrot.slane %v963, 1
      %v965 = vadd.f32 %v963, %v964
      %vm966 = vcmask 1040384
      %v967 = vsel %vm966, %v928, %v965
      %968 = vst [vmem:[%s247] sm:$0x3] %v967
      %s969 = smul.u32 16, %s20
      %p970 = scmp.lt.s32.totalorder %s19, 3
      %s971 = scalar_select %p970, %s19, 3
      %p972 = scmp.lt.s32.totalorder %s969, 15
      %s973 = scalar_select %p972, %s969, 15
      %s974 = smul.addr %s971, 16
      %s975 = sadd.s32 %s973, %s974
      %s976 = smul.addr %s975, 8
      %s977 = scalar_lea.vmem %s2, %s976
      %s978 = sadd.s32 %s19, %s20
      %p979 = scmp.lt.s32.totalorder %s978, 3
      %s980 = scalar_select %p979, %s978, 3
      %s981 = smul.addr %s980, 2
      %s982 = scalar_lea.vmem %s3, %s981
      // Predicated region
      $region29: #{generator_forward.11} parent=27 // pred_check
        %p983 = pneg %p101
      $region30: #{generator_forward.11} parent=27 // pred_check_branch
        %985 = sbr.rel (%p983) target = $region32
      $region31: #{generator_forward.11} parent=27 // pred_region
        %s986 = smul.u32 16, %s20
      $region32: #{generator_forward.11} parent=27 // pred_fallthru
        _
      // Predicated region
      $region33: #{generator_forward.11} parent=27 // pred_check
        %p987 = pneg %p129
      $region34: #{generator_forward.11} parent=27 // pred_check_branch
        %989 = sbr.rel (%p987) target = $region36
      $region35: #{generator_forward.11} parent=27 // pred_region
        %s990 = sadd.s32 %s19, %s20
      $region36: #{generator_forward.11} parent=27 // pred_fallthru
        _
    $region28: #{generator_forward.11} parent=5 // pred_fallthru
      _
    %p991 = scmp.le.s32.totalorder 2, %s10
    // Predicated region
    $region37: #{generator_forward.11} parent=5 // pred_check
      %p992 = pneg %p991
    $region38: #{generator_forward.11} parent=5 // pred_check_branch
      %994 = sbr.rel (%p992) target = $region40
    $region39: #{generator_forward.11} parent=5 // pred_region
      %s995 = ssub.s32 %s10, 2
      // Predicated region
      $region41: #{generator_forward.11} parent=39 // pred_check
        %p996 = pneg %p107
      $region42: #{generator_forward.11} parent=39 // pred_check_branch
        %998 = sbr.rel (%p996) target = $region44
      $region43: #{generator_forward.11} parent=39 // pred_region
        %s999 = smul.u32 16, %s22
        %p1000 = scmp.lt.s32.totalorder %s21, 3
        %s1001 = scalar_select %p1000, %s21, 3
        %p1002 = scmp.lt.s32.totalorder %s999, 15
        %s1003 = scalar_select %p1002, %s999, 15
        %s1004 = smul.addr %s1001, 16
        %s1005 = sadd.s32 %s1003, %s1004
        %s1006 = smul.addr %s1005, 8
        %s1007 = scalar_lea.vmem %s2, %s1006
      $region44: #{generator_forward.11} parent=39 // pred_fallthru
        _
      // Predicated region
      $region45: #{generator_forward.11} parent=39 // pred_check
        %p1008 = pneg %p135
      $region46: #{generator_forward.11} parent=39 // pred_check_branch
        %1010 = sbr.rel (%p1008) target = $region48
      $region47: #{generator_forward.11} parent=39 // pred_region
        %s1011 = sadd.s32 %s21, %s22
        %p1012 = scmp.lt.s32.totalorder %s1011, 3
        %s1013 = scalar_select %p1012, %s1011, 3
        %s1014 = smul.addr %s1013, 2
        %s1015 = scalar_lea.vmem %s3, %s1014
      $region48: #{generator_forward.11} parent=39 // pred_fallthru
        _
    $region40: #{generator_forward.11} parent=5 // pred_fallthru
      _
  $region6: #{generator_forward.11} parent=0 // loop_footer
    %s14 = sadd.s32 1, %s10
  $region7: #{generator_forward.11} parent=0 // loop_footer_branch
    %9 = sbr.rel target = $region3
  $region8: #{generator_forward.11} parent=0 // loop_exit
    _

// kernel: generator_forward.12
$region0: #{generator_forward.12}
  #allocation0 [shape = 'u32[]', space=smem, size = 0x4, offset = 0x4, fixed_abs, tag = 'smem constant byte address 0x4 - core index']
  #allocation1 [shape = 'u32[144,128]{1,0:T(1,128)}', space=vmem, size = 0x12000, scoped, tag = 'internal scratch']
  %s0 = inlined_call_operand.vmem [shape: f32[512,128], index: 0, kind: input, shape index: {}]
  %s1 = inlined_call_operand.vmem [shape: f32[1,128], index: 1, kind: input, shape index: {}]
  %s2 = inlined_call_operand.vmem [shape: f32[1,128], index: 2, kind: input, shape index: {}]
  %s3 = inlined_call_operand.vmem [shape: bf16[512,128], index: 3, kind: output, shape index: {}]
  %s4 = sld [smem:[#allocation0]]
  $region22: #{generator_forward.12} parent=0
    _
  %s6 = ssub.s32 1, %s4
  %s7 = scalar_select 0, %s6, %s4
  // Predicated region
  $region2: #{generator_forward.12} parent=0 // pred_check
    _
  $region3: #{generator_forward.12} parent=0 // pred_check_branch
    %9 = sbr.rel (0) target = $region5
  $region4: #{generator_forward.12} parent=0 // pred_region
    _
  $region5: #{generator_forward.12} parent=0 // pred_fallthru
    _
  // Predicated region
  $region6: #{generator_forward.12} parent=0 // pred_check
    _
  $region7: #{generator_forward.12} parent=0 // pred_check_branch
    %11 = sbr.rel (0) target = $region9
  $region8: #{generator_forward.12} parent=0 // pred_region
    _
  $region9: #{generator_forward.12} parent=0 // pred_fallthru
    _
  // Predicated region
  $region10: #{generator_forward.12} parent=0 // pred_check
    _
  $region11: #{generator_forward.12} parent=0 // pred_check_branch
    %13 = sbr.rel (0) target = $region13
  $region12: #{generator_forward.12} parent=0 // pred_region
    _
  $region13: #{generator_forward.12} parent=0 // pred_fallthru
    _
  %v14 = vld [vmem:[%s0] sm:$0xff]
  %v15 = vld [vmem:[%s0 + $0x8] sm:$0xff]
  %v16 = vld [vmem:[%s0 + $0x10] sm:$0xff]
  %v17 = vld [vmem:[%s0 + $0x18] sm:$0xff]
  %v18 = vld [vmem:[%s0 + $0x20] sm:$0xff]
  %v19 = vld [vmem:[%s0 + $0x28] sm:$0xff]
  %v20 = vld [vmem:[%s0 + $0x30] sm:$0xff]
  %v21 = vld [vmem:[%s0 + $0x38] sm:$0xff]
  %v22 = vld [vmem:[%s0 + $0x40] sm:$0xff]
  %v23 = vld [vmem:[%s0 + $0x48] sm:$0xff]
  %v24 = vld [vmem:[%s0 + $0x50] sm:$0xff]
  %v25 = vld [vmem:[%s0 + $0x58] sm:$0xff]
  %v26 = vld [vmem:[%s0 + $0x60] sm:$0xff]
  %v27 = vld [vmem:[%s0 + $0x68] sm:$0xff]
  %v28 = vld [vmem:[%s0 + $0x70] sm:$0xff]
  %v29 = vld [vmem:[%s0 + $0x78] sm:$0xff]
  %v30 = vld [vmem:[%s0 + $0x80] sm:$0xff]
  %v31 = vld [vmem:[%s0 + $0x88] sm:$0xff]
  %v32 = vld [vmem:[%s0 + $0x90] sm:$0xff]
  %v33 = vld [vmem:[%s0 + $0x98] sm:$0xff]
  %v34 = vld [vmem:[%s0 + $0xa0] sm:$0xff]
  %v35 = vld [vmem:[%s0 + $0xa8] sm:$0xff]
  %v36 = vld [vmem:[%s0 + $0xb0] sm:$0xff]
  %v37 = vld [vmem:[%s0 + $0xb8] sm:$0xff]
  %v38 = vld [vmem:[%s0 + $0xc0] sm:$0xff]
  %v39 = vld [vmem:[%s0 + $0xc8] sm:$0xff]
  %v40 = vld [vmem:[%s0 + $0xd0] sm:$0xff]
  %v41 = vld [vmem:[%s0 + $0xd8] sm:$0xff]
  %v42 = vld [vmem:[%s0 + $0xe0] sm:$0xff]
  %v43 = vld [vmem:[%s0 + $0xe8] sm:$0xff]
  %v44 = vld [vmem:[%s0 + $0xf0] sm:$0xff]
  %v45 = vld [vmem:[%s0 + $0xf8] sm:$0xff]
  %v46 = vld [vmem:[%s0 + $0x100] sm:$0xff]
  %v47 = vld [vmem:[%s0 + $0x108] sm:$0xff]
  %v48 = vld [vmem:[%s0 + $0x110] sm:$0xff]
  %v49 = vld [vmem:[%s0 + $0x118] sm:$0xff]
  %v50 = vld [vmem:[%s0 + $0x120] sm:$0xff]
  %v51 = vld [vmem:[%s0 + $0x128] sm:$0xff]
  %v52 = vld [vmem:[%s0 + $0x130] sm:$0xff]
  %v53 = vld [vmem:[%s0 + $0x138] sm:$0xff]
  %v54 = vld [vmem:[%s0 + $0x140] sm:$0xff]
  %v55 = vld [vmem:[%s0 + $0x148] sm:$0xff]
  %v56 = vld [vmem:[%s0 + $0x150] sm:$0xff]
  %v57 = vld [vmem:[%s0 + $0x158] sm:$0xff]
  %v58 = vld [vmem:[%s0 + $0x160] sm:$0xff]
  %v59 = vld [vmem:[%s0 + $0x168] sm:$0xff]
  %v60 = vld [vmem:[%s0 + $0x170] sm:$0xff]
  %v61 = vld [vmem:[%s0 + $0x178] sm:$0xff]
  %v62 = vld [vmem:[%s0 + $0x180] sm:$0xff]
  %v63 = vld [vmem:[%s0 + $0x188] sm:$0xff]
  %v64 = vld [vmem:[%s0 + $0x190] sm:$0xff]
  %v65 = vld [vmem:[%s0 + $0x198] sm:$0xff]
  %v66 = vld [vmem:[%s0 + $0x1a0] sm:$0xff]
  %v67 = vld [vmem:[%s0 + $0x1a8] sm:$0xff]
  %v68 = vld [vmem:[%s0 + $0x1b0] sm:$0xff]
  %v69 = vld [vmem:[%s0 + $0x1b8] sm:$0xff]
  %v70 = vld [vmem:[%s0 + $0x1c0] sm:$0xff]
  %v71 = vld [vmem:[%s0 + $0x1c8] sm:$0xff]
  %v72 = vld [vmem:[%s0 + $0x1d0] sm:$0xff]
  %v73 = vld [vmem:[%s0 + $0x1d8] sm:$0xff]
  %v74 = vld [vmem:[%s0 + $0x1e0] sm:$0xff]
  %v75 = vld [vmem:[%s0 + $0x1e8] sm:$0xff]
  %v76 = vld [vmem:[%s0 + $0x1f0] sm:$0xff]
  %v77 = vld [vmem:[%s0 + $0x1f8] sm:$0xff]
  %v78 = vld [vmem:[%s1] sm:$0x1]
  %v80 = vlaneseq
  %v81 = vshrl.u32 %v80, 7
  %v82 = vsub.s32 0, %v81
  %v83 = vrot.slane %v78, %v82
  %v85 = vmul.f32 %v14, %v83
  %v86 = vmul.f32 %v15, %v83
  %v87 = vmul.f32 %v16, %v83
  %v88 = vmul.f32 %v17, %v83
  %v89 = vmul.f32 %v18, %v83
  %v90 = vmul.f32 %v19, %v83
  %v91 = vmul.f32 %v20, %v83
  %v92 = vmul.f32 %v21, %v83
  %v93 = vmul.f32 %v22, %v83
  %v94 = vmul.f32 %v23, %v83
  %v95 = vmul.f32 %v24, %v83
  %v96 = vmul.f32 %v25, %v83
  %v97 = vmul.f32 %v26, %v83
  %v98 = vmul.f32 %v27, %v83
  %v99 = vmul.f32 %v28, %v83
  %v100 = vmul.f32 %v29, %v83
  %v101 = vmul.f32 %v30, %v83
  %v102 = vmul.f32 %v31, %v83
  %v103 = vmul.f32 %v32, %v83
  %v104 = vmul.f32 %v33, %v83
  %v105 = vmul.f32 %v34, %v83
  %v106 = vmul.f32 %v35, %v83
  %v107 = vmul.f32 %v36, %v83
  %v108 = vmul.f32 %v37, %v83
  %v109 = vmul.f32 %v38, %v83
  %v110 = vmul.f32 %v39, %v83
  %v111 = vmul.f32 %v40, %v83
  %v112 = vmul.f32 %v41, %v83
  %v113 = vmul.f32 %v42, %v83
  %v114 = vmul.f32 %v43, %v83
  %v115 = vmul.f32 %v44, %v83
  %v116 = vmul.f32 %v45, %v83
  %v117 = vmul.f32 %v46, %v83
  %v118 = vmul.f32 %v47, %v83
  %v119 = vmul.f32 %v48, %v83
  %v120 = vmul.f32 %v49, %v83
  %v121 = vmul.f32 %v50, %v83
  %v122 = vmul.f32 %v51, %v83
  %v123 = vmul.f32 %v52, %v83
  %v124 = vmul.f32 %v53, %v83
  %v125 = vmul.f32 %v54, %v83
  %v126 = vmul.f32 %v55, %v83
  %v127 = vmul.f32 %v56, %v83
  %v128 = vmul.f32 %v57, %v83
  %v129 = vmul.f32 %v58, %v83
  %v130 = vmul.f32 %v59, %v83
  %v131 = vmul.f32 %v60, %v83
  %v132 = vmul.f32 %v61, %v83
  %v133 = vmul.f32 %v62, %v83
  %v134 = vmul.f32 %v63, %v83
  %v135 = vmul.f32 %v64, %v83
  %v136 = vmul.f32 %v65, %v83
  %v137 = vmul.f32 %v66, %v83
  %v138 = vmul.f32 %v67, %v83
  %v139 = vmul.f32 %v68, %v83
  %v140 = vmul.f32 %v69, %v83
  %v141 = vmul.f32 %v70, %v83
  %v142 = vmul.f32 %v71, %v83
  %v143 = vmul.f32 %v72, %v83
  %v144 = vmul.f32 %v73, %v83
  %v145 = vmul.f32 %v74, %v83
  %v146 = vmul.f32 %v75, %v83
  %v147 = vmul.f32 %v76, %v83
  %v148 = vmul.f32 %v77, %v83
  %v149 = vld [vmem:[%s2] sm:$0x1]
  %v151 = vlaneseq
  %v152 = vshrl.u32 %v151, 7
  %v153 = vsub.s32 0, %v152
  %v154 = vrot.slane %v149, %v153
  %v156 = vadd.f32 %v85, %v154
  %v157 = vadd.f32 %v86, %v154
  %v158 = vadd.f32 %v87, %v154
  %v159 = vadd.f32 %v88, %v154
  %v160 = vadd.f32 %v89, %v154
  %v161 = vadd.f32 %v90, %v154
  %v162 = vadd.f32 %v91, %v154
  %v163 = vadd.f32 %v92, %v154
  %v164 = vadd.f32 %v93, %v154
  %v165 = vadd.f32 %v94, %v154
  %v166 = vadd.f32 %v95, %v154
  %v167 = vadd.f32 %v96, %v154
  %v168 = vadd.f32 %v97, %v154
  %v169 = vadd.f32 %v98, %v154
  %v170 = vadd.f32 %v99, %v154
  %v171 = vadd.f32 %v100, %v154
  %v172 = vadd.f32 %v101, %v154
  %v173 = vadd.f32 %v102, %v154
  %v174 = vadd.f32 %v103, %v154
  %v175 = vadd.f32 %v104, %v154
  %v176 = vadd.f32 %v105, %v154
  %v177 = vadd.f32 %v106, %v154
  %v178 = vadd.f32 %v107, %v154
  %v179 = vadd.f32 %v108, %v154
  %v180 = vadd.f32 %v109, %v154
  %v181 = vadd.f32 %v110, %v154
  %v182 = vadd.f32 %v111, %v154
  %v183 = vadd.f32 %v112, %v154
  %v184 = vadd.f32 %v113, %v154
  %v185 = vadd.f32 %v114, %v154
  %v186 = vadd.f32 %v115, %v154
  %v187 = vadd.f32 %v116, %v154
  %v188 = vadd.f32 %v117, %v154
  %v189 = vadd.f32 %v118, %v154
  %v190 = vadd.f32 %v119, %v154
  %v191 = vadd.f32 %v120, %v154
  %v192 = vadd.f32 %v121, %v154
  %v193 = vadd.f32 %v122, %v154
  %v194 = vadd.f32 %v123, %v154
  %v195 = vadd.f32 %v124, %v154
  %v196 = vadd.f32 %v125, %v154
  %v197 = vadd.f32 %v126, %v154
  %v198 = vadd.f32 %v127, %v154
  %v199 = vadd.f32 %v128, %v154
  %v200 = vadd.f32 %v129, %v154
  %v201 = vadd.f32 %v130, %v154
  %v202 = vadd.f32 %v131, %v154
  %v203 = vadd.f32 %v132, %v154
  %v204 = vadd.f32 %v133, %v154
  %v205 = vadd.f32 %v134, %v154
  %v206 = vadd.f32 %v135, %v154
  %v207 = vadd.f32 %v136, %v154
  %v208 = vadd.f32 %v137, %v154
  %v209 = vadd.f32 %v138, %v154
  %v210 = vadd.f32 %v139, %v154
  %v211 = vadd.f32 %v140, %v154
  %v212 = vadd.f32 %v141, %v154
  %v213 = vadd.f32 %v142, %v154
  %v214 = vadd.f32 %v143, %v154
  %v215 = vadd.f32 %v144, %v154
  %v216 = vadd.f32 %v145, %v154
  %v217 = vadd.f32 %v146, %v154
  %v218 = vadd.f32 %v147, %v154
  %v219 = vadd.f32 %v148, %v154
  %v220 = vmax.f32 %v156, 0.0
  %v221 = vmax.f32 %v157, 0.0
  %v222 = vmax.f32 %v158, 0.0
  %v223 = vmax.f32 %v159, 0.0
  %v224 = vmax.f32 %v160, 0.0
  %v225 = vmax.f32 %v161, 0.0
  %v226 = vmax.f32 %v162, 0.0
  %v227 = vmax.f32 %v163, 0.0
  %v228 = vmax.f32 %v164, 0.0
  %v229 = vmax.f32 %v165, 0.0
  %v230 = vmax.f32 %v166, 0.0
  %v231 = vmax.f32 %v167, 0.0
  %v232 = vmax.f32 %v168, 0.0
  %v233 = vmax.f32 %v169, 0.0
  %v234 = vmax.f32 %v170, 0.0
  %v235 = vmax.f32 %v171, 0.0
  %v236 = vmax.f32 %v172, 0.0
  %v237 = vmax.f32 %v173, 0.0
  %v238 = vmax.f32 %v174, 0.0
  %v239 = vmax.f32 %v175, 0.0
  %v240 = vmax.f32 %v176, 0.0
  %v241 = vmax.f32 %v177, 0.0
  %v242 = vmax.f32 %v178, 0.0
  %v243 = vmax.f32 %v179, 0.0
  %v244 = vmax.f32 %v180, 0.0
  %v245 = vmax.f32 %v181, 0.0
  %v246 = vmax.f32 %v182, 0.0
  %v247 = vmax.f32 %v183, 0.0
  %v248 = vmax.f32 %v184, 0.0
  %v249 = vmax.f32 %v185, 0.0
  %v250 = vmax.f32 %v186, 0.0
  %v251 = vmax.f32 %v187, 0.0
  %v252 = vmax.f32 %v188, 0.0
  %v253 = vmax.f32 %v189, 0.0
  %v254 = vmax.f32 %v190, 0.0
  %v255 = vmax.f32 %v191, 0.0
  %v256 = vmax.f32 %v192, 0.0
  %v257 = vmax.f32 %v193, 0.0
  %v258 = vmax.f32 %v194, 0.0
  %v259 = vmax.f32 %v195, 0.0
  %v260 = vmax.f32 %v196, 0.0
  %v261 = vmax.f32 %v197, 0.0
  %v262 = vmax.f32 %v198, 0.0
  %v263 = vmax.f32 %v199, 0.0
  %v264 = vmax.f32 %v200, 0.0
  %v265 = vmax.f32 %v201, 0.0
  %v266 = vmax.f32 %v202, 0.0
  %v267 = vmax.f32 %v203, 0.0
  %v268 = vmax.f32 %v204, 0.0
  %v269 = vmax.f32 %v205, 0.0
  %v270 = vmax.f32 %v206, 0.0
  %v271 = vmax.f32 %v207, 0.0
  %v272 = vmax.f32 %v208, 0.0
  %v273 = vmax.f32 %v209, 0.0
  %v274 = vmax.f32 %v210, 0.0
  %v275 = vmax.f32 %v211, 0.0
  %v276 = vmax.f32 %v212, 0.0
  %v277 = vmax.f32 %v213, 0.0
  %v278 = vmax.f32 %v214, 0.0
  %v279 = vmax.f32 %v215, 0.0
  %v280 = vmax.f32 %v216, 0.0
  %v281 = vmax.f32 %v217, 0.0
  %v282 = vmax.f32 %v218, 0.0
  %v283 = vmax.f32 %v219, 0.0
  %v284 = vpack.c.bf16 %v221, %v220
  %v285 = vpack.c.bf16 %v223, %v222
  %v286 = vpack.c.bf16 %v225, %v224
  %v287 = vpack.c.bf16 %v227, %v226
  %v288 = vpack.c.bf16 %v229, %v228
  %v289 = vpack.c.bf16 %v231, %v230
  %v290 = vpack.c.bf16 %v233, %v232
  %v291 = vpack.c.bf16 %v235, %v234
  %v292 = vpack.c.bf16 %v237, %v236
  %v293 = vpack.c.bf16 %v239, %v238
  %v294 = vpack.c.bf16 %v241, %v240
  %v295 = vpack.c.bf16 %v243, %v242
  %v296 = vpack.c.bf16 %v245, %v244
  %v297 = vpack.c.bf16 %v247, %v246
  %v298 = vpack.c.bf16 %v249, %v248
  %v299 = vpack.c.bf16 %v251, %v250
  %v300 = vpack.c.bf16 %v253, %v252
  %v301 = vpack.c.bf16 %v255, %v254
  %v302 = vpack.c.bf16 %v257, %v256
  %v303 = vpack.c.bf16 %v259, %v258
  %v304 = vpack.c.bf16 %v261, %v260
  %v305 = vpack.c.bf16 %v263, %v262
  %v306 = vpack.c.bf16 %v265, %v264
  %v307 = vpack.c.bf16 %v267, %v266
  %v308 = vpack.c.bf16 %v269, %v268
  %v309 = vpack.c.bf16 %v271, %v270
  %v310 = vpack.c.bf16 %v273, %v272
  %v311 = vpack.c.bf16 %v275, %v274
  %v312 = vpack.c.bf16 %v277, %v276
  %v313 = vpack.c.bf16 %v279, %v278
  %v314 = vpack.c.bf16 %v281, %v280
  %v315 = vpack.c.bf16 %v283, %v282
  %v348 = vunpack.c.l.b16 %v284
  %v349 = vunpack.c.h.b16 %v284
  %v350 = vunpack.c.l.b16 %v285
  %v351 = vunpack.c.h.b16 %v285
  %v352 = vunpack.c.l.b16 %v286
  %v353 = vunpack.c.h.b16 %v286
  %v354 = vunpack.c.l.b16 %v287
  %v355 = vunpack.c.h.b16 %v287
  %v356 = vunpack.c.l.b16 %v288
  %v357 = vunpack.c.h.b16 %v288
  %v358 = vunpack.c.l.b16 %v289
  %v359 = vunpack.c.h.b16 %v289
  %v360 = vunpack.c.l.b16 %v290
  %v361 = vunpack.c.h.b16 %v290
  %v362 = vunpack.c.l.b16 %v291
  %v363 = vunpack.c.h.b16 %v291
  %v364 = vunpack.c.l.b16 %v292
  %v365 = vunpack.c.h.b16 %v292
  %v366 = vunpack.c.l.b16 %v293
  %v367 = vunpack.c.h.b16 %v293
  %v368 = vunpack.c.l.b16 %v294
  %v369 = vunpack.c.h.b16 %v294
  %v370 = vunpack.c.l.b16 %v295
  %v371 = vunpack.c.h.b16 %v295
  %v372 = vunpack.c.l.b16 %v296
  %v373 = vunpack.c.h.b16 %v296
  %v374 = vunpack.c.l.b16 %v297
  %v375 = vunpack.c.h.b16 %v297
  %v376 = vunpack.c.l.b16 %v298
  %v377 = vunpack.c.h.b16 %v298
  %v378 = vunpack.c.l.b16 %v299
  %v379 = vunpack.c.h.b16 %v299
  %v380 = vunpack.c.l.b16 %v300
  %v381 = vunpack.c.h.b16 %v300
  %v382 = vunpack.c.l.b16 %v301
  %v383 = vunpack.c.h.b16 %v301
  %v384 = vunpack.c.l.b16 %v302
  %v385 = vunpack.c.h.b16 %v302
  %v386 = vunpack.c.l.b16 %v303
  %v387 = vunpack.c.h.b16 %v303
  %v388 = vunpack.c.l.b16 %v304
  %v389 = vunpack.c.h.b16 %v304
  %v390 = vunpack.c.l.b16 %v305
  %v391 = vunpack.c.h.b16 %v305
  %v392 = vunpack.c.l.b16 %v306
  %v393 = vunpack.c.h.b16 %v306
  %v394 = vunpack.c.l.b16 %v307
  %v395 = vunpack.c.h.b16 %v307
  %v396 = vunpack.c.l.b16 %v308
  %v397 = vunpack.c.h.b16 %v308
  %v398 = vunpack.c.l.b16 %v309
  %v399 = vunpack.c.h.b16 %v309
  %v400 = vunpack.c.l.b16 %v310
  %v401 = vunpack.c.h.b16 %v310
  %v402 = vunpack.c.l.b16 %v311
  %v403 = vunpack.c.h.b16 %v311
  %v404 = vunpack.c.l.b16 %v312
  %v405 = vunpack.c.h.b16 %v312
  %v406 = vunpack.c.l.b16 %v313
  %v407 = vunpack.c.h.b16 %v313
  %v408 = vunpack.c.l.b16 %v314
  %v409 = vunpack.c.h.b16 %v314
  %v410 = vunpack.c.l.b16 %v315
  %v411 = vunpack.c.h.b16 %v315
  %v412 = vpack.c.b16 %v348, %v348
  %v413 = vpack.c.b16 %v349, %v349
  %v414 = vpack.c.b16 %v350, %v350
  %v415 = vpack.c.b16 %v351, %v351
  %v416 = vpack.c.b16 %v352, %v352
  %v417 = vpack.c.b16 %v353, %v353
  %v418 = vpack.c.b16 %v354, %v354
  %v419 = vpack.c.b16 %v355, %v355
  %v420 = vpack.c.b16 %v356, %v356
  %v421 = vpack.c.b16 %v357, %v357
  %v422 = vpack.c.b16 %v358, %v358
  %v423 = vpack.c.b16 %v359, %v359
  %v424 = vpack.c.b16 %v360, %v360
  %v425 = vpack.c.b16 %v361, %v361
  %v426 = vpack.c.b16 %v362, %v362
  %v427 = vpack.c.b16 %v363, %v363
  %v428 = vpack.c.b16 %v364, %v364
  %v429 = vpack.c.b16 %v365, %v365
  %v430 = vpack.c.b16 %v366, %v366
  %v431 = vpack.c.b16 %v367, %v367
  %v432 = vpack.c.b16 %v368, %v368
  %v433 = vpack.c.b16 %v369, %v369
  %v434 = vpack.c.b16 %v370, %v370
  %v435 = vpack.c.b16 %v371, %v371
  %v436 = vpack.c.b16 %v372, %v372
  %v437 = vpack.c.b16 %v373, %v373
  %v438 = vpack.c.b16 %v374, %v374
  %v439 = vpack.c.b16 %v375, %v375
  %v440 = vpack.c.b16 %v376, %v376
  %v441 = vpack.c.b16 %v377, %v377
  %v442 = vpack.c.b16 %v378, %v378
  %v443 = vpack.c.b16 %v379, %v379
  %v444 = vpack.c.b16 %v380, %v380
  %v445 = vpack.c.b16 %v381, %v381
  %v446 = vpack.c.b16 %v382, %v382
  %v447 = vpack.c.b16 %v383, %v383
  %v448 = vpack.c.b16 %v384, %v384
  %v449 = vpack.c.b16 %v385, %v385
  %v450 = vpack.c.b16 %v386, %v386
  %v451 = vpack.c.b16 %v387, %v387
  %v452 = vpack.c.b16 %v388, %v388
  %v453 = vpack.c.b16 %v389, %v389
  %v454 = vpack.c.b16 %v390, %v390
  %v455 = vpack.c.b16 %v391, %v391
  %v456 = vpack.c.b16 %v392, %v392
  %v457 = vpack.c.b16 %v393, %v393
  %v458 = vpack.c.b16 %v394, %v394
  %v459 = vpack.c.b16 %v395, %v395
  %v460 = vpack.c.b16 %v396, %v396
  %v461 = vpack.c.b16 %v397, %v397
  %v462 = vpack.c.b16 %v398, %v398
  %v463 = vpack.c.b16 %v399, %v399
  %v464 = vpack.c.b16 %v400, %v400
  %v465 = vpack.c.b16 %v401, %v401
  %v466 = vpack.c.b16 %v402, %v402
  %v467 = vpack.c.b16 %v403, %v403
  %v468 = vpack.c.b16 %v404, %v404
  %v469 = vpack.c.b16 %v405, %v405
  %v470 = vpack.c.b16 %v406, %v406
  %v471 = vpack.c.b16 %v407, %v407
  %v472 = vpack.c.b16 %v408, %v408
  %v473 = vpack.c.b16 %v409, %v409
  %v474 = vpack.c.b16 %v410, %v410
  %v475 = vpack.c.b16 %v411, %v411
  %540 = vst [vmem:[%s3] sm:$0xf] %v412
  %541 = vst [vmem:[%s3 + $0x4] sm:$0xf] %v413
  %542 = vst [vmem:[%s3 + $0x8] sm:$0xf] %v414
  %543 = vst [vmem:[%s3 + $0xc] sm:$0xf] %v415
  %544 = vst [vmem:[%s3 + $0x10] sm:$0xf] %v416
  %545 = vst [vmem:[%s3 + $0x14] sm:$0xf] %v417
  %546 = vst [vmem:[%s3 + $0x18] sm:$0xf] %v418
  %547 = vst [vmem:[%s3 + $0x1c] sm:$0xf] %v419
  %548 = vst [vmem:[%s3 + $0x20] sm:$0xf] %v420
  %549 = vst [vmem:[%s3 + $0x24] sm:$0xf] %v421
  %550 = vst [vmem:[%s3 + $0x28] sm:$0xf] %v422
  %551 = vst [vmem:[%s3 + $0x2c] sm:$0xf] %v423
  %552 = vst [vmem:[%s3 + $0x30] sm:$0xf] %v424
  %553 = vst [vmem:[%s3 + $0x34] sm:$0xf] %v425
  %554 = vst [vmem:[%s3 + $0x38] sm:$0xf] %v426
  %555 = vst [vmem:[%s3 + $0x3c] sm:$0xf] %v427
  %556 = vst [vmem:[%s3 + $0x40] sm:$0xf] %v428
  %557 = vst [vmem:[%s3 + $0x44] sm:$0xf] %v429
  %558 = vst [vmem:[%s3 + $0x48] sm:$0xf] %v430
  %559 = vst [vmem:[%s3 + $0x4c] sm:$0xf] %v431
  %560 = vst [vmem:[%s3 + $0x50] sm:$0xf] %v432
  %561 = vst [vmem:[%s3 + $0x54] sm:$0xf] %v433
  %562 = vst [vmem:[%s3 + $0x58] sm:$0xf] %v434
  %563 = vst [vmem:[%s3 + $0x5c] sm:$0xf] %v435
  %564 = vst [vmem:[%s3 + $0x60] sm:$0xf] %v436
  %565 = vst [vmem:[%s3 + $0x64] sm:$0xf] %v437
  %566 = vst [vmem:[%s3 + $0x68] sm:$0xf] %v438
  %567 = vst [vmem:[%s3 + $0x6c] sm:$0xf] %v439
  %568 = vst [vmem:[%s3 + $0x70] sm:$0xf] %v440
  %569 = vst [vmem:[%s3 + $0x74] sm:$0xf] %v441
  %570 = vst [vmem:[%s3 + $0x78] sm:$0xf] %v442
  %571 = vst [vmem:[%s3 + $0x7c] sm:$0xf] %v443
  %572 = vst [vmem:[%s3 + $0x80] sm:$0xf] %v444
  %573 = vst [vmem:[%s3 + $0x84] sm:$0xf] %v445
  %574 = vst [vmem:[%s3 + $0x88] sm:$0xf] %v446
  %575 = vst [vmem:[%s3 + $0x8c] sm:$0xf] %v447
  %576 = vst [vmem:[%s3 + $0x90] sm:$0xf] %v448
  %577 = vst [vmem:[%s3 + $0x94] sm:$0xf] %v449
  %578 = vst [vmem:[%s3 + $0x98] sm:$0xf] %v450
  %579 = vst [vmem:[%s3 + $0x9c] sm:$0xf] %v451
  %580 = vst [vmem:[%s3 + $0xa0] sm:$0xf] %v452
  %581 = vst [vmem:[%s3 + $0xa4] sm:$0xf] %v453
  %582 = vst [vmem:[%s3 + $0xa8] sm:$0xf] %v454
  %583 = vst [vmem:[%s3 + $0xac] sm:$0xf] %v455
  %584 = vst [vmem:[%s3 + $0xb0] sm:$0xf] %v456
  %585 = vst [vmem:[%s3 + $0xb4] sm:$0xf] %v457
  %586 = vst [vmem:[%s3 + $0xb8] sm:$0xf] %v458
  %587 = vst [vmem:[%s3 + $0xbc] sm:$0xf] %v459
  %588 = vst [vmem:[%s3 + $0xc0] sm:$0xf] %v460
  %589 = vst [vmem:[%s3 + $0xc4] sm:$0xf] %v461
  %590 = vst [vmem:[%s3 + $0xc8] sm:$0xf] %v462
  %591 = vst [vmem:[%s3 + $0xcc] sm:$0xf] %v463
  %592 = vst [vmem:[%s3 + $0xd0] sm:$0xf] %v464
  %593 = vst [vmem:[%s3 + $0xd4] sm:$0xf] %v465
  %594 = vst [vmem:[%s3 + $0xd8] sm:$0xf] %v466
  %595 = vst [vmem:[%s3 + $0xdc] sm:$0xf] %v467
  %596 = vst [vmem:[%s3 + $0xe0] sm:$0xf] %v468
  %597 = vst [vmem:[%s3 + $0xe4] sm:$0xf] %v469
  %598 = vst [vmem:[%s3 + $0xe8] sm:$0xf] %v470
  %599 = vst [vmem:[%s3 + $0xec] sm:$0xf] %v471
  %600 = vst [vmem:[%s3 + $0xf0] sm:$0xf] %v472
  %601 = vst [vmem:[%s3 + $0xf4] sm:$0xf] %v473
  %602 = vst [vmem:[%s3 + $0xf8] sm:$0xf] %v474
  %603 = vst [vmem:[%s3 + $0xfc] sm:$0xf] %v475
  // Predicated region
  $region14: #{generator_forward.12} parent=0 // pred_check
    _
  $region15: #{generator_forward.12} parent=0 // pred_check_branch
    %605 = sbr.rel (0) target = $region17
  $region16: #{generator_forward.12} parent=0 // pred_region
    _
  $region17: #{generator_forward.12} parent=0 // pred_fallthru
    _
  // Predicated region
  $region18: #{generator_forward.12} parent=0 // pred_check
    _
  $region19: #{generator_forward.12} parent=0 // pred_check_branch
    %607 = sbr.rel (0) target = $region21
  $region20: #{generator_forward.12} parent=0 // pred_region
    _
  $region21: #{generator_forward.12} parent=0 // pred_fallthru
    _

// kernel: generator_forward.13
$region0: #{generator_forward.13}
  #allocation0 [shape = 'u32[]', space=smem, size = 0x4, offset = 0x4, fixed_abs, tag = 'smem constant byte address 0x4 - core index']
  #allocation1 [shape = 'u32[144,128]{1,0:T(1,128)}', space=vmem, size = 0x12000, scoped, tag = 'internal scratch']
  %s0 = inlined_call_operand.vmem [shape: bf16[4,392,256], index: 0, kind: input, shape index: {}]
  %s1 = inlined_call_operand.vmem [shape: bf16[4,256,128], index: 1, kind: input, shape index: {}]
  %s2 = inlined_call_operand.vmem [shape: f32[4,392,128], index: 2, kind: output, shape index: {}]
  %s3 = sld [smem:[#allocation0]]
  $region41: #{generator_forward.13} parent=0
    _
  %s5 = ssub.s32 1, %s3
  %s6 = scalar_select 0, %s5, %s3
  loop: start=0, step=1, limit=6
  $region2: #{generator_forward.13} parent=0 // loop_pre_header
    _
  $region3: #{generator_forward.13} parent=0 // loop_header
    %s8 = sphi 0, %s12
    %p9 = scmp.ge.s32.totalorder %s8, 6
    %s15 = sphi 0, %s27
    %s16 = sphi 0, %s23
    %s17 = sphi 0, %s15
    %s18 = sphi 0, %s16
    %s19 = sphi 0, %s17
    %s20 = sphi 0, %s18
    %s32 = sphi 0, %s34
    %s35 = sphi 0, %s32
    %s36 = sphi 0, %s35
    %s52 = sphi 0, %s36
    %s58 = sphi 0, %s60
    %s61 = sphi 0, %s58
    %s62 = sphi 0, %s61
    %s78 = sphi 0, %s62
    %s86 = sphi 0, %s88
    %s89 = sphi 0, %s86
    %s90 = sphi 0, %s89
    %s106 = sphi 0, %s90
  $region4: #{generator_forward.13} parent=0 // loop_header_branch
    %11 = sbr.rel (%p9) target = $region8
  $region5: #{generator_forward.13} parent=0 // loop_body
    %s13 = ssub.s32 %s8, 1
    %s14 = ssub.s32 %s8, 2
    %s21 = sadd.s32 1, %s16
    %p22 = scmp.ge.s32.totalorder %s21, 1
    %s23 = scalar_select %p22, 0, %s21
    %s24 = sadd.s32 1, %s15
    %s25 = scalar_select %p22, %s24, %s15
    %p26 = scmp.ge.s32.totalorder %s25, 4
    %s27 = scalar_select %p26, 0, %s25
    %s28 = ssub.s32 %s15, %s27
    %s29 = ssub.s32 %s16, %s23
    %s30 = sor.u32 %s28, %s29
    %p31 = scmp.eq.s32.totalorder %s30, 0
    %s33 = sadd.s32 %s32, 1
    %s34 = scalar_select %p31, %s32, %s33
    %p37 = pneg %p31
    %p38 = scmp.eq.s32.totalorder %s8, 3
    %p39 = por %p37, %p38
    %p40 = scmp.ne.s32.totalorder %s32, %s35
    %p41 = scmp.eq.s32.totalorder %s8, 0
    %p42 = por %p40, %p41
    %p43 = scmp.ne.s32.totalorder %s32, %s35
    %p44 = scmp.eq.s32.totalorder %s13, 3
    %p45 = por %p43, %p44
    %p46 = scmp.ne.s32.totalorder %s35, %s36
    %p47 = scmp.eq.s32.totalorder %s13, 0
    %p48 = por %p46, %p47
    %p49 = scmp.ne.s32.totalorder %s35, %s36
    %p50 = scmp.eq.s32.totalorder %s14, 3
    %p51 = por %p49, %p50
    %p53 = scmp.ne.s32.totalorder %s36, %s52
    %p54 = scmp.eq.s32.totalorder %s14, 0
    %p55 = por %p53, %p54
    %s56 = ssub.s32 %s15, %s27
    %p57 = scmp.eq.s32.totalorder %s56, 0
    %s59 = sadd.s32 %s58, 1
    %s60 = scalar_select %p57, %s58, %s59
    %p63 = pneg %p57
    %p64 = scmp.eq.s32.totalorder %s8, 3
    %p65 = por %p63, %p64
    %p66 = scmp.ne.s32.totalorder %s58, %s61
    %p67 = scmp.eq.s32.totalorder %s8, 0
    %p68 = por %p66, %p67
    %p69 = scmp.ne.s32.totalorder %s58, %s61
    %p70 = scmp.eq.s32.totalorder %s13, 3
    %p71 = por %p69, %p70
    %p72 = scmp.ne.s32.totalorder %s61, %s62
    %p73 = scmp.eq.s32.totalorder %s13, 0
    %p74 = por %p72, %p73
    %p75 = scmp.ne.s32.totalorder %s61, %s62
    %p76 = scmp.eq.s32.totalorder %s14, 3
    %p77 = por %p75, %p76
    %p79 = scmp.ne.s32.totalorder %s62, %s78
    %p80 = scmp.eq.s32.totalorder %s14, 0
    %p81 = por %p79, %p80
    %s82 = ssub.s32 %s15, %s27
    %s83 = ssub.s32 %s16, %s23
    %s84 = sor.u32 %s82, %s83
    %p85 = scmp.eq.s32.totalorder %s84, 0
    %s87 = sadd.s32 %s86, 1
    %s88 = scalar_select %p85, %s86, %s87
    %p91 = pneg %p85
    %p92 = scmp.eq.s32.totalorder %s8, 3
    %p93 = por %p91, %p92
    %p94 = scmp.ne.s32.totalorder %s86, %s89
    %p95 = scmp.eq.s32.totalorder %s8, 0
    %p96 = por %p94, %p95
    %p97 = scmp.ne.s32.totalorder %s86, %s89
    %p98 = scmp.eq.s32.totalorder %s13, 3
    %p99 = por %p97, %p98
    %p100 = scmp.ne.s32.totalorder %s89, %s90
    %p101 = scmp.eq.s32.totalorder %s13, 0
    %p102 = por %p100, %p101
    %p103 = scmp.ne.s32.totalorder %s89, %s90
    %p104 = scmp.eq.s32.totalorder %s14, 3
    %p105 = por %p103, %p104
    %p107 = scmp.ne.s32.totalorder %s90, %s106
    %p108 = scmp.eq.s32.totalorder %s14, 0
    %p109 = por %p107, %p108
    %p110 = scmp.le.s32.totalorder 1, %s8
    %p111 = scmp.lt.s32.totalorder %s8, 5
    %p112 = pnand %p110, %p111
    %p113 = pneg %p112
    // Predicated region
    $region9: #{generator_forward.13} parent=5 // pred_check
      _
    $region10: #{generator_forward.13} parent=5 // pred_check_branch
      %115 = sbr.rel (%p112) target = $region12
    $region11: #{generator_forward.13} parent=5 // pred_region
      %s116 = ssub.s32 %s8, 1
    $region12: #{generator_forward.13} parent=5 // pred_fallthru
      _
    %p117 = scmp.lt.s32.totalorder %s8, 4
    // Predicated region
    $region13: #{generator_forward.13} parent=5 // pred_check
      %p118 = pneg %p117
    $region14: #{generator_forward.13} parent=5 // pred_check_branch
      %120 = sbr.rel (%p118) target = $region16
    $region15: #{generator_forward.13} parent=5 // pred_region
      // Predicated region
      $region17: #{generator_forward.13} parent=15 // pred_check
        %p121 = pneg %p42
      $region18: #{generator_forward.13} parent=15 // pred_check_branch
        %123 = sbr.rel (%p121) target = $region20
      $region19: #{generator_forward.13} parent=15 // pred_region
        %s124 = smul.u32 49, %s16
        %p125 = scmp.lt.s32.totalorder %s15, 3
        %s126 = scalar_select %p125, %s15, 3
        %p127 = scmp.lt.s32.totalorder %s124, 48
        %s128 = scalar_select %p127, %s124, 48
        %s129 = smul.addr %s128, 2
        %s130 = smul.addr %s126, 98
        %s131 = sadd.s32 %s129, %s130
        %s132 = smul.addr %s131, 4
        %s133 = scalar_lea.vmem %s0, %s132
        %s134 = smul.u32 49, %s16
      $region20: #{generator_forward.13} parent=15 // pred_fallthru
        _
      // Predicated region
      $region21: #{generator_forward.13} parent=15 // pred_check
        %p135 = pneg %p68
      $region22: #{generator_forward.13} parent=15 // pred_check_branch
        %137 = sbr.rel (%p135) target = $region24
      $region23: #{generator_forward.13} parent=15 // pred_region
        %p138 = scmp.lt.s32.totalorder %s15, 3
        %s139 = scalar_select %p138, %s15, 3
        %s140 = smul.addr %s139, 32
        %s141 = smul.addr %s140, 4
        %s142 = scalar_lea.vmem %s1, %s141
      $region24: #{generator_forward.13} parent=15 // pred_fallthru
        _
    $region16: #{generator_forward.13} parent=5 // pred_fallthru
      _
    %p143 = scmp.le.s32.totalorder 1, %s8
    %p144 = scmp.lt.s32.totalorder %s8, 5
    %p145 = pnand %p143, %p144
    %p146 = pneg %p145
    // Predicated region
    $region25: #{generator_forward.13} parent=5 // pred_check
      _
    $region26: #{generator_forward.13} parent=5 // pred_check_branch
      %148 = sbr.rel (%p145) target = $region28
    $region27: #{generator_forward.13} parent=5 // pred_region
      %s149 = ssub.s32 %s8, 1
      %s150 = smul.u32 49, %s18
      %p151 = scmp.lt.s32.totalorder %s17, 3
      %s152 = scalar_select %p151, %s17, 3
      %p153 = scmp.lt.s32.totalorder %s150, 48
      %s154 = scalar_select %p153, %s150, 48
      %s155 = smul.addr %s154, 2
      %s156 = smul.addr %s152, 98
      %s157 = sadd.s32 %s155, %s156
      %s158 = smul.addr %s157, 4
      %s159 = scalar_lea.vmem %s0, %s158
      %p160 = pneg %p48
      %p161 = pneg %p45
      %p162 = scmp.lt.s32.totalorder %s17, 3
      %s163 = scalar_select %p162, %s17, 3
      %s164 = smul.addr %s163, 32
      %s165 = smul.addr %s164, 4
      %s166 = scalar_lea.vmem %s1, %s165
      %p167 = pneg %p74
      %p168 = pneg %p71
      %p169 = pneg %p102
      %p170 = pneg %p99
      %s171 = smul.u32 49, %s18
      %p172 = scmp.lt.s32.totalorder %s17, 3
      %s173 = scalar_select %p172, %s17, 3
      %p174 = scmp.lt.s32.totalorder %s171, 48
      %s175 = scalar_select %p174, %s171, 48
      %s176 = smul.addr %s173, 49
      %s177 = sadd.s32 %s175, %s176
      %s178 = smul.addr %s177, 8
      %s179 = scalar_lea.vmem %s2, %s178
      %s180 = smul.u32 49, %s18
      %p181 = scmp.lt.s32.totalorder %s17, 3
      %s182 = scalar_select %p181, %s17, 3
      %p183 = scmp.lt.s32.totalorder %s180, 48
      %s184 = scalar_select %p183, %s180, 48
      %s185 = smul.addr %s184, 2
      %s186 = smul.addr %s182, 98
      %s187 = sadd.s32 %s185, %s186
      %s188 = smul.addr %s187, 4
      %s189 = scalar_lea.vmem %s0, %s188
      %s190 = smul.u32 49, %s18
      %p191 = scmp.lt.s32.totalorder %s17, 3
      %s192 = scalar_select %p191, %s17, 3
      %s193 = smul.addr %s192, 32
      %s194 = smul.addr %s193, 4
      %s195 = scalar_lea.vmem %s1, %s194
      %s196 = smul.u32 49, %s18
      %p197 = scmp.lt.s32.totalorder %s17, 3
      %s198 = scalar_select %p197, %s17, 3
      %p199 = scmp.lt.s32.totalorder %s196, 48
      %s200 = scalar_select %p199, %s196, 48
      %s201 = smul.addr %s198, 49
      %s202 = sadd.s32 %s200, %s201
      %s203 = smul.addr %s202, 8
      %s204 = scalar_lea.vmem %s2, %s203
      %s205 = smul.u32 49, %s18
      %v207 = vld [vmem:[%s189] sm:$0xff]
      %v208 = vld [vmem:[%s189 + $0x8] sm:$0xff]
      %v209 = vld [vmem:[%s189 + $0x10] sm:$0xff]
      %v210 = vld [vmem:[%s189 + $0x18] sm:$0xff]
      %v211 = vld [vmem:[%s189 + $0x20] sm:$0xff]
      %v212 = vld [vmem:[%s189 + $0x28] sm:$0xff]
      %v213 = vld [vmem:[%s189 + $0x30] sm:$0xff]
      %v214 = vld [vmem:[%s189 + $0x38] sm:$0xff]
      %v215 = vld [vmem:[%s189 + $0x40] sm:$0xff]
      %v216 = vld [vmem:[%s189 + $0x48] sm:$0xff]
      %v217 = vld [vmem:[%s189 + $0x50] sm:$0xff]
      %v218 = vld [vmem:[%s189 + $0x58] sm:$0xff]
      %v219 = vld [vmem:[%s189 + $0x60] sm:$0xff]
      %v220 = vld [vmem:[%s189 + $0x68] sm:$0xff]
      %v221 = vld [vmem:[%s189 + $0x70] sm:$0xff]
      %v222 = vld [vmem:[%s189 + $0x78] sm:$0xff]
      %v223 = vld [vmem:[%s189 + $0x80] sm:$0xff]
      %v224 = vld [vmem:[%s189 + $0x88] sm:$0xff]
      %v225 = vld [vmem:[%s189 + $0x90] sm:$0xff]
      %v226 = vld [vmem:[%s189 + $0x98] sm:$0xff]
      %v227 = vld [vmem:[%s189 + $0xa0] sm:$0xff]
      %v228 = vld [vmem:[%s189 + $0xa8] sm:$0xff]
      %v229 = vld [vmem:[%s189 + $0xb0] sm:$0xff]
      %v230 = vld [vmem:[%s189 + $0xb8] sm:$0xff]
      %v231 = vld [vmem:[%s189 + $0xc0] sm:$0xff]
      %v232 = vld [vmem:[%s189 + $0xc8] sm:$0xff]
      %v233 = vld [vmem:[%s189 + $0xd0] sm:$0xff]
      %v234 = vld [vmem:[%s189 + $0xd8] sm:$0xff]
      %v235 = vld [vmem:[%s189 + $0xe0] sm:$0xff]
      %v236 = vld [vmem:[%s189 + $0xe8] sm:$0xff]
      %v237 = vld [vmem:[%s189 + $0xf0] sm:$0xff]
      %v238 = vld [vmem:[%s189 + $0xf8] sm:$0xff]
      %v239 = vld [vmem:[%s189 + $0x100] sm:$0xff]
      %v240 = vld [vmem:[%s189 + $0x108] sm:$0xff]
      %v241 = vld [vmem:[%s189 + $0x110] sm:$0xff]
      %v242 = vld [vmem:[%s189 + $0x118] sm:$0xff]
      %v243 = vld [vmem:[%s189 + $0x120] sm:$0xff]
      %v244 = vld [vmem:[%s189 + $0x128] sm:$0xff]
      %v245 = vld [vmem:[%s189 + $0x130] sm:$0xff]
      %v246 = vld [vmem:[%s189 + $0x138] sm:$0xff]
      %v247 = vld [vmem:[%s189 + $0x140] sm:$0xff]
      %v248 = vld [vmem:[%s189 + $0x148] sm:$0xff]
      %v249 = vld [vmem:[%s189 + $0x150] sm:$0xff]
      %v250 = vld [vmem:[%s189 + $0x158] sm:$0xff]
      %v251 = vld [vmem:[%s189 + $0x160] sm:$0xff]
      %v252 = vld [vmem:[%s189 + $0x168] sm:$0xff]
      %v253 = vld [vmem:[%s189 + $0x170] sm:$0xff]
      %v254 = vld [vmem:[%s189 + $0x178] sm:$0xff]
      %v255 = vld [vmem:[%s189 + $0x180] sm:$0xff]
      %v256 = vld [vmem:[%s195] sm:$0xf]
      %v257 = vld [vmem:[%s195 + $0x4] sm:$0xf]
      %v258 = vld [vmem:[%s195 + $0x8] sm:$0xf]
      %v259 = vld [vmem:[%s195 + $0xc] sm:$0xf]
      %v260 = vld [vmem:[%s195 + $0x10] sm:$0xf]
      %v261 = vld [vmem:[%s195 + $0x14] sm:$0xf]
      %v262 = vld [vmem:[%s195 + $0x18] sm:$0xf]
      %v263 = vld [vmem:[%s195 + $0x1c] sm:$0xf]
      %v264 = vld [vmem:[%s195 + $0x20] sm:$0xf]
      %v265 = vld [vmem:[%s195 + $0x24] sm:$0xf]
      %v266 = vld [vmem:[%s195 + $0x28] sm:$0xf]
      %v267 = vld [vmem:[%s195 + $0x2c] sm:$0xf]
      %v268 = vld [vmem:[%s195 + $0x30] sm:$0xf]
      %v269 = vld [vmem:[%s195 + $0x34] sm:$0xf]
      %v270 = vld [vmem:[%s195 + $0x38] sm:$0xf]
      %v271 = vld [vmem:[%s195 + $0x3c] sm:$0xf]
      %v272 = vld [vmem:[%s195 + $0x40] sm:$0xf]
      %v273 = vld [vmem:[%s195 + $0x44] sm:$0xf]
      %v274 = vld [vmem:[%s195 + $0x48] sm:$0xf]
      %v275 = vld [vmem:[%s195 + $0x4c] sm:$0xf]
      %v276 = vld [vmem:[%s195 + $0x50] sm:$0xf]
      %v277 = vld [vmem:[%s195 + $0x54] sm:$0xf]
      %v278 = vld [vmem:[%s195 + $0x58] sm:$0xf]
      %v279 = vld [vmem:[%s195 + $0x5c] sm:$0xf]
      %v280 = vld [vmem:[%s195 + $0x60] sm:$0xf]
      %v281 = vld [vmem:[%s195 + $0x64] sm:$0xf]
      %v282 = vld [vmem:[%s195 + $0x68] sm:$0xf]
      %v283 = vld [vmem:[%s195 + $0x6c] sm:$0xf]
      %v284 = vld [vmem:[%s195 + $0x70] sm:$0xf]
      %v285 = vld [vmem:[%s195 + $0x74] sm:$0xf]
      %v286 = vld [vmem:[%s195 + $0x78] sm:$0xf]
      %v287 = vld [vmem:[%s195 + $0x7c] sm:$0xf]
      %v337 = vunpack.c.l.b16 %v207
      %v338 = vunpack.c.h.b16 %v207
      %v339 = vunpack.c.l.b16 %v208
      %v340 = vunpack.c.h.b16 %v208
      %v341 = vunpack.c.l.b16 %v209
      %v342 = vunpack.c.h.b16 %v209
      %v343 = vunpack.c.l.b16 %v210
      %v344 = vunpack.c.h.b16 %v210
      %v345 = vunpack.c.l.b16 %v211
      %v346 = vunpack.c.h.b16 %v211
      %v347 = vunpack.c.l.b16 %v212
      %v348 = vunpack.c.h.b16 %v212
      %v349 = vunpack.c.l.b16 %v213
      %v350 = vunpack.c.h.b16 %v213
      %v351 = vunpack.c.l.b16 %v214
      %v352 = vunpack.c.h.b16 %v214
      %v353 = vunpack.c.l.b16 %v215
      %v354 = vunpack.c.h.b16 %v215
      %v355 = vunpack.c.l.b16 %v216
      %v356 = vunpack.c.h.b16 %v216
      %v357 = vunpack.c.l.b16 %v217
      %v358 = vunpack.c.h.b16 %v217
      %v359 = vunpack.c.l.b16 %v218
      %v360 = vunpack.c.h.b16 %v218
      %v361 = vunpack.c.l.b16 %v219
      %v362 = vunpack.c.h.b16 %v219
      %v363 = vunpack.c.l.b16 %v220
      %v364 = vunpack.c.h.b16 %v220
      %v365 = vunpack.c.l.b16 %v221
      %v366 = vunpack.c.h.b16 %v221
      %v367 = vunpack.c.l.b16 %v222
      %v368 = vunpack.c.h.b16 %v222
      %v369 = vunpack.c.l.b16 %v223
      %v370 = vunpack.c.h.b16 %v223
      %v371 = vunpack.c.l.b16 %v224
      %v372 = vunpack.c.h.b16 %v224
      %v373 = vunpack.c.l.b16 %v225
      %v374 = vunpack.c.h.b16 %v225
      %v375 = vunpack.c.l.b16 %v226
      %v376 = vunpack.c.h.b16 %v226
      %v377 = vunpack.c.l.b16 %v227
      %v378 = vunpack.c.h.b16 %v227
      %v379 = vunpack.c.l.b16 %v228
      %v380 = vunpack.c.h.b16 %v228
      %v381 = vunpack.c.l.b16 %v229
      %v382 = vunpack.c.h.b16 %v229
      %v383 = vunpack.c.l.b16 %v230
      %v384 = vunpack.c.h.b16 %v230
      %v385 = vunpack.c.l.b16 %v231
      %v386 = vunpack.c.h.b16 %v231
      %v387 = vunpack.c.l.b16 %v232
      %v388 = vunpack.c.h.b16 %v232
      %v389 = vunpack.c.l.b16 %v233
      %v390 = vunpack.c.h.b16 %v233
      %v391 = vunpack.c.l.b16 %v234
      %v392 = vunpack.c.h.b16 %v234
      %v393 = vunpack.c.l.b16 %v235
      %v394 = vunpack.c.h.b16 %v235
      %v395 = vunpack.c.l.b16 %v236
      %v396 = vunpack.c.h.b16 %v236
      %v397 = vunpack.c.l.b16 %v237
      %v398 = vunpack.c.h.b16 %v237
      %v399 = vunpack.c.l.b16 %v238
      %v400 = vunpack.c.h.b16 %v238
      %v401 = vunpack.c.l.b16 %v239
      %v402 = vunpack.c.h.b16 %v239
      %v403 = vunpack.c.l.b16 %v240
      %v404 = vunpack.c.h.b16 %v240
      %v405 = vunpack.c.l.b16 %v241
      %v406 = vunpack.c.h.b16 %v241
      %v407 = vunpack.c.l.b16 %v242
      %v408 = vunpack.c.h.b16 %v242
      %v409 = vunpack.c.l.b16 %v243
      %v410 = vunpack.c.h.b16 %v243
      %v411 = vunpack.c.l.b16 %v244
      %v412 = vunpack.c.h.b16 %v244
      %v413 = vunpack.c.l.b16 %v245
      %v414 = vunpack.c.h.b16 %v245
      %v415 = vunpack.c.l.b16 %v246
      %v416 = vunpack.c.h.b16 %v246
      %v417 = vunpack.c.l.b16 %v247
      %v418 = vunpack.c.h.b16 %v247
      %v419 = vunpack.c.l.b16 %v248
      %v420 = vunpack.c.h.b16 %v248
      %v421 = vunpack.c.l.b16 %v249
      %v422 = vunpack.c.h.b16 %v249
      %v423 = vunpack.c.l.b16 %v250
      %v424 = vunpack.c.h.b16 %v250
      %v425 = vunpack.c.l.b16 %v251
      %v426 = vunpack.c.h.b16 %v251
      %v427 = vunpack.c.l.b16 %v252
      %v428 = vunpack.c.h.b16 %v252
      %v429 = vunpack.c.l.b16 %v253
      %v430 = vunpack.c.h.b16 %v253
      %v431 = vunpack.c.l.b16 %v254
      %v432 = vunpack.c.h.b16 %v254
      %v433 = vunpack.c.l.b16 %v255
      %v434 = vunpack.c.h.b16 %v255
      %v435 = vpack.c.b16 %v339, %v337
      %v436 = vpack.c.b16 %v340, %v338
      %v437 = vpack.c.b16 %v343, %v341
      %v438 = vpack.c.b16 %v344, %v342
      %v439 = vpack.c.b16 %v347, %v345
      %v440 = vpack.c.b16 %v348, %v346
      %v441 = vpack.c.b16 %v351, %v349
      %v442 = vpack.c.b16 %v352, %v350
      %v443 = vpack.c.b16 %v355, %v353
      %v444 = vpack.c.b16 %v356, %v354
      %v445 = vpack.c.b16 %v359, %v357
      %v446 = vpack.c.b16 %v360, %v358
      %v447 = vpack.c.b16 %v363, %v361
      %v448 = vpack.c.b16 %v364, %v362
      %v449 = vpack.c.b16 %v367, %v365
      %v450 = vpack.c.b16 %v368, %v366
      %v451 = vpack.c.b16 %v371, %v369
      %v452 = vpack.c.b16 %v372, %v370
      %v453 = vpack.c.b16 %v375, %v373
      %v454 = vpack.c.b16 %v376, %v374
      %v455 = vpack.c.b16 %v379, %v377
      %v456 = vpack.c.b16 %v380, %v378
      %v457 = vpack.c.b16 %v383, %v381
      %v458 = vpack.c.b16 %v384, %v382
      %v459 = vpack.c.b16 %v387, %v385
      %v460 = vpack.c.b16 %v388, %v386
      %v461 = vpack.c.b16 %v391, %v389
      %v462 = vpack.c.b16 %v392, %v390
      %v463 = vpack.c.b16 %v395, %v393
      %v464 = vpack.c.b16 %v396, %v394
      %v465 = vpack.c.b16 %v399, %v397
      %v466 = vpack.c.b16 %v400, %v398
      %v467 = vpack.c.b16 %v403, %v401
      %v468 = vpack.c.b16 %v404, %v402
      %v469 = vpack.c.b16 %v407, %v405
      %v470 = vpack.c.b16 %v408, %v406
      %v471 = vpack.c.b16 %v411, %v409
      %v472 = vpack.c.b16 %v412, %v410
      %v473 = vpack.c.b16 %v415, %v413
      %v474 = vpack.c.b16 %v416, %v414
      %v475 = vpack.c.b16 %v419, %v417
      %v476 = vpack.c.b16 %v420, %v418
      %v477 = vpack.c.b16 %v423, %v421
      %v478 = vpack.c.b16 %v424, %v422
      %v479 = vpack.c.b16 %v427, %v425
      %v480 = vpack.c.b16 %v428, %v426
      %v481 = vpack.c.b16 %v431, %v429
      %v482 = vpack.c.b16 %v432, %v430
      %v483 = vpack.c.b16 %v433, %v433
      %v484 = vpack.c.b16 %v434, %v434
      %v567 = vunpack.c.l.b16 %v256
      %v568 = vunpack.c.l.b16 %v257
      %v569 = vunpack.c.l.b16 %v258
      %v570 = vunpack.c.l.b16 %v259
      %v571 = vunpack.c.l.b16 %v260
      %v572 = vunpack.c.l.b16 %v261
      %v573 = vunpack.c.l.b16 %v262
      %v574 = vunpack.c.l.b16 %v263
      %v575 = vunpack.c.l.b16 %v264
      %v576 = vunpack.c.l.b16 %v265
      %v577 = vunpack.c.l.b16 %v266
      %v578 = vunpack.c.l.b16 %v267
      %v579 = vunpack.c.l.b16 %v268
      %v580 = vunpack.c.l.b16 %v269
      %v581 = vunpack.c.l.b16 %v270
      %v582 = vunpack.c.l.b16 %v271
      %v583 = vunpack.c.l.b16 %v272
      %v584 = vunpack.c.l.b16 %v273
      %v585 = vunpack.c.l.b16 %v274
      %v586 = vunpack.c.l.b16 %v275
      %v587 = vunpack.c.l.b16 %v276
      %v588 = vunpack.c.l.b16 %v277
      %v589 = vunpack.c.l.b16 %v278
      %v590 = vunpack.c.l.b16 %v279
      %v591 = vunpack.c.l.b16 %v280
      %v592 = vunpack.c.l.b16 %v281
      %v593 = vunpack.c.l.b16 %v282
      %v594 = vunpack.c.l.b16 %v283
      %v595 = vunpack.c.l.b16 %v284
      %v596 = vunpack.c.l.b16 %v285
      %v597 = vunpack.c.l.b16 %v286
      %v598 = vunpack.c.l.b16 %v287
      %v599 = vpack.c.b16 %v568, %v567
      %v600 = vpack.c.b16 %v570, %v569
      %v601 = vpack.c.b16 %v572, %v571
      %v602 = vpack.c.b16 %v574, %v573
      %v603 = vpack.c.b16 %v576, %v575
      %v604 = vpack.c.b16 %v578, %v577
      %v605 = vpack.c.b16 %v580, %v579
      %v606 = vpack.c.b16 %v582, %v581
      %v607 = vpack.c.b16 %v584, %v583
      %v608 = vpack.c.b16 %v586, %v585
      %v609 = vpack.c.b16 %v588, %v587
      %v610 = vpack.c.b16 %v590, %v589
      %v611 = vpack.c.b16 %v592, %v591
      %v612 = vpack.c.b16 %v594, %v593
      %v613 = vpack.c.b16 %v596, %v595
      %v614 = vpack.c.b16 %v598, %v597
      %631 = vmatprep.subr.bf16.mxu0 0
      %632 = vmatpush1.bf16.msra.mxu0 %v599
      %633 = vmatprep.subr.bf16.mxu0 0
      %634 = vmatpush1.bf16.msra.mxu0 %v600
      %635 = vmatprep.subr.bf16.mxu0 0
      %636 = vmatpush1.bf16.msra.mxu0 %v601
      %637 = vmatprep.subr.bf16.mxu0 0
      %638 = vmatpush1.bf16.msra.mxu0 %v602
      %639 = vmatprep.subr.bf16.mxu0 0
      %640 = vmatpush1.bf16.msra.mxu0 %v603
      %641 = vmatprep.subr.bf16.mxu0 0
      %642 = vmatpush1.bf16.msra.mxu0 %v604
      %643 = vmatprep.subr.bf16.mxu0 0
      %644 = vmatpush1.bf16.msra.mxu0 %v605
      %645 = vmatprep.subr.bf16.mxu0 0
      %646 = vmatpush1.bf16.msra.mxu0 %v606
      %647 = vmatprep.subr.bf16.mxu0 0
      %648 = vmatpush1.bf16.msra.mxu0 %v607
      %649 = vmatprep.subr.bf16.mxu0 0
      %650 = vmatpush1.bf16.msra.mxu0 %v608
      %651 = vmatprep.subr.bf16.mxu0 0
      %652 = vmatpush1.bf16.msra.mxu0 %v609
      %653 = vmatprep.subr.bf16.mxu0 0
      %654 = vmatpush1.bf16.msra.mxu0 %v610
      %655 = vmatprep.subr.bf16.mxu0 0
      %656 = vmatpush1.bf16.msra.mxu0 %v611
      %657 = vmatprep.subr.bf16.mxu0 0
      %658 = vmatpush1.bf16.msra.mxu0 %v612
      %659 = vmatprep.subr.bf16.mxu0 0
      %660 = vmatpush1.bf16.msra.mxu0 %v613
      %661 = vmatprep.subr.bf16.mxu0 0
      %662 = vmatpush1.bf16.msra.mxu0 %v614
      %663 = vmatprep.mubr.bf16.mxu0 %v436
      %664 = vmatmul.mubr.bf16.gmra.mrb[0].mxu0 %v435
      %v665 = vpop.f32.mrb[0].mxu0
      %v666 = vadd.f32 0.0, %v665
      %v667 = vpop.f32.mrb[0].mxu0
      %v668 = vpop.f32.mrb[0].mxu0
      %v669 = vadd.f32 0.0, %v668
      %v670 = vpop.f32.mrb[0].mxu0
      %671 = vmatprep.mubr.bf16.mxu0 %v438
      %672 = vmatmul.mubr.bf16.gmra.mrb[0].mxu0 %v437
      %v673 = vpop.f32.mrb[0].mxu0
      %v674 = vadd.f32 0.0, %v673
      %v675 = vpop.f32.mrb[0].mxu0
      %v676 = vpop.f32.mrb[0].mxu0
      %v677 = vadd.f32 0.0, %v676
      %v678 = vpop.f32.mrb[0].mxu0
      %679 = vmatprep.mubr.bf16.mxu0 %v440
      %680 = vmatmul.mubr.bf16.gmra.mrb[0].mxu0 %v439
      %v681 = vpop.f32.mrb[0].mxu0
      %v682 = vadd.f32 0.0, %v681
      %v683 = vpop.f32.mrb[0].mxu0
      %v684 = vpop.f32.mrb[0].mxu0
      %v685 = vadd.f32 0.0, %v684
      %v686 = vpop.f32.mrb[0].mxu0
      %687 = vmatprep.mubr.bf16.mxu0 %v442
      %688 = vmatmul.mubr.bf16.gmra.mrb[0].mxu0 %v441
      %v689 = vpop.f32.mrb[0].mxu0
      %v690 = vadd.f32 0.0, %v689
      %v691 = vpop.f32.mrb[0].mxu0
      %v692 = vpop.f32.mrb[0].mxu0
      %v693 = vadd.f32 0.0, %v692
      %v694 = vpop.f32.mrb[0].mxu0
      %695 = vmatprep.mubr.bf16.mxu0 %v444
      %696 = vmatmul.mubr.bf16.gmra.mrb[0].mxu0 %v443
      %v697 = vpop.f32.mrb[0].mxu0
      %v698 = vadd.f32 0.0, %v697
      %v699 = vpop.f32.mrb[0].mxu0
      %v700 = vpop.f32.mrb[0].mxu0
      %v701 = vadd.f32 0.0, %v700
      %v702 = vpop.f32.mrb[0].mxu0
      %703 = vmatprep.mubr.bf16.mxu0 %v446
      %704 = vmatmul.mubr.bf16.gmra.mrb[0].mxu0 %v445
      %v705 = vpop.f32.mrb[0].mxu0
      %v706 = vadd.f32 0.0, %v705
      %v707 = vpop.f32.mrb[0].mxu0
      %v708 = vpop.f32.mrb[0].mxu0
      %v709 = vadd.f32 0.0, %v708
      %v710 = vpop.f32.mrb[0].mxu0
      %711 = vmatprep.mubr.bf16.mxu0 %v448
      %712 = vmatmul.mubr.bf16.gmra.mrb[0].mxu0 %v447
      %v713 = vpop.f32.mrb[0].mxu0
      %v714 = vadd.f32 0.0, %v713
      %v715 = vpop.f32.mrb[0].mxu0
      %v716 = vpop.f32.mrb[0].mxu0
      %v717 = vadd.f32 0.0, %v716
      %v718 = vpop.f32.mrb[0].mxu0
      %719 = vmatprep.mubr.bf16.mxu0 %v450
      %720 = vmatmul.mubr.bf16.gmra.mrb[0].mxu0 %v449
      %v721 = vpop.f32.mrb[0].mxu0
      %v722 = vadd.f32 0.0, %v721
      %v723 = vpop.f32.mrb[0].mxu0
      %v724 = vpop.f32.mrb[0].mxu0
      %v725 = vadd.f32 0.0, %v724
      %v726 = vpop.f32.mrb[0].mxu0
      %727 = vmatprep.mubr.bf16.mxu0 %v452
      %728 = vmatmul.mubr.bf16.gmra.mrb[0].mxu0 %v451
      %v729 = vpop.f32.mrb[0].mxu0
      %v730 = vadd.f32 0.0, %v729
      %v731 = vpop.f32.mrb[0].mxu0
      %v732 = vpop.f32.mrb[0].mxu0
      %v733 = vadd.f32 0.0, %v732
      %v734 = vpop.f32.mrb[0].mxu0
      %735 = vmatprep.mubr.bf16.mxu0 %v454
      %736 = vmatmul.mubr.bf16.gmra.mrb[0].mxu0 %v453
      %v737 = vpop.f32.mrb[0].mxu0
      %v738 = vadd.f32 0.0, %v737
      %v739 = vpop.f32.mrb[0].mxu0
      %v740 = vpop.f32.mrb[0].mxu0
      %v741 = vadd.f32 0.0, %v740
      %v742 = vpop.f32.mrb[0].mxu0
      %743 = vmatprep.mubr.bf16.mxu0 %v456
      %744 = vmatmul.mubr.bf16.gmra.mrb[0].mxu0 %v455
      %v745 = vpop.f32.mrb[0].mxu0
      %v746 = vadd.f32 0.0, %v745
      %v747 = vpop.f32.mrb[0].mxu0
      %v748 = vpop.f32.mrb[0].mxu0
      %v749 = vadd.f32 0.0, %v748
      %v750 = vpop.f32.mrb[0].mxu0
      %751 = vmatprep.mubr.bf16.mxu0 %v458
      %752 = vmatmul.mubr.bf16.gmra.mrb[0].mxu0 %v457
      %v753 = vpop.f32.mrb[0].mxu0
      %v754 = vadd.f32 0.0, %v753
      %v755 = vpop.f32.mrb[0].mxu0
      %v756 = vpop.f32.mrb[0].mxu0
      %v757 = vadd.f32 0.0, %v756
      %v758 = vpop.f32.mrb[0].mxu0
      %759 = vmatprep.mubr.bf16.mxu0 %v460
      %760 = vmatmul.mubr.bf16.gmra.mrb[0].mxu0 %v459
      %v761 = vpop.f32.mrb[0].mxu0
      %v762 = vadd.f32 0.0, %v761
      %v763 = vpop.f32.mrb[0].mxu0
      %v764 = vpop.f32.mrb[0].mxu0
      %v765 = vadd.f32 0.0, %v764
      %v766 = vpop.f32.mrb[0].mxu0
      %767 = vmatprep.mubr.bf16.mxu0 %v462
      %768 = vmatmul.mubr.bf16.gmra.mrb[0].mxu0 %v461
      %v769 = vpop.f32.mrb[0].mxu0
      %v770 = vadd.f32 0.0, %v769
      %v771 = vpop.f32.mrb[0].mxu0
      %v772 = vpop.f32.mrb[0].mxu0
      %v773 = vadd.f32 0.0, %v772
      %v774 = vpop.f32.mrb[0].mxu0
      %775 = vmatprep.mubr.bf16.mxu0 %v464
      %776 = vmatmul.mubr.bf16.gmra.mrb[0].mxu0 %v463
      %v777 = vpop.f32.mrb[0].mxu0
      %v778 = vadd.f32 0.0, %v777
      %v779 = vpop.f32.mrb[0].mxu0
      %v780 = vpop.f32.mrb[0].mxu0
      %v781 = vadd.f32 0.0, %v780
      %v782 = vpop.f32.mrb[0].mxu0
      %783 = vmatprep.mubr.bf16.mxu0 %v466
      %784 = vmatmul.mubr.bf16.gmra.mrb[0].mxu0 %v465
      %v785 = vpop.f32.mrb[0].mxu0
      %v786 = vadd.f32 0.0, %v785
      %v787 = vpop.f32.mrb[0].mxu0
      %v788 = vpop.f32.mrb[0].mxu0
      %v789 = vadd.f32 0.0, %v788
      %v790 = vpop.f32.mrb[0].mxu0
      %791 = vmatprep.mubr.bf16.mxu0 %v468
      %792 = vmatmul.mubr.bf16.gmra.mrb[0].mxu0 %v467
      %v793 = vpop.f32.mrb[0].mxu0
      %v794 = vadd.f32 0.0, %v793
      %v795 = vpop.f32.mrb[0].mxu0
      %v796 = vpop.f32.mrb[0].mxu0
      %v797 = vadd.f32 0.0, %v796
      %v798 = vpop.f32.mrb[0].mxu0
      %799 = vmatprep.mubr.bf16.mxu0 %v470
      %800 = vmatmul.mubr.bf16.gmra.mrb[0].mxu0 %v469
      %v801 = vpop.f32.mrb[0].mxu0
      %v802 = vadd.f32 0.0, %v801
      %v803 = vpop.f32.mrb[0].mxu0
      %v804 = vpop.f32.mrb[0].mxu0
      %v805 = vadd.f32 0.0, %v804
      %v806 = vpop.f32.mrb[0].mxu0
      %807 = vmatprep.mubr.bf16.mxu0 %v472
      %808 = vmatmul.mubr.bf16.gmra.mrb[0].mxu0 %v471
      %v809 = vpop.f32.mrb[0].mxu0
      %v810 = vadd.f32 0.0, %v809
      %v811 = vpop.f32.mrb[0].mxu0
      %v812 = vpop.f32.mrb[0].mxu0
      %v813 = vadd.f32 0.0, %v812
      %v814 = vpop.f32.mrb[0].mxu0
      %815 = vmatprep.mubr.bf16.mxu0 %v474
      %816 = vmatmul.mubr.bf16.gmra.mrb[0].mxu0 %v473
      %v817 = vpop.f32.mrb[0].mxu0
      %v818 = vadd.f32 0.0, %v817
      %v819 = vpop.f32.mrb[0].mxu0
      %v820 = vpop.f32.mrb[0].mxu0
      %v821 = vadd.f32 0.0, %v820
      %v822 = vpop.f32.mrb[0].mxu0
      %823 = vmatprep.mubr.bf16.mxu0 %v476
      %824 = vmatmul.mubr.bf16.gmra.mrb[0].mxu0 %v475
      %v825 = vpop.f32.mrb[0].mxu0
      %v826 = vadd.f32 0.0, %v825
      %v827 = vpop.f32.mrb[0].mxu0
      %v828 = vpop.f32.mrb[0].mxu0
      %v829 = vadd.f32 0.0, %v828
      %v830 = vpop.f32.mrb[0].mxu0
      %831 = vmatprep.mubr.bf16.mxu0 %v478
      %832 = vmatmul.mubr.bf16.gmra.mrb[0].mxu0 %v477
      %v833 = vpop.f32.mrb[0].mxu0
      %v834 = vadd.f32 0.0, %v833
      %v835 = vpop.f32.mrb[0].mxu0
      %v836 = vpop.f32.mrb[0].mxu0
      %v837 = vadd.f32 0.0, %v836
      %v838 = vpop.f32.mrb[0].mxu0
      %839 = vmatprep.mubr.bf16.mxu0 %v480
      %840 = vmatmul.mubr.bf16.gmra.mrb[0].mxu0 %v479
      %v841 = vpop.f32.mrb[0].mxu0
      %v842 = vadd.f32 0.0, %v841
      %v843 = vpop.f32.mrb[0].mxu0
      %v844 = vpop.f32.mrb[0].mxu0
      %v845 = vadd.f32 0.0, %v844
      %v846 = vpop.f32.mrb[0].mxu0
      %847 = vmatprep.mubr.bf16.mxu0 %v482
      %848 = vmatmul.mubr.bf16.gmra.mrb[0].mxu0 %v481
      %v849 = vpop.f32.mrb[0].mxu0
      %v850 = vadd.f32 0.0, %v849
      %v851 = vpop.f32.mrb[0].mxu0
      %v852 = vpop.f32.mrb[0].mxu0
      %v853 = vadd.f32 0.0, %v852
      %v854 = vpop.f32.mrb[0].mxu0
      %855 = vmatprep.mubr.bf16.mxu0 %v484
      %856 = vmatmul.mubr.bf16.gmra.mrb[0].mxu0 %v483
      %v857 = vpop.f32.mrb[0].mxu0
      %v858 = vadd.f32 0.0, %v857
      %v859 = vpop.f32.mrb[0].mxu0
      %v860 = vpop.f32.mrb[0].mxu0
      %v861 = vpop.f32.mrb[0].mxu0
      %862 = vdwg.mxu0
      %v863 = vtanh.pop %v666
      %v864 = vtanh.pop %v669
      %v865 = vtanh.pop %v674
      %v866 = vtanh.pop %v677
      %v867 = vtanh.pop %v682
      %v868 = vtanh.pop %v685
      %v869 = vtanh.pop %v690
      %v870 = vtanh.pop %v693
      %v871 = vtanh.pop %v698
      %v872 = vtanh.pop %v701
      %v873 = vtanh.pop %v706
      %v874 = vtanh.pop %v709
      %v875 = vtanh.pop %v714
      %v876 = vtanh.pop %v717
      %v877 = vtanh.pop %v722
      %v878 = vtanh.pop %v725
      %v879 = vtanh.pop %v730
      %v880 = vtanh.pop %v733
      %v881 = vtanh.pop %v738
      %v882 = vtanh.pop %v741
      %v883 = vtanh.pop %v746
      %v884 = vtanh.pop %v749
      %v885 = vtanh.pop %v754
      %v886 = vtanh.pop %v757
      %v887 = vtanh.pop %v762
      %v888 = vtanh.pop %v765
      %v889 = vtanh.pop %v770
      %v890 = vtanh.pop %v773
      %v891 = vtanh.pop %v778
      %v892 = vtanh.pop %v781
      %v893 = vtanh.pop %v786
      %v894 = vtanh.pop %v789
      %v895 = vtanh.pop %v794
      %v896 = vtanh.pop %v797
      %v897 = vtanh.pop %v802
      %v898 = vtanh.pop %v805
      %v899 = vtanh.pop %v810
      %v900 = vtanh.pop %v813
      %v901 = vtanh.pop %v818
      %v902 = vtanh.pop %v821
      %v903 = vtanh.pop %v826
      %v904 = vtanh.pop %v829
      %v905 = vtanh.pop %v834
      %v906 = vtanh.pop %v837
      %v907 = vtanh.pop %v842
      %v908 = vtanh.pop %v845
      %v909 = vtanh.pop %v850
      %v910 = vtanh.pop %v853
      %v911 = vtanh.pop %v858
      %912 = vst [vmem:[%s204] sm:$0xff] %v863
      %913 = vst [vmem:[%s204 + $0x8] sm:$0xff] %v864
      %914 = vst [vmem:[%s204 + $0x10] sm:$0xff] %v865
      %915 = vst [vmem:[%s204 + $0x18] sm:$0xff] %v866
      %916 = vst [vmem:[%s204 + $0x20] sm:$0xff] %v867
      %917 = vst [vmem:[%s204 + $0x28] sm:$0xff] %v868
      %918 = vst [vmem:[%s204 + $0x30] sm:$0xff] %v869
      %919 = vst [vmem:[%s204 + $0x38] sm:$0xff] %v870
      %920 = vst [vmem:[%s204 + $0x40] sm:$0xff] %v871
      %921 = vst [vmem:[%s204 + $0x48] sm:$0xff] %v872
      %922 = vst [vmem:[%s204 + $0x50] sm:$0xff] %v873
      %923 = vst [vmem:[%s204 + $0x58] sm:$0xff] %v874
      %924 = vst [vmem:[%s204 + $0x60] sm:$0xff] %v875
      %925 = vst [vmem:[%s204 + $0x68] sm:$0xff] %v876
      %926 = vst [vmem:[%s204 + $0x70] sm:$0xff] %v877
      %927 = vst [vmem:[%s204 + $0x78] sm:$0xff] %v878
      %928 = vst [vmem:[%s204 + $0x80] sm:$0xff] %v879
      %929 = vst [vmem:[%s204 + $0x88] sm:$0xff] %v880
      %930 = vst [vmem:[%s204 + $0x90] sm:$0xff] %v881
      %931 = vst [vmem:[%s204 + $0x98] sm:$0xff] %v882
      %932 = vst [vmem:[%s204 + $0xa0] sm:$0xff] %v883
      %933 = vst [vmem:[%s204 + $0xa8] sm:$0xff] %v884
      %934 = vst [vmem:[%s204 + $0xb0] sm:$0xff] %v885
      %935 = vst [vmem:[%s204 + $0xb8] sm:$0xff] %v886
      %936 = vst [vmem:[%s204 + $0xc0] sm:$0xff] %v887
      %937 = vst [vmem:[%s204 + $0xc8] sm:$0xff] %v888
      %938 = vst [vmem:[%s204 + $0xd0] sm:$0xff] %v889
      %939 = vst [vmem:[%s204 + $0xd8] sm:$0xff] %v890
      %940 = vst [vmem:[%s204 + $0xe0] sm:$0xff] %v891
      %941 = vst [vmem:[%s204 + $0xe8] sm:$0xff] %v892
      %942 = vst [vmem:[%s204 + $0xf0] sm:$0xff] %v893
      %943 = vst [vmem:[%s204 + $0xf8] sm:$0xff] %v894
      %944 = vst [vmem:[%s204 + $0x100] sm:$0xff] %v895
      %945 = vst [vmem:[%s204 + $0x108] sm:$0xff] %v896
      %946 = vst [vmem:[%s204 + $0x110] sm:$0xff] %v897
      %947 = vst [vmem:[%s204 + $0x118] sm:$0xff] %v898
      %948 = vst [vmem:[%s204 + $0x120] sm:$0xff] %v899
      %949 = vst [vmem:[%s204 + $0x128] sm:$0xff] %v900
      %950 = vst [vmem:[%s204 + $0x130] sm:$0xff] %v901
      %951 = vst [vmem:[%s204 + $0x138] sm:$0xff] %v902
      %952 = vst [vmem:[%s204 + $0x140] sm:$0xff] %v903
      %953 = vst [vmem:[%s204 + $0x148] sm:$0xff] %v904
      %954 = vst [vmem:[%s204 + $0x150] sm:$0xff] %v905
      %955 = vst [vmem:[%s204 + $0x158] sm:$0xff] %v906
      %956 = vst [vmem:[%s204 + $0x160] sm:$0xff] %v907
      %957 = vst [vmem:[%s204 + $0x168] sm:$0xff] %v908
      %958 = vst [vmem:[%s204 + $0x170] sm:$0xff] %v909
      %959 = vst [vmem:[%s204 + $0x178] sm:$0xff] %v910
      %960 = vst [vmem:[%s204 + $0x180] sm:$0xff] %v911
      %s961 = smul.u32 49, %s18
      %p962 = scmp.lt.s32.totalorder %s17, 3
      %s963 = scalar_select %p962, %s17, 3
      %p964 = scmp.lt.s32.totalorder %s961, 48
      %s965 = scalar_select %p964, %s961, 48
      %s966 = smul.addr %s963, 49
      %s967 = sadd.s32 %s965, %s966
      %s968 = smul.addr %s967, 8
      %s969 = scalar_lea.vmem %s2, %s968
      // Predicated region
      $region29: #{generator_forward.13} parent=27 // pred_check
        %p970 = pneg %p99
      $region30: #{generator_forward.13} parent=27 // pred_check_branch
        %972 = sbr.rel (%p970) target = $region32
      $region31: #{generator_forward.13} parent=27 // pred_region
        %s973 = smul.u32 49, %s18
      $region32: #{generator_forward.13} parent=27 // pred_fallthru
        _
    $region28: #{generator_forward.13} parent=5 // pred_fallthru
      _
    %p974 = scmp.le.s32.totalorder 2, %s8
    // Predicated region
    $region33: #{generator_forward.13} parent=5 // pred_check
      %p975 = pneg %p974
    $region34: #{generator_forward.13} parent=5 // pred_check_branch
      %977 = sbr.rel (%p975) target = $region36
    $region35: #{generator_forward.13} parent=5 // pred_region
      %s978 = ssub.s32 %s8, 2
      // Predicated region
      $region37: #{generator_forward.13} parent=35 // pred_check
        %p979 = pneg %p105
      $region38: #{generator_forward.13} parent=35 // pred_check_branch
        %981 = sbr.rel (%p979) target = $region40
      $region39: #{generator_forward.13} parent=35 // pred_region
        %s982 = smul.u32 49, %s20
        %p983 = scmp.lt.s32.totalorder %s19, 3
        %s984 = scalar_select %p983, %s19, 3
        %p985 = scmp.lt.s32.totalorder %s982, 48
        %s986 = scalar_select %p985, %s982, 48
        %s987 = smul.addr %s984, 49
        %s988 = sadd.s32 %s986, %s987
        %s989 = smul.addr %s988, 8
        %s990 = scalar_lea.vmem %s2, %s989
      $region40: #{generator_forward.13} parent=35 // pred_fallthru
        _
    $region36: #{generator_forward.13} parent=5 // pred_fallthru
      _
  $region6: #{generator_forward.13} parent=0 // loop_footer
    %s12 = sadd.s32 1, %s8
  $region7: #{generator_forward.13} parent=0 // loop_footer_branch
    %7 = sbr.rel target = $region3
  $region8: #{generator_forward.13} parent=0 // loop_exit
    _

</llo_original>
